<compile_context>
chip_gen: v7x
topology: tpu7x:2x2x1
jax: 0.10.0
libtpu: 0.0.40
codegen_flags: <defaults>
</compile_context>

<pallas_src>
import functools

import numpy as np
import jax
import jax.numpy as jnp
from jax import lax
from jax.experimental import pallas as pl
from jax.experimental.pallas import tpu as pltpu


# Constant gather indices: X1[n, i2*4 + j2, u*16 + v] = img[n, 4*i2 + u, 4*j2 + v]
# (16x16 input patch at stride 4 for each of the 4x4 final pooled positions).
_I2 = np.arange(4).reshape(4, 1, 1, 1)
_J2 = np.arange(4).reshape(1, 4, 1, 1)
_U = np.arange(16).reshape(1, 1, 16, 1)
_V = np.arange(16).reshape(1, 1, 1, 16)
_H_IDX, _W_IDX = np.broadcast_arrays(4 * _I2 + _U, 4 * _J2 + _V)
_H_IDX = _H_IDX.astype(np.int32)
_W_IDX = _W_IDX.astype(np.int32)

_PARITIES = ((0, 0), (0, 1), (1, 0), (1, 1))

# Images per grid step: 16 -> conv matmuls have M = 256 rows.  Raise to 64-256
# for large batches to further amortize per-step overhead (must stay a multiple
# of 8 so the output block is sublane-aligned).
B_TILE = 16


# ------------------------------ Pallas kernel -------------------------------


def _lenet5_kernel(x1_ref, w1_ref, b1_ref, w2_ref, b2_ref,
                   wf1_ref, bf1_ref, wf2_ref, bf2_ref, wf3_ref, bf3_ref,
                   out_ref, p2_scr, xf_scr):
    f32, bf16 = jnp.float32, jnp.bfloat16
    nimg = xf_scr.shape[0]                                # images in this tile

    x1 = x1_ref[...]                                      # (16*B, 256) bf16 patches

    # conv1 + ReLU + 2x2 maxpool: max over the 4 pooling parities (ReLU and max
    # commute; the bias is parity-invariant).  Output lanes are conv2's im2col
    # layout (216 taps) zero-padded to 256 for lane-dense vregs / full N-tiles.
    acc = jnp.dot(x1, w1_ref[0], preferred_element_type=f32)
    for p in range(1, 4):
        acc = jnp.maximum(acc, jnp.dot(x1, w1_ref[p], preferred_element_type=f32))
    x2 = jnp.maximum(acc + b1_ref[...], 0.0).astype(bf16)   # (16B, 256)

    # conv2 + ReLU + 2x2 maxpool (same parity-folded pooling).
    acc = jnp.dot(x2, w2_ref[0], preferred_element_type=f32)
    for p in range(1, 4):
        acc = jnp.maximum(acc, jnp.dot(x2, w2_ref[p], preferred_element_type=f32))
    # rows = image*16 + spatial(s = i2*4 + j2), lanes = conv2 channel c
    p2_scr[...] = jnp.maximum(acc + b2_ref[...], 0.0)        # (16B, 16)

    # Re-pack to one 256-lane row per image so fc1 is a single MXU matmul:
    #   xf[b, s*16 + c] = p2[b*16 + s, c]
    # (torch's c*16+s flatten order is folded into wf1 at prep time).  16
    # sublane-strided reads + 16-lane stores; tiny VMEM traffic, no MXU use.
    for s in range(16):
        xf_scr[:, s * 16:(s + 1) * 16] = p2_scr[pl.ds(s, nimg, stride=16), :]

    xf = xf_scr[...].astype(bf16)                            # (B, 256)
    h = jnp.maximum(jnp.dot(xf, wf1_ref[...], preferred_element_type=f32)
                    + bf1_ref[...], 0.0)                     # (B, 128)
    h = jnp.maximum(jnp.dot(h.astype(bf16), wf2_ref[...], preferred_element_type=f32)
                    + bf2_ref[...], 0.0)                     # (B, 128)
    # The reference PyTorch module applies ReLU to fc3 as well, so keep it.
    h = jnp.maximum(jnp.dot(h.astype(bf16), wf3_ref[...], preferred_element_type=f32)
                    + bf3_ref[...], 0.0)                     # (B, 128); lanes 10.. are 0
    out_ref[...] = h


# --------------------------- parameter preparation ---------------------------


def prepare_params(params):
    """Torch-layout LeNet5 params -> kernel-layout (padded, bf16) params."""
    bf16 = jnp.bfloat16
    w1, b1 = params["conv1_w"], params["conv1_b"]      # (6,1,5,5), (6,)
    w2, b2 = params["conv2_w"], params["conv2_b"]      # (16,6,5,5), (16,)

    # conv1 effective weights: for pooling parity (dy, dx), column block
    # (a*6+b)*6+ci produces conv1 output channel ci at pixel
    # (4*i2 + 2*a + dy, 4*j2 + 2*b + dx) from the 16x16 input patch.
    k1 = jnp.transpose(w1[:, 0], (1, 2, 0))             # (5, 5, 6) [ki, kj, ci]
    w1p = []
    for dy, dx in _PARITIES:
        cols = []
        for a in range(6):
            for b in range(6):
                oy, ox = 2 * a + dy, 2 * b + dx
                cols.append(
                    jnp.pad(k1, ((oy, 11 - oy), (ox, 11 - ox), (0, 0))).reshape(256, 6))
        w1p.append(jnp.concatenate(cols, axis=1))        # (256, 216)
    w1p = jnp.pad(jnp.stack(w1p), ((0, 0), (0, 0), (0, 40)))   # (4, 256, 256)
    b1p = jnp.pad(jnp.tile(b1, 36), (0, 40)).reshape(1, 256)

    # conv2 effective weights: rows ordered (a*6 + b)*6 + ci, cols = out chan;
    # 40 zero rows match conv1's zero-padded lanes.
    k2 = jnp.transpose(w2, (2, 3, 1, 0))                  # (5, 5, 6, 16)
    w2p = jnp.stack([
        jnp.pad(k2, ((dy, 1 - dy), (dx, 1 - dx), (0, 0), (0, 0))).reshape(216, 16)
        for dy, dx in _PARITIES])
    w2p = jnp.pad(w2p, ((0, 0), (0, 40), (0, 0)))          # (4, 256, 16)
    b2p = b2.reshape(1, 16)

    # fc1: kernel rows are ordered s*16 + c (s = i2*4 + j2); torch's flatten is
    # c*16 + s, so fold that permutation into the weight.  Pad 120 -> 128 cols.
    wf1 = jnp.transpose(params["fc1_w"].reshape(120, 16, 16), (2, 1, 0)).reshape(256, 120)
    wf1 = jnp.pad(wf1, ((0, 0), (0, 8)))                   # (256, 128)
    bf1 = jnp.pad(params["fc1_b"], (0, 8)).reshape(1, 128)
    wf2 = jnp.pad(params["fc2_w"].T, ((0, 8), (0, 44)))    # (128, 128)
    bf2 = jnp.pad(params["fc2_b"], (0, 44)).reshape(1, 128)
    wf3 = jnp.pad(params["fc3_w"].T, ((0, 44), (0, 118)))  # (128, 128)
    bf3 = jnp.pad(params["fc3_b"], (0, 118)).reshape(1, 128)

    return {
        "w1": w1p.astype(bf16), "b1": b1p,
        "w2": w2p.astype(bf16), "b2": b2p,
        "wf1": wf1.astype(bf16), "bf1": bf1,
        "wf2": wf2.astype(bf16), "bf2": bf2,
        "wf3": wf3.astype(bf16), "bf3": bf3,
    }


# ------------------------------ fused forward --------------------------------


@functools.partial(jax.jit, static_argnames=("b_tile",))
def lenet5_forward(x_nchw, kparams, b_tile=B_TILE):
    assert b_tile % 8 == 0
    n = x_nchw.shape[0]
    img = x_nchw.reshape(n, 28, 28)                     # C == 1
    # TODO(synk): the constant-index patch gather (784 -> 4096 values/image)
    # could move in-kernel via strided slices of raw 28x28 rows if input HBM
    # traffic ever binds; at bf16 it is ~8 KB/image and the kernel stays
    # MXU-bound on v5e/v6e/v7x, so it stays in the wrapper.
    x1 = img[:, _H_IDX, _W_IDX].reshape(n, 16, 256).astype(jnp.bfloat16)

    pad = -n % b_tile
    if pad:
        x1 = jnp.pad(x1, ((0, pad), (0, 0), (0, 0)))
    n_tot = n + pad
    nb = n_tot // b_tile
    x1 = x1.reshape(n_tot * 16, 256)                    # 16 im2col rows per image

    w_bytes = sum(int(np.prod(v.shape)) * v.dtype.itemsize for v in kparams.values())
    cost = pl.CostEstimate(
        flops=int(2 * n_tot * 16 * 256 * (256 + 16) * 4          # conv1+conv2, 4 parities
                  + 2 * n_tot * (256 * 128 + 2 * 128 * 128)),    # fc1..fc3 (padded)
        transcendentals=0,
        bytes_accessed=int(x1.size * x1.dtype.itemsize + w_bytes + n_tot * 128 * 4),
    )

    out = pl.pallas_call(
        _lenet5_kernel,
        out_shape=jax.ShapeDtypeStruct((n_tot, 128), jnp.float32),
        grid=(nb,),
        in_specs=[
            pl.BlockSpec((b_tile * 16, 256), lambda i: (i, 0)),   # im2col patches
            pl.BlockSpec((4, 256, 256), lambda i: (0, 0, 0)),     # conv1 eff. weights
            pl.BlockSpec((1, 256), lambda i: (0, 0)),
            pl.BlockSpec((4, 256, 16), lambda i: (0, 0, 0)),      # conv2 eff. weights
            pl.BlockSpec((1, 16), lambda i: (0, 0)),
            pl.BlockSpec((256, 128), lambda i: (0, 0)),           # fc1
            pl.BlockSpec((1, 128), lambda i: (0, 0)),
            pl.BlockSpec((128, 128), lambda i: (0, 0)),           # fc2
            pl.BlockSpec((1, 128), lambda i: (0, 0)),
            pl.BlockSpec((128, 128), lambda i: (0, 0)),           # fc3
            pl.BlockSpec((1, 128), lambda i: (0, 0)),
        ],
        out_specs=pl.BlockSpec((b_tile, 128), lambda i: (i, 0)),  # lane-dense logits
        scratch_shapes=[
            pltpu.VMEM((b_tile * 16, 16), jnp.float32),   # pooled conv2 output
            pltpu.VMEM((b_tile, 256), jnp.float32),       # per-image fc1 input rows
        ],
        compiler_params=pltpu.CompilerParams(dimension_semantics=("parallel",)),
        cost_estimate=cost,
    )(x1, kparams["w1"], kparams["b1"], kparams["w2"], kparams["b2"],
      kparams["wf1"], kparams["bf1"], kparams["wf2"], kparams["bf2"],
      kparams["wf3"], kparams["bf3"])
    return out[:n, :10]


# ----------------------------- reference & init ------------------------------


def lenet5_reference(x, params):
    """Plain-JAX f32 reference matching the PyTorch module (validation only)."""
    dn = ("NCHW", "OIHW", "NCHW")
    hi = lax.Precision.HIGHEST
    y = lax.conv_general_dilated(x, params["conv1_w"], (1, 1), "VALID",
                                 dimension_numbers=dn, precision=hi)
    y = jnp.maximum(y + params["conv1_b"][None, :, None, None], 0.0)
    y = lax.reduce_window(y, -jnp.inf, lax.max, (1, 1, 2, 2), (1, 1, 2, 2), "VALID")
    y = lax.conv_general_dilated(y, params["conv2_w"], (1, 1), "VALID",
                                 dimension_numbers=dn, precision=hi)
    y = jnp.maximum(y + params["conv2_b"][None, :, None, None], 0.0)
    y = lax.reduce_window(y, -jnp.inf, lax.max, (1, 1, 2, 2), (1, 1, 2, 2), "VALID")
    y = y.reshape(y.shape[0], -1)
    y = jnp.maximum(jnp.dot(y, params["fc1_w"].T, precision=hi) + params["fc1_b"], 0.0)
    y = jnp.maximum(jnp.dot(y, params["fc2_w"].T, precision=hi) + params["fc2_b"], 0.0)
    y = jnp.maximum(jnp.dot(y, params["fc3_w"].T, precision=hi) + params["fc3_b"], 0.0)
    return y


def init_params(key):
    ks = jax.random.split(key, 10)

    def w(k, shape, fan_in):
        return jax.random.normal(k, shape, jnp.float32) / jnp.sqrt(fan_in)

    return {
        "conv1_w": w(ks[0], (6, 1, 5, 5), 25),
        "conv1_b": w(ks[1], (6,), 25),
        "conv2_w": w(ks[2], (16, 6, 5, 5), 150),
        "conv2_b": w(ks[3], (16,), 150),
        "fc1_w": w(ks[4], (120, 256), 256),
        "fc1_b": w(ks[5], (120,), 256),
        "fc2_w": w(ks[6], (84, 120), 120),
        "fc2_b": w(ks[7], (84,), 120),
        "fc3_w": w(ks[8], (10, 84), 84),
        "fc3_b": w(ks[9], (10,), 84),
    }


if __name__ == "__main__":
    key = jax.random.PRNGKey(0)
    k_x, k_p = jax.random.split(key)
    # fc1's 256 inputs (= 16 * 4 * 4) imply 1x28x28 images; batch 32 = two
    # grid tiles of 16 images (exercises the parallel batch grid).
    x = jax.random.normal(k_x, (32, 1, 28, 28), jnp.float32)
    params = init_params(k_p)
    kparams = prepare_params(params)            # one-time weight re-layout (bf16)

    out = jax.block_until_ready(lenet5_forward(x, kparams))
    assert out.shape == (32, 10), out.shape
    assert out.dtype == jnp.float32

    ref = jax.block_until_ready(lenet5_reference(x, params))
    if not bool(jnp.allclose(out, ref, rtol=2e-2, atol=2e-2)):
        raise AssertionError(
            f"kernel/reference mismatch, max abs err = {jnp.max(jnp.abs(out - ref))}")
    print("KERNEL_OK")
</pallas_src>

<mosaic_0001>
module attributes {stable_mosaic.version = 11 : i64} {
  func.func @_lenet5_kernel(%arg0: i32, %arg1: memref<256x256xbf16, #tpu.memory_space<vmem>>, %arg2: memref<4x256x256xbf16, #tpu.memory_space<vmem>>, %arg3: memref<1x256xf32, #tpu.memory_space<vmem>>, %arg4: memref<4x256x16xbf16, #tpu.memory_space<vmem>>, %arg5: memref<1x16xf32, #tpu.memory_space<vmem>>, %arg6: memref<256x128xbf16, #tpu.memory_space<vmem>>, %arg7: memref<1x128xf32, #tpu.memory_space<vmem>>, %arg8: memref<128x128xbf16, #tpu.memory_space<vmem>>, %arg9: memref<1x128xf32, #tpu.memory_space<vmem>>, %arg10: memref<128x128xbf16, #tpu.memory_space<vmem>>, %arg11: memref<1x128xf32, #tpu.memory_space<vmem>>, %arg12: memref<16x128xf32, #tpu.memory_space<vmem>>, %arg13: memref<256x16xf32, #tpu.memory_space<vmem>>, %arg14: memref<16x256xf32, #tpu.memory_space<vmem>>) attributes {dimension_semantics = [#tpu.dimension_semantics<parallel>], iteration_bounds = array<i64: 2>, scalar_prefetch = 0 : i64, scratch_operands = 2 : i64, tpu.core_type = #tpu.core_type<tc>, window_params = [{transform_indices = @transform_0, window_bounds = array<i64: 256, 256>}, {pipeline_mode = #tpu.pipeline_mode<synchronous>, transform_indices = @transform_1, window_bounds = array<i64: 4, 256, 256>}, {pipeline_mode = #tpu.pipeline_mode<synchronous>, transform_indices = @transform_2, window_bounds = array<i64: 1, 256>}, {pipeline_mode = #tpu.pipeline_mode<synchronous>, transform_indices = @transform_3, window_bounds = array<i64: 4, 256, 16>}, {pipeline_mode = #tpu.pipeline_mode<synchronous>, transform_indices = @transform_4, window_bounds = array<i64: 1, 16>}, {pipeline_mode = #tpu.pipeline_mode<synchronous>, transform_indices = @transform_5, window_bounds = array<i64: 256, 128>}, {pipeline_mode = #tpu.pipeline_mode<synchronous>, transform_indices = @transform_6, window_bounds = array<i64: 1, 128>}, {pipeline_mode = #tpu.pipeline_mode<synchronous>, transform_indices = @transform_7, window_bounds = array<i64: 128, 128>}, {pipeline_mode = #tpu.pipeline_mode<synchronous>, transform_indices = @transform_8, window_bounds = array<i64: 1, 128>}, {pipeline_mode = #tpu.pipeline_mode<synchronous>, transform_indices = @transform_9, window_bounds = array<i64: 128, 128>}, {pipeline_mode = #tpu.pipeline_mode<synchronous>, transform_indices = @transform_10, window_bounds = array<i64: 1, 128>}, {transform_indices = @transform_11, window_bounds = array<i64: 16, 128>}]} {
    %c0 = arith.constant 0 : index
    %c0_0 = arith.constant 0 : index
    %0 = vector.load %arg1[%c0, %c0_0] : memref<256x256xbf16, #tpu.memory_space<vmem>>, vector<256x256xbf16>
    %c0_1 = arith.constant 0 : index
    %c0_2 = arith.constant 0 : index
    %c0_3 = arith.constant 0 : index
    %1 = vector.load %arg2[%c0_1, %c0_2, %c0_3] : memref<4x256x256xbf16, #tpu.memory_space<vmem>>, vector<1x256x256xbf16>
    %2 = vector.shape_cast %1 : vector<1x256x256xbf16> to vector<256x256xbf16>
    %cst = arith.constant dense<0.000000e+00> : vector<256x256xf32>
    %3 = tpu.matmul %0, %2, %cst {dimension_numbers = #tpu.dot_dimension_numbers<[1], [0], [0], [1], [0, 0, 1, 1], [], []>} : vector<256x256xbf16>, vector<256x256xbf16>, vector<256x256xf32> -> vector<256x256xf32>
    %c1 = arith.constant 1 : index
    %c0_4 = arith.constant 0 : index
    %c0_5 = arith.constant 0 : index
    %4 = vector.load %arg2[%c1, %c0_4, %c0_5] : memref<4x256x256xbf16, #tpu.memory_space<vmem>>, vector<1x256x256xbf16>
    %5 = vector.shape_cast %4 : vector<1x256x256xbf16> to vector<256x256xbf16>
    %cst_6 = arith.constant dense<0.000000e+00> : vector<256x256xf32>
    %6 = tpu.matmul %0, %5, %cst_6 {dimension_numbers = #tpu.dot_dimension_numbers<[1], [0], [0], [1], [0, 0, 1, 1], [], []>} : vector<256x256xbf16>, vector<256x256xbf16>, vector<256x256xf32> -> vector<256x256xf32>
    %7 = arith.maximumf %3, %6 : vector<256x256xf32>
    %c2 = arith.constant 2 : index
    %c0_7 = arith.constant 0 : index
    %c0_8 = arith.constant 0 : index
    %8 = vector.load %arg2[%c2, %c0_7, %c0_8] : memref<4x256x256xbf16, #tpu.memory_space<vmem>>, vector<1x256x256xbf16>
    %9 = vector.shape_cast %8 : vector<1x256x256xbf16> to vector<256x256xbf16>
    %cst_9 = arith.constant dense<0.000000e+00> : vector<256x256xf32>
    %10 = tpu.matmul %0, %9, %cst_9 {dimension_numbers = #tpu.dot_dimension_numbers<[1], [0], [0], [1], [0, 0, 1, 1], [], []>} : vector<256x256xbf16>, vector<256x256xbf16>, vector<256x256xf32> -> vector<256x256xf32>
    %11 = arith.maximumf %7, %10 : vector<256x256xf32>
    %c3 = arith.constant 3 : index
    %c0_10 = arith.constant 0 : index
    %c0_11 = arith.constant 0 : index
    %12 = vector.load %arg2[%c3, %c0_10, %c0_11] : memref<4x256x256xbf16, #tpu.memory_space<vmem>>, vector<1x256x256xbf16>
    %13 = vector.shape_cast %12 : vector<1x256x256xbf16> to vector<256x256xbf16>
    %cst_12 = arith.constant dense<0.000000e+00> : vector<256x256xf32>
    %14 = tpu.matmul %0, %13, %cst_12 {dimension_numbers = #tpu.dot_dimension_numbers<[1], [0], [0], [1], [0, 0, 1, 1], [], []>} : vector<256x256xbf16>, vector<256x256xbf16>, vector<256x256xf32> -> vector<256x256xf32>
    %15 = arith.maximumf %11, %14 : vector<256x256xf32>
    %c0_13 = arith.constant 0 : index
    %c0_14 = arith.constant 0 : index
    %16 = vector.load %arg3[%c0_13, %c0_14] : memref<1x256xf32, #tpu.memory_space<vmem>>, vector<1x256xf32>
    %17 = vector.broadcast %16 : vector<1x256xf32> to vector<256x256xf32>
    %18 = arith.addf %15, %17 : vector<256x256xf32>
    %cst_15 = arith.constant 0.000000e+00 : f32
    %19 = vector.broadcast %cst_15 : f32 to vector<256x256xf32>
    %20 = arith.maximumf %18, %19 : vector<256x256xf32>
    %21 = arith.truncf %20 : vector<256x256xf32> to vector<256x256xbf16>
    %c0_16 = arith.constant 0 : index
    %c0_17 = arith.constant 0 : index
    %c0_18 = arith.constant 0 : index
    %22 = vector.load %arg4[%c0_16, %c0_17, %c0_18] : memref<4x256x16xbf16, #tpu.memory_space<vmem>>, vector<1x256x16xbf16>
    %23 = vector.shape_cast %22 : vector<1x256x16xbf16> to vector<256x16xbf16>
    %cst_19 = arith.constant dense<0.000000e+00> : vector<256x16xf32>
    %24 = tpu.matmul %21, %23, %cst_19 {dimension_numbers = #tpu.dot_dimension_numbers<[1], [0], [0], [1], [0, 0, 1, 1], [], []>} : vector<256x256xbf16>, vector<256x16xbf16>, vector<256x16xf32> -> vector<256x16xf32>
    %c1_20 = arith.constant 1 : index
    %c0_21 = arith.constant 0 : index
    %c0_22 = arith.constant 0 : index
    %25 = vector.load %arg4[%c1_20, %c0_21, %c0_22] : memref<4x256x16xbf16, #tpu.memory_space<vmem>>, vector<1x256x16xbf16>
    %26 = vector.shape_cast %25 : vector<1x256x16xbf16> to vector<256x16xbf16>
    %cst_23 = arith.constant dense<0.000000e+00> : vector<256x16xf32>
    %27 = tpu.matmul %21, %26, %cst_23 {dimension_numbers = #tpu.dot_dimension_numbers<[1], [0], [0], [1], [0, 0, 1, 1], [], []>} : vector<256x256xbf16>, vector<256x16xbf16>, vector<256x16xf32> -> vector<256x16xf32>
    %28 = arith.maximumf %24, %27 : vector<256x16xf32>
    %c2_24 = arith.constant 2 : index
    %c0_25 = arith.constant 0 : index
    %c0_26 = arith.constant 0 : index
    %29 = vector.load %arg4[%c2_24, %c0_25, %c0_26] : memref<4x256x16xbf16, #tpu.memory_space<vmem>>, vector<1x256x16xbf16>
    %30 = vector.shape_cast %29 : vector<1x256x16xbf16> to vector<256x16xbf16>
    %cst_27 = arith.constant dense<0.000000e+00> : vector<256x16xf32>
    %31 = tpu.matmul %21, %30, %cst_27 {dimension_numbers = #tpu.dot_dimension_numbers<[1], [0], [0], [1], [0, 0, 1, 1], [], []>} : vector<256x256xbf16>, vector<256x16xbf16>, vector<256x16xf32> -> vector<256x16xf32>
    %32 = arith.maximumf %28, %31 : vector<256x16xf32>
    %c3_28 = arith.constant 3 : index
    %c0_29 = arith.constant 0 : index
    %c0_30 = arith.constant 0 : index
    %33 = vector.load %arg4[%c3_28, %c0_29, %c0_30] : memref<4x256x16xbf16, #tpu.memory_space<vmem>>, vector<1x256x16xbf16>
    %34 = vector.shape_cast %33 : vector<1x256x16xbf16> to vector<256x16xbf16>
    %cst_31 = arith.constant dense<0.000000e+00> : vector<256x16xf32>
    %35 = tpu.matmul %21, %34, %cst_31 {dimension_numbers = #tpu.dot_dimension_numbers<[1], [0], [0], [1], [0, 0, 1, 1], [], []>} : vector<256x256xbf16>, vector<256x16xbf16>, vector<256x16xf32> -> vector<256x16xf32>
    %36 = arith.maximumf %32, %35 : vector<256x16xf32>
    %c0_32 = arith.constant 0 : index
    %c0_33 = arith.constant 0 : index
    %37 = vector.load %arg5[%c0_32, %c0_33] : memref<1x16xf32, #tpu.memory_space<vmem>>, vector<1x16xf32>
    %38 = vector.broadcast %37 : vector<1x16xf32> to vector<256x16xf32>
    %39 = arith.addf %36, %38 : vector<256x16xf32>
    %cst_34 = arith.constant 0.000000e+00 : f32
    %40 = vector.broadcast %cst_34 : f32 to vector<256x16xf32>
    %41 = arith.maximumf %39, %40 : vector<256x16xf32>
    %c0_35 = arith.constant 0 : index
    %c0_36 = arith.constant 0 : index
    %42 = vector.load %arg13[%c0_35, %c0_36] : memref<256x16xf32, #tpu.memory_space<vmem>>, vector<256x16xf32>
    tpu.vector_store %arg13[%c0_35, %c0_36], %41 {strides = array<i32>} : memref<256x16xf32, #tpu.memory_space<vmem>>, vector<256x16xf32>,
    %c0_37 = arith.constant 0 : index
    %c0_38 = arith.constant 0 : index
    %43 = tpu.strided_load %arg13[%c0_37, %c0_38] {strides = array<i32: 16, 1>} : memref<256x16xf32, #tpu.memory_space<vmem>>, vector<16x16xf32>
    %c0_39 = arith.constant 0 : index
    %c0_40 = arith.constant 0 : index
    %44 = vector.load %arg14[%c0_39, %c0_40] : memref<16x256xf32, #tpu.memory_space<vmem>>, vector<16x16xf32>
    tpu.vector_store %arg14[%c0_39, %c0_40], %43 {strides = array<i32>} : memref<16x256xf32, #tpu.memory_space<vmem>>, vector<16x16xf32>,
    %c1_41 = arith.constant 1 : index
    %c0_42 = arith.constant 0 : index
    %45 = tpu.strided_load %arg13[%c1_41, %c0_42] {strides = array<i32: 16, 1>} : memref<256x16xf32, #tpu.memory_space<vmem>>, vector<16x16xf32>
    %c0_43 = arith.constant 0 : index
    %c16 = arith.constant 16 : index
    %46 = vector.load %arg14[%c0_43, %c16] : memref<16x256xf32, #tpu.memory_space<vmem>>, vector<16x16xf32>
    tpu.vector_store %arg14[%c0_43, %c16], %45 {strides = array<i32>} : memref<16x256xf32, #tpu.memory_space<vmem>>, vector<16x16xf32>,
    %c2_44 = arith.constant 2 : index
    %c0_45 = arith.constant 0 : index
    %47 = tpu.strided_load %arg13[%c2_44, %c0_45] {strides = array<i32: 16, 1>} : memref<256x16xf32, #tpu.memory_space<vmem>>, vector<16x16xf32>
    %c0_46 = arith.constant 0 : index
    %c32 = arith.constant 32 : index
    %48 = vector.load %arg14[%c0_46, %c32] : memref<16x256xf32, #tpu.memory_space<vmem>>, vector<16x16xf32>
    tpu.vector_store %arg14[%c0_46, %c32], %47 {strides = array<i32>} : memref<16x256xf32, #tpu.memory_space<vmem>>, vector<16x16xf32>,
    %c3_47 = arith.constant 3 : index
    %c0_48 = arith.constant 0 : index
    %49 = tpu.strided_load %arg13[%c3_47, %c0_48] {strides = array<i32: 16, 1>} : memref<256x16xf32, #tpu.memory_space<vmem>>, vector<16x16xf32>
    %c0_49 = arith.constant 0 : index
    %c48 = arith.constant 48 : index
    %50 = vector.load %arg14[%c0_49, %c48] : memref<16x256xf32, #tpu.memory_space<vmem>>, vector<16x16xf32>
    tpu.vector_store %arg14[%c0_49, %c48], %49 {strides = array<i32>} : memref<16x256xf32, #tpu.memory_space<vmem>>, vector<16x16xf32>,
    %c4 = arith.constant 4 : index
    %c0_50 = arith.constant 0 : index
    %51 = tpu.strided_load %arg13[%c4, %c0_50] {strides = array<i32: 16, 1>} : memref<256x16xf32, #tpu.memory_space<vmem>>, vector<16x16xf32>
    %c0_51 = arith.constant 0 : index
    %c64 = arith.constant 64 : index
    %52 = vector.load %arg14[%c0_51, %c64] : memref<16x256xf32, #tpu.memory_space<vmem>>, vector<16x16xf32>
    tpu.vector_store %arg14[%c0_51, %c64], %51 {strides = array<i32>} : memref<16x256xf32, #tpu.memory_space<vmem>>, vector<16x16xf32>,
    %c5 = arith.constant 5 : index
    %c0_52 = arith.constant 0 : index
    %53 = tpu.strided_load %arg13[%c5, %c0_52] {strides = array<i32: 16, 1>} : memref<256x16xf32, #tpu.memory_space<vmem>>, vector<16x16xf32>
    %c0_53 = arith.constant 0 : index
    %c80 = arith.constant 80 : index
    %54 = vector.load %arg14[%c0_53, %c80] : memref<16x256xf32, #tpu.memory_space<vmem>>, vector<16x16xf32>
    tpu.vector_store %arg14[%c0_53, %c80], %53 {strides = array<i32>} : memref<16x256xf32, #tpu.memory_space<vmem>>, vector<16x16xf32>,
    %c6 = arith.constant 6 : index
    %c0_54 = arith.constant 0 : index
    %55 = tpu.strided_load %arg13[%c6, %c0_54] {strides = array<i32: 16, 1>} : memref<256x16xf32, #tpu.memory_space<vmem>>, vector<16x16xf32>
    %c0_55 = arith.constant 0 : index
    %c96 = arith.constant 96 : index
    %56 = vector.load %arg14[%c0_55, %c96] : memref<16x256xf32, #tpu.memory_space<vmem>>, vector<16x16xf32>
    tpu.vector_store %arg14[%c0_55, %c96], %55 {strides = array<i32>} : memref<16x256xf32, #tpu.memory_space<vmem>>, vector<16x16xf32>,
    %c7 = arith.constant 7 : index
    %c0_56 = arith.constant 0 : index
    %57 = tpu.strided_load %arg13[%c7, %c0_56] {strides = array<i32: 16, 1>} : memref<256x16xf32, #tpu.memory_space<vmem>>, vector<16x16xf32>
    %c0_57 = arith.constant 0 : index
    %c112 = arith.constant 112 : index
    %58 = vector.load %arg14[%c0_57, %c112] : memref<16x256xf32, #tpu.memory_space<vmem>>, vector<16x16xf32>
    tpu.vector_store %arg14[%c0_57, %c112], %57 {strides = array<i32>} : memref<16x256xf32, #tpu.memory_space<vmem>>, vector<16x16xf32>,
    %c8 = arith.constant 8 : index
    %c0_58 = arith.constant 0 : index
    %59 = tpu.strided_load %arg13[%c8, %c0_58] {strides = array<i32: 16, 1>} : memref<256x16xf32, #tpu.memory_space<vmem>>, vector<16x16xf32>
    %c0_59 = arith.constant 0 : index
    %c128 = arith.constant 128 : index
    %60 = vector.load %arg14[%c0_59, %c128] : memref<16x256xf32, #tpu.memory_space<vmem>>, vector<16x16xf32>
    tpu.vector_store %arg14[%c0_59, %c128], %59 {strides = array<i32>} : memref<16x256xf32, #tpu.memory_space<vmem>>, vector<16x16xf32>,
    %c9 = arith.constant 9 : index
    %c0_60 = arith.constant 0 : index
    %61 = tpu.strided_load %arg13[%c9, %c0_60] {strides = array<i32: 16, 1>} : memref<256x16xf32, #tpu.memory_space<vmem>>, vector<16x16xf32>
    %c0_61 = arith.constant 0 : index
    %c144 = arith.constant 144 : index
    %62 = vector.load %arg14[%c0_61, %c144] : memref<16x256xf32, #tpu.memory_space<vmem>>, vector<16x16xf32>
    tpu.vector_store %arg14[%c0_61, %c144], %61 {strides = array<i32>} : memref<16x256xf32, #tpu.memory_space<vmem>>, vector<16x16xf32>,
    %c10 = arith.constant 10 : index
    %c0_62 = arith.constant 0 : index
    %63 = tpu.strided_load %arg13[%c10, %c0_62] {strides = array<i32: 16, 1>} : memref<256x16xf32, #tpu.memory_space<vmem>>, vector<16x16xf32>
    %c0_63 = arith.constant 0 : index
    %c160 = arith.constant 160 : index
    %64 = vector.load %arg14[%c0_63, %c160] : memref<16x256xf32, #tpu.memory_space<vmem>>, vector<16x16xf32>
    tpu.vector_store %arg14[%c0_63, %c160], %63 {strides = array<i32>} : memref<16x256xf32, #tpu.memory_space<vmem>>, vector<16x16xf32>,
    %c11 = arith.constant 11 : index
    %c0_64 = arith.constant 0 : index
    %65 = tpu.strided_load %arg13[%c11, %c0_64] {strides = array<i32: 16, 1>} : memref<256x16xf32, #tpu.memory_space<vmem>>, vector<16x16xf32>
    %c0_65 = arith.constant 0 : index
    %c176 = arith.constant 176 : index
    %66 = vector.load %arg14[%c0_65, %c176] : memref<16x256xf32, #tpu.memory_space<vmem>>, vector<16x16xf32>
    tpu.vector_store %arg14[%c0_65, %c176], %65 {strides = array<i32>} : memref<16x256xf32, #tpu.memory_space<vmem>>, vector<16x16xf32>,
    %c12 = arith.constant 12 : index
    %c0_66 = arith.constant 0 : index
    %67 = tpu.strided_load %arg13[%c12, %c0_66] {strides = array<i32: 16, 1>} : memref<256x16xf32, #tpu.memory_space<vmem>>, vector<16x16xf32>
    %c0_67 = arith.constant 0 : index
    %c192 = arith.constant 192 : index
    %68 = vector.load %arg14[%c0_67, %c192] : memref<16x256xf32, #tpu.memory_space<vmem>>, vector<16x16xf32>
    tpu.vector_store %arg14[%c0_67, %c192], %67 {strides = array<i32>} : memref<16x256xf32, #tpu.memory_space<vmem>>, vector<16x16xf32>,
    %c13 = arith.constant 13 : index
    %c0_68 = arith.constant 0 : index
    %69 = tpu.strided_load %arg13[%c13, %c0_68] {strides = array<i32: 16, 1>} : memref<256x16xf32, #tpu.memory_space<vmem>>, vector<16x16xf32>
    %c0_69 = arith.constant 0 : index
    %c208 = arith.constant 208 : index
    %70 = vector.load %arg14[%c0_69, %c208] : memref<16x256xf32, #tpu.memory_space<vmem>>, vector<16x16xf32>
    tpu.vector_store %arg14[%c0_69, %c208], %69 {strides = array<i32>} : memref<16x256xf32, #tpu.memory_space<vmem>>, vector<16x16xf32>,
    %c14 = arith.constant 14 : index
    %c0_70 = arith.constant 0 : index
    %71 = tpu.strided_load %arg13[%c14, %c0_70] {strides = array<i32: 16, 1>} : memref<256x16xf32, #tpu.memory_space<vmem>>, vector<16x16xf32>
    %c0_71 = arith.constant 0 : index
    %c224 = arith.constant 224 : index
    %72 = vector.load %arg14[%c0_71, %c224] : memref<16x256xf32, #tpu.memory_space<vmem>>, vector<16x16xf32>
    tpu.vector_store %arg14[%c0_71, %c224], %71 {strides = array<i32>} : memref<16x256xf32, #tpu.memory_space<vmem>>, vector<16x16xf32>,
    %c15 = arith.constant 15 : index
    %c0_72 = arith.constant 0 : index
    %73 = tpu.strided_load %arg13[%c15, %c0_72] {strides = array<i32: 16, 1>} : memref<256x16xf32, #tpu.memory_space<vmem>>, vector<16x16xf32>
    %c0_73 = arith.constant 0 : index
    %c240 = arith.constant 240 : index
    %74 = vector.load %arg14[%c0_73, %c240] : memref<16x256xf32, #tpu.memory_space<vmem>>, vector<16x16xf32>
    tpu.vector_store %arg14[%c0_73, %c240], %73 {strides = array<i32>} : memref<16x256xf32, #tpu.memory_space<vmem>>, vector<16x16xf32>,
    %c0_74 = arith.constant 0 : index
    %c0_75 = arith.constant 0 : index
    %75 = vector.load %arg14[%c0_74, %c0_75] : memref<16x256xf32, #tpu.memory_space<vmem>>, vector<16x256xf32>
    %76 = arith.truncf %75 : vector<16x256xf32> to vector<16x256xbf16>
    %c0_76 = arith.constant 0 : index
    %c0_77 = arith.constant 0 : index
    %77 = vector.load %arg6[%c0_76, %c0_77] : memref<256x128xbf16, #tpu.memory_space<vmem>>, vector<256x128xbf16>
    %cst_78 = arith.constant dense<0.000000e+00> : vector<16x128xf32>
    %78 = tpu.matmul %76, %77, %cst_78 {dimension_numbers = #tpu.dot_dimension_numbers<[1], [0], [0], [1], [0, 0, 1, 1], [], []>} : vector<16x256xbf16>, vector<256x128xbf16>, vector<16x128xf32> -> vector<16x128xf32>
    %c0_79 = arith.constant 0 : index
    %c0_80 = arith.constant 0 : index
    %79 = vector.load %arg7[%c0_79, %c0_80] : memref<1x128xf32, #tpu.memory_space<vmem>>, vector<1x128xf32>
    %80 = vector.broadcast %79 : vector<1x128xf32> to vector<16x128xf32>
    %81 = arith.addf %78, %80 : vector<16x128xf32>
    %cst_81 = arith.constant 0.000000e+00 : f32
    %82 = vector.broadcast %cst_81 : f32 to vector<16x128xf32>
    %83 = arith.maximumf %81, %82 : vector<16x128xf32>
    %84 = arith.truncf %83 : vector<16x128xf32> to vector<16x128xbf16>
    %c0_82 = arith.constant 0 : index
    %c0_83 = arith.constant 0 : index
    %85 = vector.load %arg8[%c0_82, %c0_83] : memref<128x128xbf16, #tpu.memory_space<vmem>>, vector<128x128xbf16>
    %cst_84 = arith.constant dense<0.000000e+00> : vector<16x128xf32>
    %86 = tpu.matmul %84, %85, %cst_84 {dimension_numbers = #tpu.dot_dimension_numbers<[1], [0], [0], [1], [0, 0, 1, 1], [], []>} : vector<16x128xbf16>, vector<128x128xbf16>, vector<16x128xf32> -> vector<16x128xf32>
    %c0_85 = arith.constant 0 : index
    %c0_86 = arith.constant 0 : index
    %87 = vector.load %arg9[%c0_85, %c0_86] : memref<1x128xf32, #tpu.memory_space<vmem>>, vector<1x128xf32>
    %88 = vector.broadcast %87 : vector<1x128xf32> to vector<16x128xf32>
    %89 = arith.addf %86, %88 : vector<16x128xf32>
    %cst_87 = arith.constant 0.000000e+00 : f32
    %90 = vector.broadcast %cst_87 : f32 to vector<16x128xf32>
    %91 = arith.maximumf %89, %90 : vector<16x128xf32>
    %92 = arith.truncf %91 : vector<16x128xf32> to vector<16x128xbf16>
    %c0_88 = arith.constant 0 : index
    %c0_89 = arith.constant 0 : index
    %93 = vector.load %arg10[%c0_88, %c0_89] : memref<128x128xbf16, #tpu.memory_space<vmem>>, vector<128x128xbf16>
    %cst_90 = arith.constant dense<0.000000e+00> : vector<16x128xf32>
    %94 = tpu.matmul %92, %93, %cst_90 {dimension_numbers = #tpu.dot_dimension_numbers<[1], [0], [0], [1], [0, 0, 1, 1], [], []>} : vector<16x128xbf16>, vector<128x128xbf16>, vector<16x128xf32> -> vector<16x128xf32>
    %c0_91 = arith.constant 0 : index
    %c0_92 = arith.constant 0 : index
    %95 = vector.load %arg11[%c0_91, %c0_92] : memref<1x128xf32, #tpu.memory_space<vmem>>, vector<1x128xf32>
    %96 = vector.broadcast %95 : vector<1x128xf32> to vector<16x128xf32>
    %97 = arith.addf %94, %96 : vector<16x128xf32>
    %cst_93 = arith.constant 0.000000e+00 : f32
    %98 = vector.broadcast %cst_93 : f32 to vector<16x128xf32>
    %99 = arith.maximumf %97, %98 : vector<16x128xf32>
    %c0_94 = arith.constant 0 : index
    %c0_95 = arith.constant 0 : index
    %100 = vector.load %arg12[%c0_94, %c0_95] : memref<16x128xf32, #tpu.memory_space<vmem>>, vector<16x128xf32>
    tpu.vector_store %arg12[%c0_94, %c0_95], %99 {strides = array<i32>} : memref<16x128xf32, #tpu.memory_space<vmem>>, vector<16x128xf32>,
    return
  }
  func.func @transform_0(%arg0: i32) -> (i32, i32) {
    %c0_i32 = arith.constant 0 : i32
    %c0_i32_0 = arith.constant 0 : i32
    return %arg0, %c0_i32 : i32, i32
  }
  func.func @transform_1(%arg0: i32) -> (i32, i32, i32) {
    %c0_i32 = arith.constant 0 : i32
    %c0_i32_0 = arith.constant 0 : i32
    %c0_i32_1 = arith.constant 0 : i32
    %c0_i32_2 = arith.constant 0 : i32
    return %c0_i32, %c0_i32_0, %c0_i32_1 : i32, i32, i32
  }
  func.func @transform_2(%arg0: i32) -> (i32, i32) {
    %c0_i32 = arith.constant 0 : i32
    %c0_i32_0 = arith.constant 0 : i32
    %c0_i32_1 = arith.constant 0 : i32
    return %c0_i32, %c0_i32_0 : i32, i32
  }
  func.func @transform_3(%arg0: i32) -> (i32, i32, i32) {
    %c0_i32 = arith.constant 0 : i32
    %c0_i32_0 = arith.constant 0 : i32
    %c0_i32_1 = arith.constant 0 : i32
    %c0_i32_2 = arith.constant 0 : i32
    return %c0_i32, %c0_i32_0, %c0_i32_1 : i32, i32, i32
  }
  func.func @transform_4(%arg0: i32) -> (i32, i32) {
    %c0_i32 = arith.constant 0 : i32
    %c0_i32_0 = arith.constant 0 : i32
    %c0_i32_1 = arith.constant 0 : i32
    return %c0_i32, %c0_i32_0 : i32, i32
  }
  func.func @transform_5(%arg0: i32) -> (i32, i32) {
    %c0_i32 = arith.constant 0 : i32
    %c0_i32_0 = arith.constant 0 : i32
    %c0_i32_1 = arith.constant 0 : i32
    return %c0_i32, %c0_i32_0 : i32, i32
  }
  func.func @transform_6(%arg0: i32) -> (i32, i32) {
    %c0_i32 = arith.constant 0 : i32
    %c0_i32_0 = arith.constant 0 : i32
    %c0_i32_1 = arith.constant 0 : i32
    return %c0_i32, %c0_i32_0 : i32, i32
  }
  func.func @transform_7(%arg0: i32) -> (i32, i32) {
    %c0_i32 = arith.constant 0 : i32
    %c0_i32_0 = arith.constant 0 : i32
    %c0_i32_1 = arith.constant 0 : i32
    return %c0_i32, %c0_i32_0 : i32, i32
  }
  func.func @transform_8(%arg0: i32) -> (i32, i32) {
    %c0_i32 = arith.constant 0 : i32
    %c0_i32_0 = arith.constant 0 : i32
    %c0_i32_1 = arith.constant 0 : i32
    return %c0_i32, %c0_i32_0 : i32, i32
  }
  func.func @transform_9(%arg0: i32) -> (i32, i32) {
    %c0_i32 = arith.constant 0 : i32
    %c0_i32_0 = arith.constant 0 : i32
    %c0_i32_1 = arith.constant 0 : i32
    return %c0_i32, %c0_i32_0 : i32, i32
  }
  func.func @transform_10(%arg0: i32) -> (i32, i32) {
    %c0_i32 = arith.constant 0 : i32
    %c0_i32_0 = arith.constant 0 : i32
    %c0_i32_1 = arith.constant 0 : i32
    return %c0_i32, %c0_i32_0 : i32, i32
  }
  func.func @transform_11(%arg0: i32) -> (i32, i32) {
    %c0_i32 = arith.constant 0 : i32
    %c0_i32_0 = arith.constant 0 : i32
    return %arg0, %c0_i32 : i32, i32
  }
}

</mosaic_0001>

<llo_original>
// kernel: lenet5_forward.1
$region0: #{lenet5_forward.1}
  #allocation0 [shape = 'u32[]', space=smem, size = 0x4, offset = 0x4, fixed_abs, tag = 'smem constant byte address 0x4 - core index']
  #allocation1 [shape = 'u32[144,128]{1,0:T(1,128)}', space=vmem, size = 0x12000, scoped, tag = 'internal scratch']
  #allocation2 [shape = 'f32[256,16]{1,0:T(8,128)}', space=vmem, size = 0x20000, scoped, tag = 'scratch operand']
  #allocation3 [shape = 'f32[16,256]{1,0:T(8,128)}', space=vmem, size = 0x4000, scoped, tag = 'scratch operand']
  %s0 = inlined_call_operand.vmem [shape: bf16[512,256], index: 0, kind: input, shape index: {}]
  %s1 = inlined_call_operand.vmem [shape: bf16[4,256,256], index: 1, kind: input, shape index: {}]
  %s2 = inlined_call_operand.vmem [shape: f32[1,256], index: 2, kind: input, shape index: {}]
  %s3 = inlined_call_operand.vmem [shape: bf16[4,256,16], index: 3, kind: input, shape index: {}]
  %s4 = inlined_call_operand.vmem [shape: f32[1,16], index: 4, kind: input, shape index: {}]
  %s5 = inlined_call_operand.vmem [shape: bf16[256,128], index: 5, kind: input, shape index: {}]
  %s6 = inlined_call_operand.vmem [shape: f32[1,128], index: 6, kind: input, shape index: {}]
  %s7 = inlined_call_operand.vmem [shape: bf16[128,128], index: 7, kind: input, shape index: {}]
  %s8 = inlined_call_operand.vmem [shape: f32[1,128], index: 8, kind: input, shape index: {}]
  %s9 = inlined_call_operand.vmem [shape: bf16[128,128], index: 9, kind: input, shape index: {}]
  %s10 = inlined_call_operand.vmem [shape: f32[1,128], index: 10, kind: input, shape index: {}]
  %s11 = inlined_call_operand.vmem [shape: f32[32,128], index: 11, kind: output, shape index: {}]
  %s12 = sld [smem:[#allocation0]]
  $region77: #{lenet5_forward.1} parent=0
    _
  %s14 = ssub.s32 1, %s12
  %s15 = scalar_select 0, %s14, %s12
  loop: start=0, step=1, limit=4
  $region2: #{lenet5_forward.1} parent=0 // loop_pre_header
    _
  $region3: #{lenet5_forward.1} parent=0 // loop_header
    %s17 = sphi 0, %s21
    %p18 = scmp.ge.s32.totalorder %s17, 4
    %s27 = sphi 0, %s29
    %s30 = sphi 0, %s27
    %s31 = sphi 0, %s30
    %s47 = sphi 0, %s31
    %s51 = sphi 0, %s51
    %s53 = sphi 0, %s51
    %s54 = sphi 0, %s53
    %s68 = sphi 0, %s54
    %s72 = sphi 0, %s72
    %s74 = sphi 0, %s72
    %s75 = sphi 0, %s74
    %s89 = sphi 0, %s75
    %s93 = sphi 0, %s93
    %s95 = sphi 0, %s93
    %s96 = sphi 0, %s95
    %s110 = sphi 0, %s96
    %s114 = sphi 0, %s114
    %s116 = sphi 0, %s114
    %s117 = sphi 0, %s116
    %s131 = sphi 0, %s117
    %s135 = sphi 0, %s135
    %s137 = sphi 0, %s135
    %s138 = sphi 0, %s137
    %s152 = sphi 0, %s138
    %s156 = sphi 0, %s156
    %s158 = sphi 0, %s156
    %s159 = sphi 0, %s158
    %s173 = sphi 0, %s159
    %s177 = sphi 0, %s177
    %s179 = sphi 0, %s177
    %s180 = sphi 0, %s179
    %s194 = sphi 0, %s180
    %s198 = sphi 0, %s198
    %s200 = sphi 0, %s198
    %s201 = sphi 0, %s200
    %s215 = sphi 0, %s201
    %s219 = sphi 0, %s219
    %s221 = sphi 0, %s219
    %s222 = sphi 0, %s221
    %s236 = sphi 0, %s222
    %s240 = sphi 0, %s240
    %s242 = sphi 0, %s240
    %s243 = sphi 0, %s242
    %s257 = sphi 0, %s243
    %s263 = sphi 0, %s265
    %s266 = sphi 0, %s263
    %s267 = sphi 0, %s266
    %s283 = sphi 0, %s267
  $region4: #{lenet5_forward.1} parent=0 // loop_header_branch
    %20 = sbr.rel (%p18) target = $region8
  $region5: #{lenet5_forward.1} parent=0 // loop_body
    %s22 = ssub.s32 %s17, 1
    %s23 = ssub.s32 %s17, 2
    %s24 = sadd.s32 %s17, 1
    %s25 = ssub.s32 %s17, %s24
    %p26 = scmp.eq.s32.totalorder %s25, 0
    %s28 = sadd.s32 %s27, 1
    %s29 = scalar_select %p26, %s27, %s28
    %p32 = pneg %p26
    %p33 = scmp.eq.s32.totalorder %s17, 1
    %p34 = por %p32, %p33
    %p35 = scmp.ne.s32.totalorder %s27, %s30
    %p36 = scmp.eq.s32.totalorder %s17, 0
    %p37 = por %p35, %p36
    %p38 = scmp.ne.s32.totalorder %s27, %s30
    %p39 = scmp.eq.s32.totalorder %s22, 1
    %p40 = por %p38, %p39
    %p41 = scmp.ne.s32.totalorder %s30, %s31
    %p42 = scmp.eq.s32.totalorder %s22, 0
    %p43 = por %p41, %p42
    %p44 = scmp.ne.s32.totalorder %s30, %s31
    %p45 = scmp.eq.s32.totalorder %s23, 1
    %p46 = por %p44, %p45
    %p48 = scmp.ne.s32.totalorder %s31, %s47
    %p49 = scmp.eq.s32.totalorder %s23, 0
    %p50 = por %p48, %p49
    %s52 = sadd.s32 %s51, 1
    %p55 = scmp.eq.s32.totalorder %s17, 1
    %p56 = scmp.ne.s32.totalorder %s51, %s53
    %p57 = scmp.eq.s32.totalorder %s17, 0
    %p58 = por %p56, %p57
    %p59 = scmp.ne.s32.totalorder %s51, %s53
    %p60 = scmp.eq.s32.totalorder %s22, 1
    %p61 = por %p59, %p60
    %p62 = scmp.ne.s32.totalorder %s53, %s54
    %p63 = scmp.eq.s32.totalorder %s22, 0
    %p64 = por %p62, %p63
    %p65 = scmp.ne.s32.totalorder %s53, %s54
    %p66 = scmp.eq.s32.totalorder %s23, 1
    %p67 = por %p65, %p66
    %p69 = scmp.ne.s32.totalorder %s54, %s68
    %p70 = scmp.eq.s32.totalorder %s23, 0
    %p71 = por %p69, %p70
    %s73 = sadd.s32 %s72, 1
    %p76 = scmp.eq.s32.totalorder %s17, 1
    %p77 = scmp.ne.s32.totalorder %s72, %s74
    %p78 = scmp.eq.s32.totalorder %s17, 0
    %p79 = por %p77, %p78
    %p80 = scmp.ne.s32.totalorder %s72, %s74
    %p81 = scmp.eq.s32.totalorder %s22, 1
    %p82 = por %p80, %p81
    %p83 = scmp.ne.s32.totalorder %s74, %s75
    %p84 = scmp.eq.s32.totalorder %s22, 0
    %p85 = por %p83, %p84
    %p86 = scmp.ne.s32.totalorder %s74, %s75
    %p87 = scmp.eq.s32.totalorder %s23, 1
    %p88 = por %p86, %p87
    %p90 = scmp.ne.s32.totalorder %s75, %s89
    %p91 = scmp.eq.s32.totalorder %s23, 0
    %p92 = por %p90, %p91
    %s94 = sadd.s32 %s93, 1
    %p97 = scmp.eq.s32.totalorder %s17, 1
    %p98 = scmp.ne.s32.totalorder %s93, %s95
    %p99 = scmp.eq.s32.totalorder %s17, 0
    %p100 = por %p98, %p99
    %p101 = scmp.ne.s32.totalorder %s93, %s95
    %p102 = scmp.eq.s32.totalorder %s22, 1
    %p103 = por %p101, %p102
    %p104 = scmp.ne.s32.totalorder %s95, %s96
    %p105 = scmp.eq.s32.totalorder %s22, 0
    %p106 = por %p104, %p105
    %p107 = scmp.ne.s32.totalorder %s95, %s96
    %p108 = scmp.eq.s32.totalorder %s23, 1
    %p109 = por %p107, %p108
    %p111 = scmp.ne.s32.totalorder %s96, %s110
    %p112 = scmp.eq.s32.totalorder %s23, 0
    %p113 = por %p111, %p112
    %s115 = sadd.s32 %s114, 1
    %p118 = scmp.eq.s32.totalorder %s17, 1
    %p119 = scmp.ne.s32.totalorder %s114, %s116
    %p120 = scmp.eq.s32.totalorder %s17, 0
    %p121 = por %p119, %p120
    %p122 = scmp.ne.s32.totalorder %s114, %s116
    %p123 = scmp.eq.s32.totalorder %s22, 1
    %p124 = por %p122, %p123
    %p125 = scmp.ne.s32.totalorder %s116, %s117
    %p126 = scmp.eq.s32.totalorder %s22, 0
    %p127 = por %p125, %p126
    %p128 = scmp.ne.s32.totalorder %s116, %s117
    %p129 = scmp.eq.s32.totalorder %s23, 1
    %p130 = por %p128, %p129
    %p132 = scmp.ne.s32.totalorder %s117, %s131
    %p133 = scmp.eq.s32.totalorder %s23, 0
    %p134 = por %p132, %p133
    %s136 = sadd.s32 %s135, 1
    %p139 = scmp.eq.s32.totalorder %s17, 1
    %p140 = scmp.ne.s32.totalorder %s135, %s137
    %p141 = scmp.eq.s32.totalorder %s17, 0
    %p142 = por %p140, %p141
    %p143 = scmp.ne.s32.totalorder %s135, %s137
    %p144 = scmp.eq.s32.totalorder %s22, 1
    %p145 = por %p143, %p144
    %p146 = scmp.ne.s32.totalorder %s137, %s138
    %p147 = scmp.eq.s32.totalorder %s22, 0
    %p148 = por %p146, %p147
    %p149 = scmp.ne.s32.totalorder %s137, %s138
    %p150 = scmp.eq.s32.totalorder %s23, 1
    %p151 = por %p149, %p150
    %p153 = scmp.ne.s32.totalorder %s138, %s152
    %p154 = scmp.eq.s32.totalorder %s23, 0
    %p155 = por %p153, %p154
    %s157 = sadd.s32 %s156, 1
    %p160 = scmp.eq.s32.totalorder %s17, 1
    %p161 = scmp.ne.s32.totalorder %s156, %s158
    %p162 = scmp.eq.s32.totalorder %s17, 0
    %p163 = por %p161, %p162
    %p164 = scmp.ne.s32.totalorder %s156, %s158
    %p165 = scmp.eq.s32.totalorder %s22, 1
    %p166 = por %p164, %p165
    %p167 = scmp.ne.s32.totalorder %s158, %s159
    %p168 = scmp.eq.s32.totalorder %s22, 0
    %p169 = por %p167, %p168
    %p170 = scmp.ne.s32.totalorder %s158, %s159
    %p171 = scmp.eq.s32.totalorder %s23, 1
    %p172 = por %p170, %p171
    %p174 = scmp.ne.s32.totalorder %s159, %s173
    %p175 = scmp.eq.s32.totalorder %s23, 0
    %p176 = por %p174, %p175
    %s178 = sadd.s32 %s177, 1
    %p181 = scmp.eq.s32.totalorder %s17, 1
    %p182 = scmp.ne.s32.totalorder %s177, %s179
    %p183 = scmp.eq.s32.totalorder %s17, 0
    %p184 = por %p182, %p183
    %p185 = scmp.ne.s32.totalorder %s177, %s179
    %p186 = scmp.eq.s32.totalorder %s22, 1
    %p187 = por %p185, %p186
    %p188 = scmp.ne.s32.totalorder %s179, %s180
    %p189 = scmp.eq.s32.totalorder %s22, 0
    %p190 = por %p188, %p189
    %p191 = scmp.ne.s32.totalorder %s179, %s180
    %p192 = scmp.eq.s32.totalorder %s23, 1
    %p193 = por %p191, %p192
    %p195 = scmp.ne.s32.totalorder %s180, %s194
    %p196 = scmp.eq.s32.totalorder %s23, 0
    %p197 = por %p195, %p196
    %s199 = sadd.s32 %s198, 1
    %p202 = scmp.eq.s32.totalorder %s17, 1
    %p203 = scmp.ne.s32.totalorder %s198, %s200
    %p204 = scmp.eq.s32.totalorder %s17, 0
    %p205 = por %p203, %p204
    %p206 = scmp.ne.s32.totalorder %s198, %s200
    %p207 = scmp.eq.s32.totalorder %s22, 1
    %p208 = por %p206, %p207
    %p209 = scmp.ne.s32.totalorder %s200, %s201
    %p210 = scmp.eq.s32.totalorder %s22, 0
    %p211 = por %p209, %p210
    %p212 = scmp.ne.s32.totalorder %s200, %s201
    %p213 = scmp.eq.s32.totalorder %s23, 1
    %p214 = por %p212, %p213
    %p216 = scmp.ne.s32.totalorder %s201, %s215
    %p217 = scmp.eq.s32.totalorder %s23, 0
    %p218 = por %p216, %p217
    %s220 = sadd.s32 %s219, 1
    %p223 = scmp.eq.s32.totalorder %s17, 1
    %p224 = scmp.ne.s32.totalorder %s219, %s221
    %p225 = scmp.eq.s32.totalorder %s17, 0
    %p226 = por %p224, %p225
    %p227 = scmp.ne.s32.totalorder %s219, %s221
    %p228 = scmp.eq.s32.totalorder %s22, 1
    %p229 = por %p227, %p228
    %p230 = scmp.ne.s32.totalorder %s221, %s222
    %p231 = scmp.eq.s32.totalorder %s22, 0
    %p232 = por %p230, %p231
    %p233 = scmp.ne.s32.totalorder %s221, %s222
    %p234 = scmp.eq.s32.totalorder %s23, 1
    %p235 = por %p233, %p234
    %p237 = scmp.ne.s32.totalorder %s222, %s236
    %p238 = scmp.eq.s32.totalorder %s23, 0
    %p239 = por %p237, %p238
    %s241 = sadd.s32 %s240, 1
    %p244 = scmp.eq.s32.totalorder %s17, 1
    %p245 = scmp.ne.s32.totalorder %s240, %s242
    %p246 = scmp.eq.s32.totalorder %s17, 0
    %p247 = por %p245, %p246
    %p248 = scmp.ne.s32.totalorder %s240, %s242
    %p249 = scmp.eq.s32.totalorder %s22, 1
    %p250 = por %p248, %p249
    %p251 = scmp.ne.s32.totalorder %s242, %s243
    %p252 = scmp.eq.s32.totalorder %s22, 0
    %p253 = por %p251, %p252
    %p254 = scmp.ne.s32.totalorder %s242, %s243
    %p255 = scmp.eq.s32.totalorder %s23, 1
    %p256 = por %p254, %p255
    %p258 = scmp.ne.s32.totalorder %s243, %s257
    %p259 = scmp.eq.s32.totalorder %s23, 0
    %p260 = por %p258, %p259
    %s261 = ssub.s32 %s17, %s24
    %p262 = scmp.eq.s32.totalorder %s261, 0
    %s264 = sadd.s32 %s263, 1
    %s265 = scalar_select %p262, %s263, %s264
    %p268 = pneg %p262
    %p269 = scmp.eq.s32.totalorder %s17, 1
    %p270 = por %p268, %p269
    %p271 = scmp.ne.s32.totalorder %s263, %s266
    %p272 = scmp.eq.s32.totalorder %s17, 0
    %p273 = por %p271, %p272
    %p274 = scmp.ne.s32.totalorder %s263, %s266
    %p275 = scmp.eq.s32.totalorder %s22, 1
    %p276 = por %p274, %p275
    %p277 = scmp.ne.s32.totalorder %s266, %s267
    %p278 = scmp.eq.s32.totalorder %s22, 0
    %p279 = por %p277, %p278
    %p280 = scmp.ne.s32.totalorder %s266, %s267
    %p281 = scmp.eq.s32.totalorder %s23, 1
    %p282 = por %p280, %p281
    %p284 = scmp.ne.s32.totalorder %s267, %s283
    %p285 = scmp.eq.s32.totalorder %s23, 0
    %p286 = por %p284, %p285
    %p287 = scmp.le.s32.totalorder 1, %s17
    %p288 = scmp.lt.s32.totalorder %s17, 3
    %p289 = pnand %p287, %p288
    %p290 = pneg %p289
    // Predicated region
    $region9: #{lenet5_forward.1} parent=5 // pred_check
      _
    $region10: #{lenet5_forward.1} parent=5 // pred_check_branch
      %292 = sbr.rel (%p289) target = $region12
    $region11: #{lenet5_forward.1} parent=5 // pred_region
      %s293 = ssub.s32 %s17, 1
      // Predicated region
      $region13: #{lenet5_forward.1} parent=11 // pred_check
        %p294 = pneg %p64
      $region14: #{lenet5_forward.1} parent=11 // pred_check_branch
        %296 = sbr.rel (%p294) target = $region16
      $region15: #{lenet5_forward.1} parent=11 // pred_region
        _
      $region16: #{lenet5_forward.1} parent=11 // pred_fallthru
        _
      // Predicated region
      $region17: #{lenet5_forward.1} parent=11 // pred_check
        %p297 = pneg %p85
      $region18: #{lenet5_forward.1} parent=11 // pred_check_branch
        %299 = sbr.rel (%p297) target = $region20
      $region19: #{lenet5_forward.1} parent=11 // pred_region
        _
      $region20: #{lenet5_forward.1} parent=11 // pred_fallthru
        _
      // Predicated region
      $region21: #{lenet5_forward.1} parent=11 // pred_check
        %p300 = pneg %p106
      $region22: #{lenet5_forward.1} parent=11 // pred_check_branch
        %302 = sbr.rel (%p300) target = $region24
      $region23: #{lenet5_forward.1} parent=11 // pred_region
        _
      $region24: #{lenet5_forward.1} parent=11 // pred_fallthru
        _
      // Predicated region
      $region25: #{lenet5_forward.1} parent=11 // pred_check
        %p303 = pneg %p127
      $region26: #{lenet5_forward.1} parent=11 // pred_check_branch
        %305 = sbr.rel (%p303) target = $region28
      $region27: #{lenet5_forward.1} parent=11 // pred_region
        _
      $region28: #{lenet5_forward.1} parent=11 // pred_fallthru
        _
      // Predicated region
      $region29: #{lenet5_forward.1} parent=11 // pred_check
        %p306 = pneg %p148
      $region30: #{lenet5_forward.1} parent=11 // pred_check_branch
        %308 = sbr.rel (%p306) target = $region32
      $region31: #{lenet5_forward.1} parent=11 // pred_region
        _
      $region32: #{lenet5_forward.1} parent=11 // pred_fallthru
        _
      // Predicated region
      $region33: #{lenet5_forward.1} parent=11 // pred_check
        %p309 = pneg %p169
      $region34: #{lenet5_forward.1} parent=11 // pred_check_branch
        %311 = sbr.rel (%p309) target = $region36
      $region35: #{lenet5_forward.1} parent=11 // pred_region
        _
      $region36: #{lenet5_forward.1} parent=11 // pred_fallthru
        _
      // Predicated region
      $region37: #{lenet5_forward.1} parent=11 // pred_check
        %p312 = pneg %p190
      $region38: #{lenet5_forward.1} parent=11 // pred_check_branch
        %314 = sbr.rel (%p312) target = $region40
      $region39: #{lenet5_forward.1} parent=11 // pred_region
        _
      $region40: #{lenet5_forward.1} parent=11 // pred_fallthru
        _
      // Predicated region
      $region41: #{lenet5_forward.1} parent=11 // pred_check
        %p315 = pneg %p211
      $region42: #{lenet5_forward.1} parent=11 // pred_check_branch
        %317 = sbr.rel (%p315) target = $region44
      $region43: #{lenet5_forward.1} parent=11 // pred_region
        _
      $region44: #{lenet5_forward.1} parent=11 // pred_fallthru
        _
      // Predicated region
      $region45: #{lenet5_forward.1} parent=11 // pred_check
        %p318 = pneg %p232
      $region46: #{lenet5_forward.1} parent=11 // pred_check_branch
        %320 = sbr.rel (%p318) target = $region48
      $region47: #{lenet5_forward.1} parent=11 // pred_region
        _
      $region48: #{lenet5_forward.1} parent=11 // pred_fallthru
        _
      // Predicated region
      $region49: #{lenet5_forward.1} parent=11 // pred_check
        %p321 = pneg %p253
      $region50: #{lenet5_forward.1} parent=11 // pred_check_branch
        %323 = sbr.rel (%p321) target = $region52
      $region51: #{lenet5_forward.1} parent=11 // pred_region
        _
      $region52: #{lenet5_forward.1} parent=11 // pred_fallthru
        _
    $region12: #{lenet5_forward.1} parent=5 // pred_fallthru
      _
    %p324 = scmp.lt.s32.totalorder %s17, 2
    // Predicated region
    $region53: #{lenet5_forward.1} parent=5 // pred_check
      %p325 = pneg %p324
    $region54: #{lenet5_forward.1} parent=5 // pred_check_branch
      %327 = sbr.rel (%p325) target = $region56
    $region55: #{lenet5_forward.1} parent=5 // pred_region
      // Predicated region
      $region57: #{lenet5_forward.1} parent=55 // pred_check
        %p328 = pneg %p37
      $region58: #{lenet5_forward.1} parent=55 // pred_check_branch
        %330 = sbr.rel (%p328) target = $region60
      $region59: #{lenet5_forward.1} parent=55 // pred_region
        %s331 = smul.u32 32, %s17
        %p332 = scmp.lt.s32.totalorder %s331, 63
        %s333 = scalar_select %p332, %s331, 63
        %s334 = smul.addr %s333, 2
        %s335 = smul.addr %s334, 4
        %s336 = scalar_lea.vmem %s0, %s335
        %s337 = smul.u32 32, %s17
      $region60: #{lenet5_forward.1} parent=55 // pred_fallthru
        _
    $region56: #{lenet5_forward.1} parent=5 // pred_fallthru
      _
    %p338 = scmp.le.s32.totalorder 1, %s17
    %p339 = scmp.lt.s32.totalorder %s17, 3
    %p340 = pnand %p338, %p339
    %p341 = pneg %p340
    // Predicated region
    $region61: #{lenet5_forward.1} parent=5 // pred_check
      _
    $region62: #{lenet5_forward.1} parent=5 // pred_check_branch
      %343 = sbr.rel (%p340) target = $region64
    $region63: #{lenet5_forward.1} parent=5 // pred_region
      %s344 = ssub.s32 %s17, 1
      %s345 = smul.u32 32, %s22
      %p346 = scmp.lt.s32.totalorder %s345, 63
      %s347 = scalar_select %p346, %s345, 63
      %s348 = smul.addr %s347, 2
      %s349 = smul.addr %s348, 4
      %s350 = scalar_lea.vmem %s0, %s349
      %p351 = pneg %p43
      %p352 = pneg %p40
      %p353 = pneg %p64
      %p354 = pneg %p61
      %p355 = pneg %p85
      %p356 = pneg %p82
      %p357 = pneg %p106
      %p358 = pneg %p103
      %p359 = pneg %p127
      %p360 = pneg %p124
      %p361 = pneg %p148
      %p362 = pneg %p145
      %p363 = pneg %p169
      %p364 = pneg %p166
      %p365 = pneg %p190
      %p366 = pneg %p187
      %p367 = pneg %p211
      %p368 = pneg %p208
      %p369 = pneg %p232
      %p370 = pneg %p229
      %p371 = pneg %p253
      %p372 = pneg %p250
      %p373 = pneg %p279
      %p374 = pneg %p276
      %s375 = smul.u32 2, %s22
      %p376 = scmp.lt.s32.totalorder %s375, 3
      %s377 = scalar_select %p376, %s375, 3
      %s378 = smul.addr %s377, 8
      %s379 = scalar_lea.vmem %s11, %s378
      %s380 = smul.u32 32, %s22
      %p381 = scmp.lt.s32.totalorder %s380, 63
      %s382 = scalar_select %p381, %s380, 63
      %s383 = smul.addr %s382, 2
      %s384 = smul.addr %s383, 4
      %s385 = scalar_lea.vmem %s0, %s384
      %s386 = smul.u32 32, %s22
      %s387 = smul.u32 2, %s22
      %p388 = scmp.lt.s32.totalorder %s387, 3
      %s389 = scalar_select %p388, %s387, 3
      %s390 = smul.addr %s389, 8
      %s391 = scalar_lea.vmem %s11, %s390
      %s392 = smul.u32 2, %s22
      %v394 = vld [vmem:[%s385] sm:$0xff]
      %v395 = vld [vmem:[%s385 + $0x8] sm:$0xff]
      %v396 = vld [vmem:[%s385 + $0x10] sm:$0xff]
      %v397 = vld [vmem:[%s385 + $0x18] sm:$0xff]
      %v398 = vld [vmem:[%s385 + $0x20] sm:$0xff]
      %v399 = vld [vmem:[%s385 + $0x28] sm:$0xff]
      %v400 = vld [vmem:[%s385 + $0x30] sm:$0xff]
      %v401 = vld [vmem:[%s385 + $0x38] sm:$0xff]
      %v402 = vld [vmem:[%s385 + $0x40] sm:$0xff]
      %v403 = vld [vmem:[%s385 + $0x48] sm:$0xff]
      %v404 = vld [vmem:[%s385 + $0x50] sm:$0xff]
      %v405 = vld [vmem:[%s385 + $0x58] sm:$0xff]
      %v406 = vld [vmem:[%s385 + $0x60] sm:$0xff]
      %v407 = vld [vmem:[%s385 + $0x68] sm:$0xff]
      %v408 = vld [vmem:[%s385 + $0x70] sm:$0xff]
      %v409 = vld [vmem:[%s385 + $0x78] sm:$0xff]
      %v410 = vld [vmem:[%s385 + $0x80] sm:$0xff]
      %v411 = vld [vmem:[%s385 + $0x88] sm:$0xff]
      %v412 = vld [vmem:[%s385 + $0x90] sm:$0xff]
      %v413 = vld [vmem:[%s385 + $0x98] sm:$0xff]
      %v414 = vld [vmem:[%s385 + $0xa0] sm:$0xff]
      %v415 = vld [vmem:[%s385 + $0xa8] sm:$0xff]
      %v416 = vld [vmem:[%s385 + $0xb0] sm:$0xff]
      %v417 = vld [vmem:[%s385 + $0xb8] sm:$0xff]
      %v418 = vld [vmem:[%s385 + $0xc0] sm:$0xff]
      %v419 = vld [vmem:[%s385 + $0xc8] sm:$0xff]
      %v420 = vld [vmem:[%s385 + $0xd0] sm:$0xff]
      %v421 = vld [vmem:[%s385 + $0xd8] sm:$0xff]
      %v422 = vld [vmem:[%s385 + $0xe0] sm:$0xff]
      %v423 = vld [vmem:[%s385 + $0xe8] sm:$0xff]
      %v424 = vld [vmem:[%s385 + $0xf0] sm:$0xff]
      %v425 = vld [vmem:[%s385 + $0xf8] sm:$0xff]
      %v426 = vld [vmem:[%s1] sm:$0xff]
      %v427 = vld [vmem:[%s1 + $0x8] sm:$0xff]
      %v428 = vld [vmem:[%s1 + $0x10] sm:$0xff]
      %v429 = vld [vmem:[%s1 + $0x18] sm:$0xff]
      %v430 = vld [vmem:[%s1 + $0x20] sm:$0xff]
      %v431 = vld [vmem:[%s1 + $0x28] sm:$0xff]
      %v432 = vld [vmem:[%s1 + $0x30] sm:$0xff]
      %v433 = vld [vmem:[%s1 + $0x38] sm:$0xff]
      %v434 = vld [vmem:[%s1 + $0x40] sm:$0xff]
      %v435 = vld [vmem:[%s1 + $0x48] sm:$0xff]
      %v436 = vld [vmem:[%s1 + $0x50] sm:$0xff]
      %v437 = vld [vmem:[%s1 + $0x58] sm:$0xff]
      %v438 = vld [vmem:[%s1 + $0x60] sm:$0xff]
      %v439 = vld [vmem:[%s1 + $0x68] sm:$0xff]
      %v440 = vld [vmem:[%s1 + $0x70] sm:$0xff]
      %v441 = vld [vmem:[%s1 + $0x78] sm:$0xff]
      %v442 = vld [vmem:[%s1 + $0x80] sm:$0xff]
      %v443 = vld [vmem:[%s1 + $0x88] sm:$0xff]
      %v444 = vld [vmem:[%s1 + $0x90] sm:$0xff]
      %v445 = vld [vmem:[%s1 + $0x98] sm:$0xff]
      %v446 = vld [vmem:[%s1 + $0xa0] sm:$0xff]
      %v447 = vld [vmem:[%s1 + $0xa8] sm:$0xff]
      %v448 = vld [vmem:[%s1 + $0xb0] sm:$0xff]
      %v449 = vld [vmem:[%s1 + $0xb8] sm:$0xff]
      %v450 = vld [vmem:[%s1 + $0xc0] sm:$0xff]
      %v451 = vld [vmem:[%s1 + $0xc8] sm:$0xff]
      %v452 = vld [vmem:[%s1 + $0xd0] sm:$0xff]
      %v453 = vld [vmem:[%s1 + $0xd8] sm:$0xff]
      %v454 = vld [vmem:[%s1 + $0xe0] sm:$0xff]
      %v455 = vld [vmem:[%s1 + $0xe8] sm:$0xff]
      %v456 = vld [vmem:[%s1 + $0xf0] sm:$0xff]
      %v457 = vld [vmem:[%s1 + $0xf8] sm:$0xff]
      %v490 = vunpack.c.l.b16 %v394
      %v491 = vunpack.c.h.b16 %v394
      %v492 = vunpack.c.l.b16 %v395
      %v493 = vunpack.c.h.b16 %v395
      %v494 = vunpack.c.l.b16 %v396
      %v495 = vunpack.c.h.b16 %v396
      %v496 = vunpack.c.l.b16 %v397
      %v497 = vunpack.c.h.b16 %v397
      %v498 = vunpack.c.l.b16 %v398
      %v499 = vunpack.c.h.b16 %v398
      %v500 = vunpack.c.l.b16 %v399
      %v501 = vunpack.c.h.b16 %v399
      %v502 = vunpack.c.l.b16 %v400
      %v503 = vunpack.c.h.b16 %v400
      %v504 = vunpack.c.l.b16 %v401
      %v505 = vunpack.c.h.b16 %v401
      %v506 = vunpack.c.l.b16 %v402
      %v507 = vunpack.c.h.b16 %v402
      %v508 = vunpack.c.l.b16 %v403
      %v509 = vunpack.c.h.b16 %v403
      %v510 = vunpack.c.l.b16 %v404
      %v511 = vunpack.c.h.b16 %v404
      %v512 = vunpack.c.l.b16 %v405
      %v513 = vunpack.c.h.b16 %v405
      %v514 = vunpack.c.l.b16 %v406
      %v515 = vunpack.c.h.b16 %v406
      %v516 = vunpack.c.l.b16 %v407
      %v517 = vunpack.c.h.b16 %v407
      %v518 = vunpack.c.l.b16 %v408
      %v519 = vunpack.c.h.b16 %v408
      %v520 = vunpack.c.l.b16 %v409
      %v521 = vunpack.c.h.b16 %v409
      %v522 = vunpack.c.l.b16 %v410
      %v523 = vunpack.c.h.b16 %v410
      %v524 = vunpack.c.l.b16 %v411
      %v525 = vunpack.c.h.b16 %v411
      %v526 = vunpack.c.l.b16 %v412
      %v527 = vunpack.c.h.b16 %v412
      %v528 = vunpack.c.l.b16 %v413
      %v529 = vunpack.c.h.b16 %v413
      %v530 = vunpack.c.l.b16 %v414
      %v531 = vunpack.c.h.b16 %v414
      %v532 = vunpack.c.l.b16 %v415
      %v533 = vunpack.c.h.b16 %v415
      %v534 = vunpack.c.l.b16 %v416
      %v535 = vunpack.c.h.b16 %v416
      %v536 = vunpack.c.l.b16 %v417
      %v537 = vunpack.c.h.b16 %v417
      %v538 = vunpack.c.l.b16 %v418
      %v539 = vunpack.c.h.b16 %v418
      %v540 = vunpack.c.l.b16 %v419
      %v541 = vunpack.c.h.b16 %v419
      %v542 = vunpack.c.l.b16 %v420
      %v543 = vunpack.c.h.b16 %v420
      %v544 = vunpack.c.l.b16 %v421
      %v545 = vunpack.c.h.b16 %v421
      %v546 = vunpack.c.l.b16 %v422
      %v547 = vunpack.c.h.b16 %v422
      %v548 = vunpack.c.l.b16 %v423
      %v549 = vunpack.c.h.b16 %v423
      %v550 = vunpack.c.l.b16 %v424
      %v551 = vunpack.c.h.b16 %v424
      %v552 = vunpack.c.l.b16 %v425
      %v553 = vunpack.c.h.b16 %v425
      %v554 = vpack.c.b16 %v492, %v490
      %v555 = vpack.c.b16 %v493, %v491
      %v556 = vpack.c.b16 %v496, %v494
      %v557 = vpack.c.b16 %v497, %v495
      %v558 = vpack.c.b16 %v500, %v498
      %v559 = vpack.c.b16 %v501, %v499
      %v560 = vpack.c.b16 %v504, %v502
      %v561 = vpack.c.b16 %v505, %v503
      %v562 = vpack.c.b16 %v508, %v506
      %v563 = vpack.c.b16 %v509, %v507
      %v564 = vpack.c.b16 %v512, %v510
      %v565 = vpack.c.b16 %v513, %v511
      %v566 = vpack.c.b16 %v516, %v514
      %v567 = vpack.c.b16 %v517, %v515
      %v568 = vpack.c.b16 %v520, %v518
      %v569 = vpack.c.b16 %v521, %v519
      %v570 = vpack.c.b16 %v524, %v522
      %v571 = vpack.c.b16 %v525, %v523
      %v572 = vpack.c.b16 %v528, %v526
      %v573 = vpack.c.b16 %v529, %v527
      %v574 = vpack.c.b16 %v532, %v530
      %v575 = vpack.c.b16 %v533, %v531
      %v576 = vpack.c.b16 %v536, %v534
      %v577 = vpack.c.b16 %v537, %v535
      %v578 = vpack.c.b16 %v540, %v538
      %v579 = vpack.c.b16 %v541, %v539
      %v580 = vpack.c.b16 %v544, %v542
      %v581 = vpack.c.b16 %v545, %v543
      %v582 = vpack.c.b16 %v548, %v546
      %v583 = vpack.c.b16 %v549, %v547
      %v584 = vpack.c.b16 %v552, %v550
      %v585 = vpack.c.b16 %v553, %v551
      %v650 = vunpack.c.l.b16 %v426
      %v651 = vunpack.c.h.b16 %v426
      %v652 = vunpack.c.l.b16 %v427
      %v653 = vunpack.c.h.b16 %v427
      %v654 = vunpack.c.l.b16 %v428
      %v655 = vunpack.c.h.b16 %v428
      %v656 = vunpack.c.l.b16 %v429
      %v657 = vunpack.c.h.b16 %v429
      %v658 = vunpack.c.l.b16 %v430
      %v659 = vunpack.c.h.b16 %v430
      %v660 = vunpack.c.l.b16 %v431
      %v661 = vunpack.c.h.b16 %v431
      %v662 = vunpack.c.l.b16 %v432
      %v663 = vunpack.c.h.b16 %v432
      %v664 = vunpack.c.l.b16 %v433
      %v665 = vunpack.c.h.b16 %v433
      %v666 = vunpack.c.l.b16 %v434
      %v667 = vunpack.c.h.b16 %v434
      %v668 = vunpack.c.l.b16 %v435
      %v669 = vunpack.c.h.b16 %v435
      %v670 = vunpack.c.l.b16 %v436
      %v671 = vunpack.c.h.b16 %v436
      %v672 = vunpack.c.l.b16 %v437
      %v673 = vunpack.c.h.b16 %v437
      %v674 = vunpack.c.l.b16 %v438
      %v675 = vunpack.c.h.b16 %v438
      %v676 = vunpack.c.l.b16 %v439
      %v677 = vunpack.c.h.b16 %v439
      %v678 = vunpack.c.l.b16 %v440
      %v679 = vunpack.c.h.b16 %v440
      %v680 = vunpack.c.l.b16 %v441
      %v681 = vunpack.c.h.b16 %v441
      %v682 = vunpack.c.l.b16 %v442
      %v683 = vunpack.c.h.b16 %v442
      %v684 = vunpack.c.l.b16 %v443
      %v685 = vunpack.c.h.b16 %v443
      %v686 = vunpack.c.l.b16 %v444
      %v687 = vunpack.c.h.b16 %v444
      %v688 = vunpack.c.l.b16 %v445
      %v689 = vunpack.c.h.b16 %v445
      %v690 = vunpack.c.l.b16 %v446
      %v691 = vunpack.c.h.b16 %v446
      %v692 = vunpack.c.l.b16 %v447
      %v693 = vunpack.c.h.b16 %v447
      %v694 = vunpack.c.l.b16 %v448
      %v695 = vunpack.c.h.b16 %v448
      %v696 = vunpack.c.l.b16 %v449
      %v697 = vunpack.c.h.b16 %v449
      %v698 = vunpack.c.l.b16 %v450
      %v699 = vunpack.c.h.b16 %v450
      %v700 = vunpack.c.l.b16 %v451
      %v701 = vunpack.c.h.b16 %v451
      %v702 = vunpack.c.l.b16 %v452
      %v703 = vunpack.c.h.b16 %v452
      %v704 = vunpack.c.l.b16 %v453
      %v705 = vunpack.c.h.b16 %v453
      %v706 = vunpack.c.l.b16 %v454
      %v707 = vunpack.c.h.b16 %v454
      %v708 = vunpack.c.l.b16 %v455
      %v709 = vunpack.c.h.b16 %v455
      %v710 = vunpack.c.l.b16 %v456
      %v711 = vunpack.c.h.b16 %v456
      %v712 = vunpack.c.l.b16 %v457
      %v713 = vunpack.c.h.b16 %v457
      %v714 = vpack.c.b16 %v652, %v650
      %v715 = vpack.c.b16 %v653, %v651
      %v716 = vpack.c.b16 %v656, %v654
      %v717 = vpack.c.b16 %v657, %v655
      %v718 = vpack.c.b16 %v660, %v658
      %v719 = vpack.c.b16 %v661, %v659
      %v720 = vpack.c.b16 %v664, %v662
      %v721 = vpack.c.b16 %v665, %v663
      %v722 = vpack.c.b16 %v668, %v666
      %v723 = vpack.c.b16 %v669, %v667
      %v724 = vpack.c.b16 %v672, %v670
      %v725 = vpack.c.b16 %v673, %v671
      %v726 = vpack.c.b16 %v676, %v674
      %v727 = vpack.c.b16 %v677, %v675
      %v728 = vpack.c.b16 %v680, %v678
      %v729 = vpack.c.b16 %v681, %v679
      %v730 = vpack.c.b16 %v684, %v682
      %v731 = vpack.c.b16 %v685, %v683
      %v732 = vpack.c.b16 %v688, %v686
      %v733 = vpack.c.b16 %v689, %v687
      %v734 = vpack.c.b16 %v692, %v690
      %v735 = vpack.c.b16 %v693, %v691
      %v736 = vpack.c.b16 %v696, %v694
      %v737 = vpack.c.b16 %v697, %v695
      %v738 = vpack.c.b16 %v700, %v698
      %v739 = vpack.c.b16 %v701, %v699
      %v740 = vpack.c.b16 %v704, %v702
      %v741 = vpack.c.b16 %v705, %v703
      %v742 = vpack.c.b16 %v708, %v706
      %v743 = vpack.c.b16 %v709, %v707
      %v744 = vpack.c.b16 %v712, %v710
      %v745 = vpack.c.b16 %v713, %v711
      %778 = vmatprep.subr.bf16.mxu0 %v715
      %779 = vmatpush1.bf16.msra.mxu0 %v714
      %780 = vmatprep.subr.bf16.mxu0 %v717
      %781 = vmatpush1.bf16.msra.mxu0 %v716
      %782 = vmatprep.subr.bf16.mxu0 %v719
      %783 = vmatpush1.bf16.msra.mxu0 %v718
      %784 = vmatprep.subr.bf16.mxu0 %v721
      %785 = vmatpush1.bf16.msra.mxu0 %v720
      %786 = vmatprep.subr.bf16.mxu0 %v723
      %787 = vmatpush1.bf16.msra.mxu0 %v722
      %788 = vmatprep.subr.bf16.mxu0 %v725
      %789 = vmatpush1.bf16.msra.mxu0 %v724
      %790 = vmatprep.subr.bf16.mxu0 %v727
      %791 = vmatpush1.bf16.msra.mxu0 %v726
      %792 = vmatprep.subr.bf16.mxu0 %v729
      %793 = vmatpush1.bf16.msra.mxu0 %v728
      %794 = vmatprep.subr.bf16.mxu0 %v731
      %795 = vmatpush1.bf16.msra.mxu0 %v730
      %796 = vmatprep.subr.bf16.mxu0 %v733
      %797 = vmatpush1.bf16.msra.mxu0 %v732
      %798 = vmatprep.subr.bf16.mxu0 %v735
      %799 = vmatpush1.bf16.msra.mxu0 %v734
      %800 = vmatprep.subr.bf16.mxu0 %v737
      %801 = vmatpush1.bf16.msra.mxu0 %v736
      %802 = vmatprep.subr.bf16.mxu0 %v739
      %803 = vmatpush1.bf16.msra.mxu0 %v738
      %804 = vmatprep.subr.bf16.mxu0 %v741
      %805 = vmatpush1.bf16.msra.mxu0 %v740
      %806 = vmatprep.subr.bf16.mxu0 %v743
      %807 = vmatpush1.bf16.msra.mxu0 %v742
      %808 = vmatprep.subr.bf16.mxu0 %v745
      %809 = vmatpush1.bf16.msra.mxu0 %v744
      %810 = vmatprep.mubr.bf16.mxu0 %v555
      %811 = vmatmul.mubr.bf16.gmra.mrb[0].mxu0 %v554
      %v812 = vpop.f32.mrb[0].mxu0
      %v813 = vadd.f32 0.0, %v812
      %v814 = vpop.f32.mrb[0].mxu0
      %v815 = vadd.f32 0.0, %v814
      %v816 = vpop.f32.mrb[0].mxu0
      %v817 = vadd.f32 0.0, %v816
      %v818 = vpop.f32.mrb[0].mxu0
      %v819 = vadd.f32 0.0, %v818
      %820 = vmatprep.mubr.bf16.mxu0 %v557
      %821 = vmatmul.mubr.bf16.gmra.mrb[0].mxu0 %v556
      %v822 = vpop.f32.mrb[0].mxu0
      %v823 = vadd.f32 0.0, %v822
      %v824 = vpop.f32.mrb[0].mxu0
      %v825 = vadd.f32 0.0, %v824
      %v826 = vpop.f32.mrb[0].mxu0
      %v827 = vadd.f32 0.0, %v826
      %v828 = vpop.f32.mrb[0].mxu0
      %v829 = vadd.f32 0.0, %v828
      %830 = vmatprep.mubr.bf16.mxu0 %v559
      %831 = vmatmul.mubr.bf16.gmra.mrb[0].mxu0 %v558
      %v832 = vpop.f32.mrb[0].mxu0
      %v833 = vadd.f32 0.0, %v832
      %v834 = vpop.f32.mrb[0].mxu0
      %v835 = vadd.f32 0.0, %v834
      %v836 = vpop.f32.mrb[0].mxu0
      %v837 = vadd.f32 0.0, %v836
      %v838 = vpop.f32.mrb[0].mxu0
      %v839 = vadd.f32 0.0, %v838
      %840 = vmatprep.mubr.bf16.mxu0 %v561
      %841 = vmatmul.mubr.bf16.gmra.mrb[0].mxu0 %v560
      %v842 = vpop.f32.mrb[0].mxu0
      %v843 = vadd.f32 0.0, %v842
      %v844 = vpop.f32.mrb[0].mxu0
      %v845 = vadd.f32 0.0, %v844
      %v846 = vpop.f32.mrb[0].mxu0
      %v847 = vadd.f32 0.0, %v846
      %v848 = vpop.f32.mrb[0].mxu0
      %v849 = vadd.f32 0.0, %v848
      %850 = vmatprep.mubr.bf16.mxu0 %v563
      %851 = vmatmul.mubr.bf16.gmra.mrb[0].mxu0 %v562
      %v852 = vpop.f32.mrb[0].mxu0
      %v853 = vadd.f32 0.0, %v852
      %v854 = vpop.f32.mrb[0].mxu0
      %v855 = vadd.f32 0.0, %v854
      %v856 = vpop.f32.mrb[0].mxu0
      %v857 = vadd.f32 0.0, %v856
      %v858 = vpop.f32.mrb[0].mxu0
      %v859 = vadd.f32 0.0, %v858
      %860 = vmatprep.mubr.bf16.mxu0 %v565
      %861 = vmatmul.mubr.bf16.gmra.mrb[0].mxu0 %v564
      %v862 = vpop.f32.mrb[0].mxu0
      %v863 = vadd.f32 0.0, %v862
      %v864 = vpop.f32.mrb[0].mxu0
      %v865 = vadd.f32 0.0, %v864
      %v866 = vpop.f32.mrb[0].mxu0
      %v867 = vadd.f32 0.0, %v866
      %v868 = vpop.f32.mrb[0].mxu0
      %v869 = vadd.f32 0.0, %v868
      %870 = vmatprep.mubr.bf16.mxu0 %v567
      %871 = vmatmul.mubr.bf16.gmra.mrb[0].mxu0 %v566
      %v872 = vpop.f32.mrb[0].mxu0
      %v873 = vadd.f32 0.0, %v872
      %v874 = vpop.f32.mrb[0].mxu0
      %v875 = vadd.f32 0.0, %v874
      %v876 = vpop.f32.mrb[0].mxu0
      %v877 = vadd.f32 0.0, %v876
      %v878 = vpop.f32.mrb[0].mxu0
      %v879 = vadd.f32 0.0, %v878
      %880 = vmatprep.mubr.bf16.mxu0 %v569
      %881 = vmatmul.mubr.bf16.gmra.mrb[0].mxu0 %v568
      %v882 = vpop.f32.mrb[0].mxu0
      %v883 = vadd.f32 0.0, %v882
      %v884 = vpop.f32.mrb[0].mxu0
      %v885 = vadd.f32 0.0, %v884
      %v886 = vpop.f32.mrb[0].mxu0
      %v887 = vadd.f32 0.0, %v886
      %v888 = vpop.f32.mrb[0].mxu0
      %v889 = vadd.f32 0.0, %v888
      %890 = vmatprep.mubr.bf16.mxu0 %v571
      %891 = vmatmul.mubr.bf16.gmra.mrb[0].mxu0 %v570
      %v892 = vpop.f32.mrb[0].mxu0
      %v893 = vadd.f32 0.0, %v892
      %v894 = vpop.f32.mrb[0].mxu0
      %v895 = vadd.f32 0.0, %v894
      %v896 = vpop.f32.mrb[0].mxu0
      %v897 = vadd.f32 0.0, %v896
      %v898 = vpop.f32.mrb[0].mxu0
      %v899 = vadd.f32 0.0, %v898
      %900 = vmatprep.mubr.bf16.mxu0 %v573
      %901 = vmatmul.mubr.bf16.gmra.mrb[0].mxu0 %v572
      %v902 = vpop.f32.mrb[0].mxu0
      %v903 = vadd.f32 0.0, %v902
      %v904 = vpop.f32.mrb[0].mxu0
      %v905 = vadd.f32 0.0, %v904
      %v906 = vpop.f32.mrb[0].mxu0
      %v907 = vadd.f32 0.0, %v906
      %v908 = vpop.f32.mrb[0].mxu0
      %v909 = vadd.f32 0.0, %v908
      %910 = vmatprep.mubr.bf16.mxu0 %v575
      %911 = vmatmul.mubr.bf16.gmra.mrb[0].mxu0 %v574
      %v912 = vpop.f32.mrb[0].mxu0
      %v913 = vadd.f32 0.0, %v912
      %v914 = vpop.f32.mrb[0].mxu0
      %v915 = vadd.f32 0.0, %v914
      %v916 = vpop.f32.mrb[0].mxu0
      %v917 = vadd.f32 0.0, %v916
      %v918 = vpop.f32.mrb[0].mxu0
      %v919 = vadd.f32 0.0, %v918
      %920 = vmatprep.mubr.bf16.mxu0 %v577
      %921 = vmatmul.mubr.bf16.gmra.mrb[0].mxu0 %v576
      %v922 = vpop.f32.mrb[0].mxu0
      %v923 = vadd.f32 0.0, %v922
      %v924 = vpop.f32.mrb[0].mxu0
      %v925 = vadd.f32 0.0, %v924
      %v926 = vpop.f32.mrb[0].mxu0
      %v927 = vadd.f32 0.0, %v926
      %v928 = vpop.f32.mrb[0].mxu0
      %v929 = vadd.f32 0.0, %v928
      %930 = vmatprep.mubr.bf16.mxu0 %v579
      %931 = vmatmul.mubr.bf16.gmra.mrb[0].mxu0 %v578
      %v932 = vpop.f32.mrb[0].mxu0
      %v933 = vadd.f32 0.0, %v932
      %v934 = vpop.f32.mrb[0].mxu0
      %v935 = vadd.f32 0.0, %v934
      %v936 = vpop.f32.mrb[0].mxu0
      %v937 = vadd.f32 0.0, %v936
      %v938 = vpop.f32.mrb[0].mxu0
      %v939 = vadd.f32 0.0, %v938
      %940 = vmatprep.mubr.bf16.mxu0 %v581
      %941 = vmatmul.mubr.bf16.gmra.mrb[0].mxu0 %v580
      %v942 = vpop.f32.mrb[0].mxu0
      %v943 = vadd.f32 0.0, %v942
      %v944 = vpop.f32.mrb[0].mxu0
      %v945 = vadd.f32 0.0, %v944
      %v946 = vpop.f32.mrb[0].mxu0
      %v947 = vadd.f32 0.0, %v946
      %v948 = vpop.f32.mrb[0].mxu0
      %v949 = vadd.f32 0.0, %v948
      %950 = vmatprep.mubr.bf16.mxu0 %v583
      %951 = vmatmul.mubr.bf16.gmra.mrb[0].mxu0 %v582
      %v952 = vpop.f32.mrb[0].mxu0
      %v953 = vadd.f32 0.0, %v952
      %v954 = vpop.f32.mrb[0].mxu0
      %v955 = vadd.f32 0.0, %v954
      %v956 = vpop.f32.mrb[0].mxu0
      %v957 = vadd.f32 0.0, %v956
      %v958 = vpop.f32.mrb[0].mxu0
      %v959 = vadd.f32 0.0, %v958
      %960 = vmatprep.mubr.bf16.mxu0 %v585
      %961 = vmatmul.mubr.bf16.gmra.mrb[0].mxu0 %v584
      %v962 = vpop.f32.mrb[0].mxu0
      %v963 = vadd.f32 0.0, %v962
      %v964 = vpop.f32.mrb[0].mxu0
      %v965 = vadd.f32 0.0, %v964
      %v966 = vpop.f32.mrb[0].mxu0
      %v967 = vadd.f32 0.0, %v966
      %v968 = vpop.f32.mrb[0].mxu0
      %v969 = vadd.f32 0.0, %v968
      %970 = vdwg.mxu0
      %s971 = scalar_lea.vmem %s1, 256
      %v972 = vld [vmem:[%s971] sm:$0xff]
      %v973 = vld [vmem:[%s971 + $0x8] sm:$0xff]
      %v974 = vld [vmem:[%s971 + $0x10] sm:$0xff]
      %v975 = vld [vmem:[%s971 + $0x18] sm:$0xff]
      %v976 = vld [vmem:[%s971 + $0x20] sm:$0xff]
      %v977 = vld [vmem:[%s971 + $0x28] sm:$0xff]
      %v978 = vld [vmem:[%s971 + $0x30] sm:$0xff]
      %v979 = vld [vmem:[%s971 + $0x38] sm:$0xff]
      %v980 = vld [vmem:[%s971 + $0x40] sm:$0xff]
      %v981 = vld [vmem:[%s971 + $0x48] sm:$0xff]
      %v982 = vld [vmem:[%s971 + $0x50] sm:$0xff]
      %v983 = vld [vmem:[%s971 + $0x58] sm:$0xff]
      %v984 = vld [vmem:[%s971 + $0x60] sm:$0xff]
      %v985 = vld [vmem:[%s971 + $0x68] sm:$0xff]
      %v986 = vld [vmem:[%s971 + $0x70] sm:$0xff]
      %v987 = vld [vmem:[%s971 + $0x78] sm:$0xff]
      %v988 = vld [vmem:[%s971 + $0x80] sm:$0xff]
      %v989 = vld [vmem:[%s971 + $0x88] sm:$0xff]
      %v990 = vld [vmem:[%s971 + $0x90] sm:$0xff]
      %v991 = vld [vmem:[%s971 + $0x98] sm:$0xff]
      %v992 = vld [vmem:[%s971 + $0xa0] sm:$0xff]
      %v993 = vld [vmem:[%s971 + $0xa8] sm:$0xff]
      %v994 = vld [vmem:[%s971 + $0xb0] sm:$0xff]
      %v995 = vld [vmem:[%s971 + $0xb8] sm:$0xff]
      %v996 = vld [vmem:[%s971 + $0xc0] sm:$0xff]
      %v997 = vld [vmem:[%s971 + $0xc8] sm:$0xff]
      %v998 = vld [vmem:[%s971 + $0xd0] sm:$0xff]
      %v999 = vld [vmem:[%s971 + $0xd8] sm:$0xff]
      %v1000 = vld [vmem:[%s971 + $0xe0] sm:$0xff]
      %v1001 = vld [vmem:[%s971 + $0xe8] sm:$0xff]
      %v1002 = vld [vmem:[%s971 + $0xf0] sm:$0xff]
      %v1003 = vld [vmem:[%s971 + $0xf8] sm:$0xff]
      %v1036 = vunpack.c.l.b16 %v972
      %v1037 = vunpack.c.h.b16 %v972
      %v1038 = vunpack.c.l.b16 %v973
      %v1039 = vunpack.c.h.b16 %v973
      %v1040 = vunpack.c.l.b16 %v974
      %v1041 = vunpack.c.h.b16 %v974
      %v1042 = vunpack.c.l.b16 %v975
      %v1043 = vunpack.c.h.b16 %v975
      %v1044 = vunpack.c.l.b16 %v976
      %v1045 = vunpack.c.h.b16 %v976
      %v1046 = vunpack.c.l.b16 %v977
      %v1047 = vunpack.c.h.b16 %v977
      %v1048 = vunpack.c.l.b16 %v978
      %v1049 = vunpack.c.h.b16 %v978
      %v1050 = vunpack.c.l.b16 %v979
      %v1051 = vunpack.c.h.b16 %v979
      %v1052 = vunpack.c.l.b16 %v980
      %v1053 = vunpack.c.h.b16 %v980
      %v1054 = vunpack.c.l.b16 %v981
      %v1055 = vunpack.c.h.b16 %v981
      %v1056 = vunpack.c.l.b16 %v982
      %v1057 = vunpack.c.h.b16 %v982
      %v1058 = vunpack.c.l.b16 %v983
      %v1059 = vunpack.c.h.b16 %v983
      %v1060 = vunpack.c.l.b16 %v984
      %v1061 = vunpack.c.h.b16 %v984
      %v1062 = vunpack.c.l.b16 %v985
      %v1063 = vunpack.c.h.b16 %v985
      %v1064 = vunpack.c.l.b16 %v986
      %v1065 = vunpack.c.h.b16 %v986
      %v1066 = vunpack.c.l.b16 %v987
      %v1067 = vunpack.c.h.b16 %v987
      %v1068 = vunpack.c.l.b16 %v988
      %v1069 = vunpack.c.h.b16 %v988
      %v1070 = vunpack.c.l.b16 %v989
      %v1071 = vunpack.c.h.b16 %v989
      %v1072 = vunpack.c.l.b16 %v990
      %v1073 = vunpack.c.h.b16 %v990
      %v1074 = vunpack.c.l.b16 %v991
      %v1075 = vunpack.c.h.b16 %v991
      %v1076 = vunpack.c.l.b16 %v992
      %v1077 = vunpack.c.h.b16 %v992
      %v1078 = vunpack.c.l.b16 %v993
      %v1079 = vunpack.c.h.b16 %v993
      %v1080 = vunpack.c.l.b16 %v994
      %v1081 = vunpack.c.h.b16 %v994
      %v1082 = vunpack.c.l.b16 %v995
      %v1083 = vunpack.c.h.b16 %v995
      %v1084 = vunpack.c.l.b16 %v996
      %v1085 = vunpack.c.h.b16 %v996
      %v1086 = vunpack.c.l.b16 %v997
      %v1087 = vunpack.c.h.b16 %v997
      %v1088 = vunpack.c.l.b16 %v998
      %v1089 = vunpack.c.h.b16 %v998
      %v1090 = vunpack.c.l.b16 %v999
      %v1091 = vunpack.c.h.b16 %v999
      %v1092 = vunpack.c.l.b16 %v1000
      %v1093 = vunpack.c.h.b16 %v1000
      %v1094 = vunpack.c.l.b16 %v1001
      %v1095 = vunpack.c.h.b16 %v1001
      %v1096 = vunpack.c.l.b16 %v1002
      %v1097 = vunpack.c.h.b16 %v1002
      %v1098 = vunpack.c.l.b16 %v1003
      %v1099 = vunpack.c.h.b16 %v1003
      %v1100 = vpack.c.b16 %v1038, %v1036
      %v1101 = vpack.c.b16 %v1039, %v1037
      %v1102 = vpack.c.b16 %v1042, %v1040
      %v1103 = vpack.c.b16 %v1043, %v1041
      %v1104 = vpack.c.b16 %v1046, %v1044
      %v1105 = vpack.c.b16 %v1047, %v1045
      %v1106 = vpack.c.b16 %v1050, %v1048
      %v1107 = vpack.c.b16 %v1051, %v1049
      %v1108 = vpack.c.b16 %v1054, %v1052
      %v1109 = vpack.c.b16 %v1055, %v1053
      %v1110 = vpack.c.b16 %v1058, %v1056
      %v1111 = vpack.c.b16 %v1059, %v1057
      %v1112 = vpack.c.b16 %v1062, %v1060
      %v1113 = vpack.c.b16 %v1063, %v1061
      %v1114 = vpack.c.b16 %v1066, %v1064
      %v1115 = vpack.c.b16 %v1067, %v1065
      %v1116 = vpack.c.b16 %v1070, %v1068
      %v1117 = vpack.c.b16 %v1071, %v1069
      %v1118 = vpack.c.b16 %v1074, %v1072
      %v1119 = vpack.c.b16 %v1075, %v1073
      %v1120 = vpack.c.b16 %v1078, %v1076
      %v1121 = vpack.c.b16 %v1079, %v1077
      %v1122 = vpack.c.b16 %v1082, %v1080
      %v1123 = vpack.c.b16 %v1083, %v1081
      %v1124 = vpack.c.b16 %v1086, %v1084
      %v1125 = vpack.c.b16 %v1087, %v1085
      %v1126 = vpack.c.b16 %v1090, %v1088
      %v1127 = vpack.c.b16 %v1091, %v1089
      %v1128 = vpack.c.b16 %v1094, %v1092
      %v1129 = vpack.c.b16 %v1095, %v1093
      %v1130 = vpack.c.b16 %v1098, %v1096
      %v1131 = vpack.c.b16 %v1099, %v1097
      %1164 = vmatprep.subr.bf16.mxu0 %v1101
      %1165 = vmatpush1.bf16.msra.mxu0 %v1100
      %1166 = vmatprep.subr.bf16.mxu0 %v1103
      %1167 = vmatpush1.bf16.msra.mxu0 %v1102
      %1168 = vmatprep.subr.bf16.mxu0 %v1105
      %1169 = vmatpush1.bf16.msra.mxu0 %v1104
      %1170 = vmatprep.subr.bf16.mxu0 %v1107
      %1171 = vmatpush1.bf16.msra.mxu0 %v1106
      %1172 = vmatprep.subr.bf16.mxu0 %v1109
      %1173 = vmatpush1.bf16.msra.mxu0 %v1108
      %1174 = vmatprep.subr.bf16.mxu0 %v1111
      %1175 = vmatpush1.bf16.msra.mxu0 %v1110
      %1176 = vmatprep.subr.bf16.mxu0 %v1113
      %1177 = vmatpush1.bf16.msra.mxu0 %v1112
      %1178 = vmatprep.subr.bf16.mxu0 %v1115
      %1179 = vmatpush1.bf16.msra.mxu0 %v1114
      %1180 = vmatprep.subr.bf16.mxu0 %v1117
      %1181 = vmatpush1.bf16.msra.mxu0 %v1116
      %1182 = vmatprep.subr.bf16.mxu0 %v1119
      %1183 = vmatpush1.bf16.msra.mxu0 %v1118
      %1184 = vmatprep.subr.bf16.mxu0 %v1121
      %1185 = vmatpush1.bf16.msra.mxu0 %v1120
      %1186 = vmatprep.subr.bf16.mxu0 %v1123
      %1187 = vmatpush1.bf16.msra.mxu0 %v1122
      %1188 = vmatprep.subr.bf16.mxu0 %v1125
      %1189 = vmatpush1.bf16.msra.mxu0 %v1124
      %1190 = vmatprep.subr.bf16.mxu0 %v1127
      %1191 = vmatpush1.bf16.msra.mxu0 %v1126
      %1192 = vmatprep.subr.bf16.mxu0 %v1129
      %1193 = vmatpush1.bf16.msra.mxu0 %v1128
      %1194 = vmatprep.subr.bf16.mxu0 %v1131
      %1195 = vmatpush1.bf16.msra.mxu0 %v1130
      %1196 = vmatprep.mubr.bf16.mxu0 %v555
      %1197 = vmatmul.mubr.bf16.gmra.mrb[0].mxu0 %v554
      %v1198 = vpop.f32.mrb[0].mxu0
      %v1199 = vadd.f32 0.0, %v1198
      %v1200 = vpop.f32.mrb[0].mxu0
      %v1201 = vadd.f32 0.0, %v1200
      %v1202 = vpop.f32.mrb[0].mxu0
      %v1203 = vadd.f32 0.0, %v1202
      %v1204 = vpop.f32.mrb[0].mxu0
      %v1205 = vadd.f32 0.0, %v1204
      %1206 = vmatprep.mubr.bf16.mxu0 %v557
      %1207 = vmatmul.mubr.bf16.gmra.mrb[0].mxu0 %v556
      %v1208 = vpop.f32.mrb[0].mxu0
      %v1209 = vadd.f32 0.0, %v1208
      %v1210 = vpop.f32.mrb[0].mxu0
      %v1211 = vadd.f32 0.0, %v1210
      %v1212 = vpop.f32.mrb[0].mxu0
      %v1213 = vadd.f32 0.0, %v1212
      %v1214 = vpop.f32.mrb[0].mxu0
      %v1215 = vadd.f32 0.0, %v1214
      %1216 = vmatprep.mubr.bf16.mxu0 %v559
      %1217 = vmatmul.mubr.bf16.gmra.mrb[0].mxu0 %v558
      %v1218 = vpop.f32.mrb[0].mxu0
      %v1219 = vadd.f32 0.0, %v1218
      %v1220 = vpop.f32.mrb[0].mxu0
      %v1221 = vadd.f32 0.0, %v1220
      %v1222 = vpop.f32.mrb[0].mxu0
      %v1223 = vadd.f32 0.0, %v1222
      %v1224 = vpop.f32.mrb[0].mxu0
      %v1225 = vadd.f32 0.0, %v1224
      %1226 = vmatprep.mubr.bf16.mxu0 %v561
      %1227 = vmatmul.mubr.bf16.gmra.mrb[0].mxu0 %v560
      %v1228 = vpop.f32.mrb[0].mxu0
      %v1229 = vadd.f32 0.0, %v1228
      %v1230 = vpop.f32.mrb[0].mxu0
      %v1231 = vadd.f32 0.0, %v1230
      %v1232 = vpop.f32.mrb[0].mxu0
      %v1233 = vadd.f32 0.0, %v1232
      %v1234 = vpop.f32.mrb[0].mxu0
      %v1235 = vadd.f32 0.0, %v1234
      %1236 = vmatprep.mubr.bf16.mxu0 %v563
      %1237 = vmatmul.mubr.bf16.gmra.mrb[0].mxu0 %v562
      %v1238 = vpop.f32.mrb[0].mxu0
      %v1239 = vadd.f32 0.0, %v1238
      %v1240 = vpop.f32.mrb[0].mxu0
      %v1241 = vadd.f32 0.0, %v1240
      %v1242 = vpop.f32.mrb[0].mxu0
      %v1243 = vadd.f32 0.0, %v1242
      %v1244 = vpop.f32.mrb[0].mxu0
      %v1245 = vadd.f32 0.0, %v1244
      %1246 = vmatprep.mubr.bf16.mxu0 %v565
      %1247 = vmatmul.mubr.bf16.gmra.mrb[0].mxu0 %v564
      %v1248 = vpop.f32.mrb[0].mxu0
      %v1249 = vadd.f32 0.0, %v1248
      %v1250 = vpop.f32.mrb[0].mxu0
      %v1251 = vadd.f32 0.0, %v1250
      %v1252 = vpop.f32.mrb[0].mxu0
      %v1253 = vadd.f32 0.0, %v1252
      %v1254 = vpop.f32.mrb[0].mxu0
      %v1255 = vadd.f32 0.0, %v1254
      %1256 = vmatprep.mubr.bf16.mxu0 %v567
      %1257 = vmatmul.mubr.bf16.gmra.mrb[0].mxu0 %v566
      %v1258 = vpop.f32.mrb[0].mxu0
      %v1259 = vadd.f32 0.0, %v1258
      %v1260 = vpop.f32.mrb[0].mxu0
      %v1261 = vadd.f32 0.0, %v1260
      %v1262 = vpop.f32.mrb[0].mxu0
      %v1263 = vadd.f32 0.0, %v1262
      %v1264 = vpop.f32.mrb[0].mxu0
      %v1265 = vadd.f32 0.0, %v1264
      %1266 = vmatprep.mubr.bf16.mxu0 %v569
      %1267 = vmatmul.mubr.bf16.gmra.mrb[0].mxu0 %v568
      %v1268 = vpop.f32.mrb[0].mxu0
      %v1269 = vadd.f32 0.0, %v1268
      %v1270 = vpop.f32.mrb[0].mxu0
      %v1271 = vadd.f32 0.0, %v1270
      %v1272 = vpop.f32.mrb[0].mxu0
      %v1273 = vadd.f32 0.0, %v1272
      %v1274 = vpop.f32.mrb[0].mxu0
      %v1275 = vadd.f32 0.0, %v1274
      %1276 = vmatprep.mubr.bf16.mxu0 %v571
      %1277 = vmatmul.mubr.bf16.gmra.mrb[0].mxu0 %v570
      %v1278 = vpop.f32.mrb[0].mxu0
      %v1279 = vadd.f32 0.0, %v1278
      %v1280 = vpop.f32.mrb[0].mxu0
      %v1281 = vadd.f32 0.0, %v1280
      %v1282 = vpop.f32.mrb[0].mxu0
      %v1283 = vadd.f32 0.0, %v1282
      %v1284 = vpop.f32.mrb[0].mxu0
      %v1285 = vadd.f32 0.0, %v1284
      %1286 = vmatprep.mubr.bf16.mxu0 %v573
      %1287 = vmatmul.mubr.bf16.gmra.mrb[0].mxu0 %v572
      %v1288 = vpop.f32.mrb[0].mxu0
      %v1289 = vadd.f32 0.0, %v1288
      %v1290 = vpop.f32.mrb[0].mxu0
      %v1291 = vadd.f32 0.0, %v1290
      %v1292 = vpop.f32.mrb[0].mxu0
      %v1293 = vadd.f32 0.0, %v1292
      %v1294 = vpop.f32.mrb[0].mxu0
      %v1295 = vadd.f32 0.0, %v1294
      %1296 = vmatprep.mubr.bf16.mxu0 %v575
      %1297 = vmatmul.mubr.bf16.gmra.mrb[0].mxu0 %v574
      %v1298 = vpop.f32.mrb[0].mxu0
      %v1299 = vadd.f32 0.0, %v1298
      %v1300 = vpop.f32.mrb[0].mxu0
      %v1301 = vadd.f32 0.0, %v1300
      %v1302 = vpop.f32.mrb[0].mxu0
      %v1303 = vadd.f32 0.0, %v1302
      %v1304 = vpop.f32.mrb[0].mxu0
      %v1305 = vadd.f32 0.0, %v1304
      %1306 = vmatprep.mubr.bf16.mxu0 %v577
      %1307 = vmatmul.mubr.bf16.gmra.mrb[0].mxu0 %v576
      %v1308 = vpop.f32.mrb[0].mxu0
      %v1309 = vadd.f32 0.0, %v1308
      %v1310 = vpop.f32.mrb[0].mxu0
      %v1311 = vadd.f32 0.0, %v1310
      %v1312 = vpop.f32.mrb[0].mxu0
      %v1313 = vadd.f32 0.0, %v1312
      %v1314 = vpop.f32.mrb[0].mxu0
      %v1315 = vadd.f32 0.0, %v1314
      %1316 = vmatprep.mubr.bf16.mxu0 %v579
      %1317 = vmatmul.mubr.bf16.gmra.mrb[0].mxu0 %v578
      %v1318 = vpop.f32.mrb[0].mxu0
      %v1319 = vadd.f32 0.0, %v1318
      %v1320 = vpop.f32.mrb[0].mxu0
      %v1321 = vadd.f32 0.0, %v1320
      %v1322 = vpop.f32.mrb[0].mxu0
      %v1323 = vadd.f32 0.0, %v1322
      %v1324 = vpop.f32.mrb[0].mxu0
      %v1325 = vadd.f32 0.0, %v1324
      %1326 = vmatprep.mubr.bf16.mxu0 %v581
      %1327 = vmatmul.mubr.bf16.gmra.mrb[0].mxu0 %v580
      %v1328 = vpop.f32.mrb[0].mxu0
      %v1329 = vadd.f32 0.0, %v1328
      %v1330 = vpop.f32.mrb[0].mxu0
      %v1331 = vadd.f32 0.0, %v1330
      %v1332 = vpop.f32.mrb[0].mxu0
      %v1333 = vadd.f32 0.0, %v1332
      %v1334 = vpop.f32.mrb[0].mxu0
      %v1335 = vadd.f32 0.0, %v1334
      %1336 = vmatprep.mubr.bf16.mxu0 %v583
      %1337 = vmatmul.mubr.bf16.gmra.mrb[0].mxu0 %v582
      %v1338 = vpop.f32.mrb[0].mxu0
      %v1339 = vadd.f32 0.0, %v1338
      %v1340 = vpop.f32.mrb[0].mxu0
      %v1341 = vadd.f32 0.0, %v1340
      %v1342 = vpop.f32.mrb[0].mxu0
      %v1343 = vadd.f32 0.0, %v1342
      %v1344 = vpop.f32.mrb[0].mxu0
      %v1345 = vadd.f32 0.0, %v1344
      %1346 = vmatprep.mubr.bf16.mxu0 %v585
      %1347 = vmatmul.mubr.bf16.gmra.mrb[0].mxu0 %v584
      %v1348 = vpop.f32.mrb[0].mxu0
      %v1349 = vadd.f32 0.0, %v1348
      %v1350 = vpop.f32.mrb[0].mxu0
      %v1351 = vadd.f32 0.0, %v1350
      %v1352 = vpop.f32.mrb[0].mxu0
      %v1353 = vadd.f32 0.0, %v1352
      %v1354 = vpop.f32.mrb[0].mxu0
      %v1355 = vadd.f32 0.0, %v1354
      %1356 = vdwg.mxu0
      %v1357 = vmax.f32 %v813, %v1199
      %v1358 = vmax.f32 %v815, %v1201
      %v1359 = vmax.f32 %v817, %v1203
      %v1360 = vmax.f32 %v819, %v1205
      %v1361 = vmax.f32 %v823, %v1209
      %v1362 = vmax.f32 %v825, %v1211
      %v1363 = vmax.f32 %v827, %v1213
      %v1364 = vmax.f32 %v829, %v1215
      %v1365 = vmax.f32 %v833, %v1219
      %v1366 = vmax.f32 %v835, %v1221
      %v1367 = vmax.f32 %v837, %v1223
      %v1368 = vmax.f32 %v839, %v1225
      %v1369 = vmax.f32 %v843, %v1229
      %v1370 = vmax.f32 %v845, %v1231
      %v1371 = vmax.f32 %v847, %v1233
      %v1372 = vmax.f32 %v849, %v1235
      %v1373 = vmax.f32 %v853, %v1239
      %v1374 = vmax.f32 %v855, %v1241
      %v1375 = vmax.f32 %v857, %v1243
      %v1376 = vmax.f32 %v859, %v1245
      %v1377 = vmax.f32 %v863, %v1249
      %v1378 = vmax.f32 %v865, %v1251
      %v1379 = vmax.f32 %v867, %v1253
      %v1380 = vmax.f32 %v869, %v1255
      %v1381 = vmax.f32 %v873, %v1259
      %v1382 = vmax.f32 %v875, %v1261
      %v1383 = vmax.f32 %v877, %v1263
      %v1384 = vmax.f32 %v879, %v1265
      %v1385 = vmax.f32 %v883, %v1269
      %v1386 = vmax.f32 %v885, %v1271
      %v1387 = vmax.f32 %v887, %v1273
      %v1388 = vmax.f32 %v889, %v1275
      %v1389 = vmax.f32 %v893, %v1279
      %v1390 = vmax.f32 %v895, %v1281
      %v1391 = vmax.f32 %v897, %v1283
      %v1392 = vmax.f32 %v899, %v1285
      %v1393 = vmax.f32 %v903, %v1289
      %v1394 = vmax.f32 %v905, %v1291
      %v1395 = vmax.f32 %v907, %v1293
      %v1396 = vmax.f32 %v909, %v1295
      %v1397 = vmax.f32 %v913, %v1299
      %v1398 = vmax.f32 %v915, %v1301
      %v1399 = vmax.f32 %v917, %v1303
      %v1400 = vmax.f32 %v919, %v1305
      %v1401 = vmax.f32 %v923, %v1309
      %v1402 = vmax.f32 %v925, %v1311
      %v1403 = vmax.f32 %v927, %v1313
      %v1404 = vmax.f32 %v929, %v1315
      %v1405 = vmax.f32 %v933, %v1319
      %v1406 = vmax.f32 %v935, %v1321
      %v1407 = vmax.f32 %v937, %v1323
      %v1408 = vmax.f32 %v939, %v1325
      %v1409 = vmax.f32 %v943, %v1329
      %v1410 = vmax.f32 %v945, %v1331
      %v1411 = vmax.f32 %v947, %v1333
      %v1412 = vmax.f32 %v949, %v1335
      %v1413 = vmax.f32 %v953, %v1339
      %v1414 = vmax.f32 %v955, %v1341
      %v1415 = vmax.f32 %v957, %v1343
      %v1416 = vmax.f32 %v959, %v1345
      %v1417 = vmax.f32 %v963, %v1349
      %v1418 = vmax.f32 %v965, %v1351
      %v1419 = vmax.f32 %v967, %v1353
      %v1420 = vmax.f32 %v969, %v1355
      %s1421 = scalar_lea.vmem %s1, 512
      %v1422 = vld [vmem:[%s1421] sm:$0xff]
      %v1423 = vld [vmem:[%s1421 + $0x8] sm:$0xff]
      %v1424 = vld [vmem:[%s1421 + $0x10] sm:$0xff]
      %v1425 = vld [vmem:[%s1421 + $0x18] sm:$0xff]
      %v1426 = vld [vmem:[%s1421 + $0x20] sm:$0xff]
      %v1427 = vld [vmem:[%s1421 + $0x28] sm:$0xff]
      %v1428 = vld [vmem:[%s1421 + $0x30] sm:$0xff]
      %v1429 = vld [vmem:[%s1421 + $0x38] sm:$0xff]
      %v1430 = vld [vmem:[%s1421 + $0x40] sm:$0xff]
      %v1431 = vld [vmem:[%s1421 + $0x48] sm:$0xff]
      %v1432 = vld [vmem:[%s1421 + $0x50] sm:$0xff]
      %v1433 = vld [vmem:[%s1421 + $0x58] sm:$0xff]
      %v1434 = vld [vmem:[%s1421 + $0x60] sm:$0xff]
      %v1435 = vld [vmem:[%s1421 + $0x68] sm:$0xff]
      %v1436 = vld [vmem:[%s1421 + $0x70] sm:$0xff]
      %v1437 = vld [vmem:[%s1421 + $0x78] sm:$0xff]
      %v1438 = vld [vmem:[%s1421 + $0x80] sm:$0xff]
      %v1439 = vld [vmem:[%s1421 + $0x88] sm:$0xff]
      %v1440 = vld [vmem:[%s1421 + $0x90] sm:$0xff]
      %v1441 = vld [vmem:[%s1421 + $0x98] sm:$0xff]
      %v1442 = vld [vmem:[%s1421 + $0xa0] sm:$0xff]
      %v1443 = vld [vmem:[%s1421 + $0xa8] sm:$0xff]
      %v1444 = vld [vmem:[%s1421 + $0xb0] sm:$0xff]
      %v1445 = vld [vmem:[%s1421 + $0xb8] sm:$0xff]
      %v1446 = vld [vmem:[%s1421 + $0xc0] sm:$0xff]
      %v1447 = vld [vmem:[%s1421 + $0xc8] sm:$0xff]
      %v1448 = vld [vmem:[%s1421 + $0xd0] sm:$0xff]
      %v1449 = vld [vmem:[%s1421 + $0xd8] sm:$0xff]
      %v1450 = vld [vmem:[%s1421 + $0xe0] sm:$0xff]
      %v1451 = vld [vmem:[%s1421 + $0xe8] sm:$0xff]
      %v1452 = vld [vmem:[%s1421 + $0xf0] sm:$0xff]
      %v1453 = vld [vmem:[%s1421 + $0xf8] sm:$0xff]
      %v1486 = vunpack.c.l.b16 %v1422
      %v1487 = vunpack.c.h.b16 %v1422
      %v1488 = vunpack.c.l.b16 %v1423
      %v1489 = vunpack.c.h.b16 %v1423
      %v1490 = vunpack.c.l.b16 %v1424
      %v1491 = vunpack.c.h.b16 %v1424
      %v1492 = vunpack.c.l.b16 %v1425
      %v1493 = vunpack.c.h.b16 %v1425
      %v1494 = vunpack.c.l.b16 %v1426
      %v1495 = vunpack.c.h.b16 %v1426
      %v1496 = vunpack.c.l.b16 %v1427
      %v1497 = vunpack.c.h.b16 %v1427
      %v1498 = vunpack.c.l.b16 %v1428
      %v1499 = vunpack.c.h.b16 %v1428
      %v1500 = vunpack.c.l.b16 %v1429
      %v1501 = vunpack.c.h.b16 %v1429
      %v1502 = vunpack.c.l.b16 %v1430
      %v1503 = vunpack.c.h.b16 %v1430
      %v1504 = vunpack.c.l.b16 %v1431
      %v1505 = vunpack.c.h.b16 %v1431
      %v1506 = vunpack.c.l.b16 %v1432
      %v1507 = vunpack.c.h.b16 %v1432
      %v1508 = vunpack.c.l.b16 %v1433
      %v1509 = vunpack.c.h.b16 %v1433
      %v1510 = vunpack.c.l.b16 %v1434
      %v1511 = vunpack.c.h.b16 %v1434
      %v1512 = vunpack.c.l.b16 %v1435
      %v1513 = vunpack.c.h.b16 %v1435
      %v1514 = vunpack.c.l.b16 %v1436
      %v1515 = vunpack.c.h.b16 %v1436
      %v1516 = vunpack.c.l.b16 %v1437
      %v1517 = vunpack.c.h.b16 %v1437
      %v1518 = vunpack.c.l.b16 %v1438
      %v1519 = vunpack.c.h.b16 %v1438
      %v1520 = vunpack.c.l.b16 %v1439
      %v1521 = vunpack.c.h.b16 %v1439
      %v1522 = vunpack.c.l.b16 %v1440
      %v1523 = vunpack.c.h.b16 %v1440
      %v1524 = vunpack.c.l.b16 %v1441
      %v1525 = vunpack.c.h.b16 %v1441
      %v1526 = vunpack.c.l.b16 %v1442
      %v1527 = vunpack.c.h.b16 %v1442
      %v1528 = vunpack.c.l.b16 %v1443
      %v1529 = vunpack.c.h.b16 %v1443
      %v1530 = vunpack.c.l.b16 %v1444
      %v1531 = vunpack.c.h.b16 %v1444
      %v1532 = vunpack.c.l.b16 %v1445
      %v1533 = vunpack.c.h.b16 %v1445
      %v1534 = vunpack.c.l.b16 %v1446
      %v1535 = vunpack.c.h.b16 %v1446
      %v1536 = vunpack.c.l.b16 %v1447
      %v1537 = vunpack.c.h.b16 %v1447
      %v1538 = vunpack.c.l.b16 %v1448
      %v1539 = vunpack.c.h.b16 %v1448
      %v1540 = vunpack.c.l.b16 %v1449
      %v1541 = vunpack.c.h.b16 %v1449
      %v1542 = vunpack.c.l.b16 %v1450
      %v1543 = vunpack.c.h.b16 %v1450
      %v1544 = vunpack.c.l.b16 %v1451
      %v1545 = vunpack.c.h.b16 %v1451
      %v1546 = vunpack.c.l.b16 %v1452
      %v1547 = vunpack.c.h.b16 %v1452
      %v1548 = vunpack.c.l.b16 %v1453
      %v1549 = vunpack.c.h.b16 %v1453
      %v1550 = vpack.c.b16 %v1488, %v1486
      %v1551 = vpack.c.b16 %v1489, %v1487
      %v1552 = vpack.c.b16 %v1492, %v1490
      %v1553 = vpack.c.b16 %v1493, %v1491
      %v1554 = vpack.c.b16 %v1496, %v1494
      %v1555 = vpack.c.b16 %v1497, %v1495
      %v1556 = vpack.c.b16 %v1500, %v1498
      %v1557 = vpack.c.b16 %v1501, %v1499
      %v1558 = vpack.c.b16 %v1504, %v1502
      %v1559 = vpack.c.b16 %v1505, %v1503
      %v1560 = vpack.c.b16 %v1508, %v1506
      %v1561 = vpack.c.b16 %v1509, %v1507
      %v1562 = vpack.c.b16 %v1512, %v1510
      %v1563 = vpack.c.b16 %v1513, %v1511
      %v1564 = vpack.c.b16 %v1516, %v1514
      %v1565 = vpack.c.b16 %v1517, %v1515
      %v1566 = vpack.c.b16 %v1520, %v1518
      %v1567 = vpack.c.b16 %v1521, %v1519
      %v1568 = vpack.c.b16 %v1524, %v1522
      %v1569 = vpack.c.b16 %v1525, %v1523
      %v1570 = vpack.c.b16 %v1528, %v1526
      %v1571 = vpack.c.b16 %v1529, %v1527
      %v1572 = vpack.c.b16 %v1532, %v1530
      %v1573 = vpack.c.b16 %v1533, %v1531
      %v1574 = vpack.c.b16 %v1536, %v1534
      %v1575 = vpack.c.b16 %v1537, %v1535
      %v1576 = vpack.c.b16 %v1540, %v1538
      %v1577 = vpack.c.b16 %v1541, %v1539
      %v1578 = vpack.c.b16 %v1544, %v1542
      %v1579 = vpack.c.b16 %v1545, %v1543
      %v1580 = vpack.c.b16 %v1548, %v1546
      %v1581 = vpack.c.b16 %v1549, %v1547
      %1614 = vmatprep.subr.bf16.mxu0 %v1551
      %1615 = vmatpush1.bf16.msra.mxu0 %v1550
      %1616 = vmatprep.subr.bf16.mxu0 %v1553
      %1617 = vmatpush1.bf16.msra.mxu0 %v1552
      %1618 = vmatprep.subr.bf16.mxu0 %v1555
      %1619 = vmatpush1.bf16.msra.mxu0 %v1554
      %1620 = vmatprep.subr.bf16.mxu0 %v1557
      %1621 = vmatpush1.bf16.msra.mxu0 %v1556
      %1622 = vmatprep.subr.bf16.mxu0 %v1559
      %1623 = vmatpush1.bf16.msra.mxu0 %v1558
      %1624 = vmatprep.subr.bf16.mxu0 %v1561
      %1625 = vmatpush1.bf16.msra.mxu0 %v1560
      %1626 = vmatprep.subr.bf16.mxu0 %v1563
      %1627 = vmatpush1.bf16.msra.mxu0 %v1562
      %1628 = vmatprep.subr.bf16.mxu0 %v1565
      %1629 = vmatpush1.bf16.msra.mxu0 %v1564
      %1630 = vmatprep.subr.bf16.mxu0 %v1567
      %1631 = vmatpush1.bf16.msra.mxu0 %v1566
      %1632 = vmatprep.subr.bf16.mxu0 %v1569
      %1633 = vmatpush1.bf16.msra.mxu0 %v1568
      %1634 = vmatprep.subr.bf16.mxu0 %v1571
      %1635 = vmatpush1.bf16.msra.mxu0 %v1570
      %1636 = vmatprep.subr.bf16.mxu0 %v1573
      %1637 = vmatpush1.bf16.msra.mxu0 %v1572
      %1638 = vmatprep.subr.bf16.mxu0 %v1575
      %1639 = vmatpush1.bf16.msra.mxu0 %v1574
      %1640 = vmatprep.subr.bf16.mxu0 %v1577
      %1641 = vmatpush1.bf16.msra.mxu0 %v1576
      %1642 = vmatprep.subr.bf16.mxu0 %v1579
      %1643 = vmatpush1.bf16.msra.mxu0 %v1578
      %1644 = vmatprep.subr.bf16.mxu0 %v1581
      %1645 = vmatpush1.bf16.msra.mxu0 %v1580
      %1646 = vmatprep.mubr.bf16.mxu0 %v555
      %1647 = vmatmul.mubr.bf16.gmra.mrb[0].mxu0 %v554
      %v1648 = vpop.f32.mrb[0].mxu0
      %v1649 = vadd.f32 0.0, %v1648
      %v1650 = vpop.f32.mrb[0].mxu0
      %v1651 = vadd.f32 0.0, %v1650
      %v1652 = vpop.f32.mrb[0].mxu0
      %v1653 = vadd.f32 0.0, %v1652
      %v1654 = vpop.f32.mrb[0].mxu0
      %v1655 = vadd.f32 0.0, %v1654
      %1656 = vmatprep.mubr.bf16.mxu0 %v557
      %1657 = vmatmul.mubr.bf16.gmra.mrb[0].mxu0 %v556
      %v1658 = vpop.f32.mrb[0].mxu0
      %v1659 = vadd.f32 0.0, %v1658
      %v1660 = vpop.f32.mrb[0].mxu0
      %v1661 = vadd.f32 0.0, %v1660
      %v1662 = vpop.f32.mrb[0].mxu0
      %v1663 = vadd.f32 0.0, %v1662
      %v1664 = vpop.f32.mrb[0].mxu0
      %v1665 = vadd.f32 0.0, %v1664
      %1666 = vmatprep.mubr.bf16.mxu0 %v559
      %1667 = vmatmul.mubr.bf16.gmra.mrb[0].mxu0 %v558
      %v1668 = vpop.f32.mrb[0].mxu0
      %v1669 = vadd.f32 0.0, %v1668
      %v1670 = vpop.f32.mrb[0].mxu0
      %v1671 = vadd.f32 0.0, %v1670
      %v1672 = vpop.f32.mrb[0].mxu0
      %v1673 = vadd.f32 0.0, %v1672
      %v1674 = vpop.f32.mrb[0].mxu0
      %v1675 = vadd.f32 0.0, %v1674
      %1676 = vmatprep.mubr.bf16.mxu0 %v561
      %1677 = vmatmul.mubr.bf16.gmra.mrb[0].mxu0 %v560
      %v1678 = vpop.f32.mrb[0].mxu0
      %v1679 = vadd.f32 0.0, %v1678
      %v1680 = vpop.f32.mrb[0].mxu0
      %v1681 = vadd.f32 0.0, %v1680
      %v1682 = vpop.f32.mrb[0].mxu0
      %v1683 = vadd.f32 0.0, %v1682
      %v1684 = vpop.f32.mrb[0].mxu0
      %v1685 = vadd.f32 0.0, %v1684
      %1686 = vmatprep.mubr.bf16.mxu0 %v563
      %1687 = vmatmul.mubr.bf16.gmra.mrb[0].mxu0 %v562
      %v1688 = vpop.f32.mrb[0].mxu0
      %v1689 = vadd.f32 0.0, %v1688
      %v1690 = vpop.f32.mrb[0].mxu0
      %v1691 = vadd.f32 0.0, %v1690
      %v1692 = vpop.f32.mrb[0].mxu0
      %v1693 = vadd.f32 0.0, %v1692
      %v1694 = vpop.f32.mrb[0].mxu0
      %v1695 = vadd.f32 0.0, %v1694
      %1696 = vmatprep.mubr.bf16.mxu0 %v565
      %1697 = vmatmul.mubr.bf16.gmra.mrb[0].mxu0 %v564
      %v1698 = vpop.f32.mrb[0].mxu0
      %v1699 = vadd.f32 0.0, %v1698
      %v1700 = vpop.f32.mrb[0].mxu0
      %v1701 = vadd.f32 0.0, %v1700
      %v1702 = vpop.f32.mrb[0].mxu0
      %v1703 = vadd.f32 0.0, %v1702
      %v1704 = vpop.f32.mrb[0].mxu0
      %v1705 = vadd.f32 0.0, %v1704
      %1706 = vmatprep.mubr.bf16.mxu0 %v567
      %1707 = vmatmul.mubr.bf16.gmra.mrb[0].mxu0 %v566
      %v1708 = vpop.f32.mrb[0].mxu0
      %v1709 = vadd.f32 0.0, %v1708
      %v1710 = vpop.f32.mrb[0].mxu0
      %v1711 = vadd.f32 0.0, %v1710
      %v1712 = vpop.f32.mrb[0].mxu0
      %v1713 = vadd.f32 0.0, %v1712
      %v1714 = vpop.f32.mrb[0].mxu0
      %v1715 = vadd.f32 0.0, %v1714
      %1716 = vmatprep.mubr.bf16.mxu0 %v569
      %1717 = vmatmul.mubr.bf16.gmra.mrb[0].mxu0 %v568
      %v1718 = vpop.f32.mrb[0].mxu0
      %v1719 = vadd.f32 0.0, %v1718
      %v1720 = vpop.f32.mrb[0].mxu0
      %v1721 = vadd.f32 0.0, %v1720
      %v1722 = vpop.f32.mrb[0].mxu0
      %v1723 = vadd.f32 0.0, %v1722
      %v1724 = vpop.f32.mrb[0].mxu0
      %v1725 = vadd.f32 0.0, %v1724
      %1726 = vmatprep.mubr.bf16.mxu0 %v571
      %1727 = vmatmul.mubr.bf16.gmra.mrb[0].mxu0 %v570
      %v1728 = vpop.f32.mrb[0].mxu0
      %v1729 = vadd.f32 0.0, %v1728
      %v1730 = vpop.f32.mrb[0].mxu0
      %v1731 = vadd.f32 0.0, %v1730
      %v1732 = vpop.f32.mrb[0].mxu0
      %v1733 = vadd.f32 0.0, %v1732
      %v1734 = vpop.f32.mrb[0].mxu0
      %v1735 = vadd.f32 0.0, %v1734
      %1736 = vmatprep.mubr.bf16.mxu0 %v573
      %1737 = vmatmul.mubr.bf16.gmra.mrb[0].mxu0 %v572
      %v1738 = vpop.f32.mrb[0].mxu0
      %v1739 = vadd.f32 0.0, %v1738
      %v1740 = vpop.f32.mrb[0].mxu0
      %v1741 = vadd.f32 0.0, %v1740
      %v1742 = vpop.f32.mrb[0].mxu0
      %v1743 = vadd.f32 0.0, %v1742
      %v1744 = vpop.f32.mrb[0].mxu0
      %v1745 = vadd.f32 0.0, %v1744
      %1746 = vmatprep.mubr.bf16.mxu0 %v575
      %1747 = vmatmul.mubr.bf16.gmra.mrb[0].mxu0 %v574
      %v1748 = vpop.f32.mrb[0].mxu0
      %v1749 = vadd.f32 0.0, %v1748
      %v1750 = vpop.f32.mrb[0].mxu0
      %v1751 = vadd.f32 0.0, %v1750
      %v1752 = vpop.f32.mrb[0].mxu0
      %v1753 = vadd.f32 0.0, %v1752
      %v1754 = vpop.f32.mrb[0].mxu0
      %v1755 = vadd.f32 0.0, %v1754
      %1756 = vmatprep.mubr.bf16.mxu0 %v577
      %1757 = vmatmul.mubr.bf16.gmra.mrb[0].mxu0 %v576
      %v1758 = vpop.f32.mrb[0].mxu0
      %v1759 = vadd.f32 0.0, %v1758
      %v1760 = vpop.f32.mrb[0].mxu0
      %v1761 = vadd.f32 0.0, %v1760
      %v1762 = vpop.f32.mrb[0].mxu0
      %v1763 = vadd.f32 0.0, %v1762
      %v1764 = vpop.f32.mrb[0].mxu0
      %v1765 = vadd.f32 0.0, %v1764
      %1766 = vmatprep.mubr.bf16.mxu0 %v579
      %1767 = vmatmul.mubr.bf16.gmra.mrb[0].mxu0 %v578
      %v1768 = vpop.f32.mrb[0].mxu0
      %v1769 = vadd.f32 0.0, %v1768
      %v1770 = vpop.f32.mrb[0].mxu0
      %v1771 = vadd.f32 0.0, %v1770
      %v1772 = vpop.f32.mrb[0].mxu0
      %v1773 = vadd.f32 0.0, %v1772
      %v1774 = vpop.f32.mrb[0].mxu0
      %v1775 = vadd.f32 0.0, %v1774
      %1776 = vmatprep.mubr.bf16.mxu0 %v581
      %1777 = vmatmul.mubr.bf16.gmra.mrb[0].mxu0 %v580
      %v1778 = vpop.f32.mrb[0].mxu0
      %v1779 = vadd.f32 0.0, %v1778
      %v1780 = vpop.f32.mrb[0].mxu0
      %v1781 = vadd.f32 0.0, %v1780
      %v1782 = vpop.f32.mrb[0].mxu0
      %v1783 = vadd.f32 0.0, %v1782
      %v1784 = vpop.f32.mrb[0].mxu0
      %v1785 = vadd.f32 0.0, %v1784
      %1786 = vmatprep.mubr.bf16.mxu0 %v583
      %1787 = vmatmul.mubr.bf16.gmra.mrb[0].mxu0 %v582
      %v1788 = vpop.f32.mrb[0].mxu0
      %v1789 = vadd.f32 0.0, %v1788
      %v1790 = vpop.f32.mrb[0].mxu0
      %v1791 = vadd.f32 0.0, %v1790
      %v1792 = vpop.f32.mrb[0].mxu0
      %v1793 = vadd.f32 0.0, %v1792
      %v1794 = vpop.f32.mrb[0].mxu0
      %v1795 = vadd.f32 0.0, %v1794
      %1796 = vmatprep.mubr.bf16.mxu0 %v585
      %1797 = vmatmul.mubr.bf16.gmra.mrb[0].mxu0 %v584
      %v1798 = vpop.f32.mrb[0].mxu0
      %v1799 = vadd.f32 0.0, %v1798
      %v1800 = vpop.f32.mrb[0].mxu0
      %v1801 = vadd.f32 0.0, %v1800
      %v1802 = vpop.f32.mrb[0].mxu0
      %v1803 = vadd.f32 0.0, %v1802
      %v1804 = vpop.f32.mrb[0].mxu0
      %v1805 = vadd.f32 0.0, %v1804
      %1806 = vdwg.mxu0
      %v1807 = vmax.f32 %v1357, %v1649
      %v1808 = vmax.f32 %v1358, %v1651
      %v1809 = vmax.f32 %v1359, %v1653
      %v1810 = vmax.f32 %v1360, %v1655
      %v1811 = vmax.f32 %v1361, %v1659
      %v1812 = vmax.f32 %v1362, %v1661
      %v1813 = vmax.f32 %v1363, %v1663
      %v1814 = vmax.f32 %v1364, %v1665
      %v1815 = vmax.f32 %v1365, %v1669
      %v1816 = vmax.f32 %v1366, %v1671
      %v1817 = vmax.f32 %v1367, %v1673
      %v1818 = vmax.f32 %v1368, %v1675
      %v1819 = vmax.f32 %v1369, %v1679
      %v1820 = vmax.f32 %v1370, %v1681
      %v1821 = vmax.f32 %v1371, %v1683
      %v1822 = vmax.f32 %v1372, %v1685
      %v1823 = vmax.f32 %v1373, %v1689
      %v1824 = vmax.f32 %v1374, %v1691
      %v1825 = vmax.f32 %v1375, %v1693
      %v1826 = vmax.f32 %v1376, %v1695
      %v1827 = vmax.f32 %v1377, %v1699
      %v1828 = vmax.f32 %v1378, %v1701
      %v1829 = vmax.f32 %v1379, %v1703
      %v1830 = vmax.f32 %v1380, %v1705
      %v1831 = vmax.f32 %v1381, %v1709
      %v1832 = vmax.f32 %v1382, %v1711
      %v1833 = vmax.f32 %v1383, %v1713
      %v1834 = vmax.f32 %v1384, %v1715
      %v1835 = vmax.f32 %v1385, %v1719
      %v1836 = vmax.f32 %v1386, %v1721
      %v1837 = vmax.f32 %v1387, %v1723
      %v1838 = vmax.f32 %v1388, %v1725
      %v1839 = vmax.f32 %v1389, %v1729
      %v1840 = vmax.f32 %v1390, %v1731
      %v1841 = vmax.f32 %v1391, %v1733
      %v1842 = vmax.f32 %v1392, %v1735
      %v1843 = vmax.f32 %v1393, %v1739
      %v1844 = vmax.f32 %v1394, %v1741
      %v1845 = vmax.f32 %v1395, %v1743
      %v1846 = vmax.f32 %v1396, %v1745
      %v1847 = vmax.f32 %v1397, %v1749
      %v1848 = vmax.f32 %v1398, %v1751
      %v1849 = vmax.f32 %v1399, %v1753
      %v1850 = vmax.f32 %v1400, %v1755
      %v1851 = vmax.f32 %v1401, %v1759
      %v1852 = vmax.f32 %v1402, %v1761
      %v1853 = vmax.f32 %v1403, %v1763
      %v1854 = vmax.f32 %v1404, %v1765
      %v1855 = vmax.f32 %v1405, %v1769
      %v1856 = vmax.f32 %v1406, %v1771
      %v1857 = vmax.f32 %v1407, %v1773
      %v1858 = vmax.f32 %v1408, %v1775
      %v1859 = vmax.f32 %v1409, %v1779
      %v1860 = vmax.f32 %v1410, %v1781
      %v1861 = vmax.f32 %v1411, %v1783
      %v1862 = vmax.f32 %v1412, %v1785
      %v1863 = vmax.f32 %v1413, %v1789
      %v1864 = vmax.f32 %v1414, %v1791
      %v1865 = vmax.f32 %v1415, %v1793
      %v1866 = vmax.f32 %v1416, %v1795
      %v1867 = vmax.f32 %v1417, %v1799
      %v1868 = vmax.f32 %v1418, %v1801
      %v1869 = vmax.f32 %v1419, %v1803
      %v1870 = vmax.f32 %v1420, %v1805
      %s1871 = scalar_lea.vmem %s1, 768
      %v1872 = vld [vmem:[%s1871] sm:$0xff]
      %v1873 = vld [vmem:[%s1871 + $0x8] sm:$0xff]
      %v1874 = vld [vmem:[%s1871 + $0x10] sm:$0xff]
      %v1875 = vld [vmem:[%s1871 + $0x18] sm:$0xff]
      %v1876 = vld [vmem:[%s1871 + $0x20] sm:$0xff]
      %v1877 = vld [vmem:[%s1871 + $0x28] sm:$0xff]
      %v1878 = vld [vmem:[%s1871 + $0x30] sm:$0xff]
      %v1879 = vld [vmem:[%s1871 + $0x38] sm:$0xff]
      %v1880 = vld [vmem:[%s1871 + $0x40] sm:$0xff]
      %v1881 = vld [vmem:[%s1871 + $0x48] sm:$0xff]
      %v1882 = vld [vmem:[%s1871 + $0x50] sm:$0xff]
      %v1883 = vld [vmem:[%s1871 + $0x58] sm:$0xff]
      %v1884 = vld [vmem:[%s1871 + $0x60] sm:$0xff]
      %v1885 = vld [vmem:[%s1871 + $0x68] sm:$0xff]
      %v1886 = vld [vmem:[%s1871 + $0x70] sm:$0xff]
      %v1887 = vld [vmem:[%s1871 + $0x78] sm:$0xff]
      %v1888 = vld [vmem:[%s1871 + $0x80] sm:$0xff]
      %v1889 = vld [vmem:[%s1871 + $0x88] sm:$0xff]
      %v1890 = vld [vmem:[%s1871 + $0x90] sm:$0xff]
      %v1891 = vld [vmem:[%s1871 + $0x98] sm:$0xff]
      %v1892 = vld [vmem:[%s1871 + $0xa0] sm:$0xff]
      %v1893 = vld [vmem:[%s1871 + $0xa8] sm:$0xff]
      %v1894 = vld [vmem:[%s1871 + $0xb0] sm:$0xff]
      %v1895 = vld [vmem:[%s1871 + $0xb8] sm:$0xff]
      %v1896 = vld [vmem:[%s1871 + $0xc0] sm:$0xff]
      %v1897 = vld [vmem:[%s1871 + $0xc8] sm:$0xff]
      %v1898 = vld [vmem:[%s1871 + $0xd0] sm:$0xff]
      %v1899 = vld [vmem:[%s1871 + $0xd8] sm:$0xff]
      %v1900 = vld [vmem:[%s1871 + $0xe0] sm:$0xff]
      %v1901 = vld [vmem:[%s1871 + $0xe8] sm:$0xff]
      %v1902 = vld [vmem:[%s1871 + $0xf0] sm:$0xff]
      %v1903 = vld [vmem:[%s1871 + $0xf8] sm:$0xff]
      %v1936 = vunpack.c.l.b16 %v1872
      %v1937 = vunpack.c.h.b16 %v1872
      %v1938 = vunpack.c.l.b16 %v1873
      %v1939 = vunpack.c.h.b16 %v1873
      %v1940 = vunpack.c.l.b16 %v1874
      %v1941 = vunpack.c.h.b16 %v1874
      %v1942 = vunpack.c.l.b16 %v1875
      %v1943 = vunpack.c.h.b16 %v1875
      %v1944 = vunpack.c.l.b16 %v1876
      %v1945 = vunpack.c.h.b16 %v1876
      %v1946 = vunpack.c.l.b16 %v1877
      %v1947 = vunpack.c.h.b16 %v1877
      %v1948 = vunpack.c.l.b16 %v1878
      %v1949 = vunpack.c.h.b16 %v1878
      %v1950 = vunpack.c.l.b16 %v1879
      %v1951 = vunpack.c.h.b16 %v1879
      %v1952 = vunpack.c.l.b16 %v1880
      %v1953 = vunpack.c.h.b16 %v1880
      %v1954 = vunpack.c.l.b16 %v1881
      %v1955 = vunpack.c.h.b16 %v1881
      %v1956 = vunpack.c.l.b16 %v1882
      %v1957 = vunpack.c.h.b16 %v1882
      %v1958 = vunpack.c.l.b16 %v1883
      %v1959 = vunpack.c.h.b16 %v1883
      %v1960 = vunpack.c.l.b16 %v1884
      %v1961 = vunpack.c.h.b16 %v1884
      %v1962 = vunpack.c.l.b16 %v1885
      %v1963 = vunpack.c.h.b16 %v1885
      %v1964 = vunpack.c.l.b16 %v1886
      %v1965 = vunpack.c.h.b16 %v1886
      %v1966 = vunpack.c.l.b16 %v1887
      %v1967 = vunpack.c.h.b16 %v1887
      %v1968 = vunpack.c.l.b16 %v1888
      %v1969 = vunpack.c.h.b16 %v1888
      %v1970 = vunpack.c.l.b16 %v1889
      %v1971 = vunpack.c.h.b16 %v1889
      %v1972 = vunpack.c.l.b16 %v1890
      %v1973 = vunpack.c.h.b16 %v1890
      %v1974 = vunpack.c.l.b16 %v1891
      %v1975 = vunpack.c.h.b16 %v1891
      %v1976 = vunpack.c.l.b16 %v1892
      %v1977 = vunpack.c.h.b16 %v1892
      %v1978 = vunpack.c.l.b16 %v1893
      %v1979 = vunpack.c.h.b16 %v1893
      %v1980 = vunpack.c.l.b16 %v1894
      %v1981 = vunpack.c.h.b16 %v1894
      %v1982 = vunpack.c.l.b16 %v1895
      %v1983 = vunpack.c.h.b16 %v1895
      %v1984 = vunpack.c.l.b16 %v1896
      %v1985 = vunpack.c.h.b16 %v1896
      %v1986 = vunpack.c.l.b16 %v1897
      %v1987 = vunpack.c.h.b16 %v1897
      %v1988 = vunpack.c.l.b16 %v1898
      %v1989 = vunpack.c.h.b16 %v1898
      %v1990 = vunpack.c.l.b16 %v1899
      %v1991 = vunpack.c.h.b16 %v1899
      %v1992 = vunpack.c.l.b16 %v1900
      %v1993 = vunpack.c.h.b16 %v1900
      %v1994 = vunpack.c.l.b16 %v1901
      %v1995 = vunpack.c.h.b16 %v1901
      %v1996 = vunpack.c.l.b16 %v1902
      %v1997 = vunpack.c.h.b16 %v1902
      %v1998 = vunpack.c.l.b16 %v1903
      %v1999 = vunpack.c.h.b16 %v1903
      %v2000 = vpack.c.b16 %v1938, %v1936
      %v2001 = vpack.c.b16 %v1939, %v1937
      %v2002 = vpack.c.b16 %v1942, %v1940
      %v2003 = vpack.c.b16 %v1943, %v1941
      %v2004 = vpack.c.b16 %v1946, %v1944
      %v2005 = vpack.c.b16 %v1947, %v1945
      %v2006 = vpack.c.b16 %v1950, %v1948
      %v2007 = vpack.c.b16 %v1951, %v1949
      %v2008 = vpack.c.b16 %v1954, %v1952
      %v2009 = vpack.c.b16 %v1955, %v1953
      %v2010 = vpack.c.b16 %v1958, %v1956
      %v2011 = vpack.c.b16 %v1959, %v1957
      %v2012 = vpack.c.b16 %v1962, %v1960
      %v2013 = vpack.c.b16 %v1963, %v1961
      %v2014 = vpack.c.b16 %v1966, %v1964
      %v2015 = vpack.c.b16 %v1967, %v1965
      %v2016 = vpack.c.b16 %v1970, %v1968
      %v2017 = vpack.c.b16 %v1971, %v1969
      %v2018 = vpack.c.b16 %v1974, %v1972
      %v2019 = vpack.c.b16 %v1975, %v1973
      %v2020 = vpack.c.b16 %v1978, %v1976
      %v2021 = vpack.c.b16 %v1979, %v1977
      %v2022 = vpack.c.b16 %v1982, %v1980
      %v2023 = vpack.c.b16 %v1983, %v1981
      %v2024 = vpack.c.b16 %v1986, %v1984
      %v2025 = vpack.c.b16 %v1987, %v1985
      %v2026 = vpack.c.b16 %v1990, %v1988
      %v2027 = vpack.c.b16 %v1991, %v1989
      %v2028 = vpack.c.b16 %v1994, %v1992
      %v2029 = vpack.c.b16 %v1995, %v1993
      %v2030 = vpack.c.b16 %v1998, %v1996
      %v2031 = vpack.c.b16 %v1999, %v1997
      %2064 = vmatprep.subr.bf16.mxu0 %v2001
      %2065 = vmatpush1.bf16.msra.mxu0 %v2000
      %2066 = vmatprep.subr.bf16.mxu0 %v2003
      %2067 = vmatpush1.bf16.msra.mxu0 %v2002
      %2068 = vmatprep.subr.bf16.mxu0 %v2005
      %2069 = vmatpush1.bf16.msra.mxu0 %v2004
      %2070 = vmatprep.subr.bf16.mxu0 %v2007
      %2071 = vmatpush1.bf16.msra.mxu0 %v2006
      %2072 = vmatprep.subr.bf16.mxu0 %v2009
      %2073 = vmatpush1.bf16.msra.mxu0 %v2008
      %2074 = vmatprep.subr.bf16.mxu0 %v2011
      %2075 = vmatpush1.bf16.msra.mxu0 %v2010
      %2076 = vmatprep.subr.bf16.mxu0 %v2013
      %2077 = vmatpush1.bf16.msra.mxu0 %v2012
      %2078 = vmatprep.subr.bf16.mxu0 %v2015
      %2079 = vmatpush1.bf16.msra.mxu0 %v2014
      %2080 = vmatprep.subr.bf16.mxu0 %v2017
      %2081 = vmatpush1.bf16.msra.mxu0 %v2016
      %2082 = vmatprep.subr.bf16.mxu0 %v2019
      %2083 = vmatpush1.bf16.msra.mxu0 %v2018
      %2084 = vmatprep.subr.bf16.mxu0 %v2021
      %2085 = vmatpush1.bf16.msra.mxu0 %v2020
      %2086 = vmatprep.subr.bf16.mxu0 %v2023
      %2087 = vmatpush1.bf16.msra.mxu0 %v2022
      %2088 = vmatprep.subr.bf16.mxu0 %v2025
      %2089 = vmatpush1.bf16.msra.mxu0 %v2024
      %2090 = vmatprep.subr.bf16.mxu0 %v2027
      %2091 = vmatpush1.bf16.msra.mxu0 %v2026
      %2092 = vmatprep.subr.bf16.mxu0 %v2029
      %2093 = vmatpush1.bf16.msra.mxu0 %v2028
      %2094 = vmatprep.subr.bf16.mxu0 %v2031
      %2095 = vmatpush1.bf16.msra.mxu0 %v2030
      %2096 = vmatprep.mubr.bf16.mxu0 %v555
      %2097 = vmatmul.mubr.bf16.gmra.mrb[0].mxu0 %v554
      %v2098 = vpop.f32.mrb[0].mxu0
      %v2099 = vadd.f32 0.0, %v2098
      %v2100 = vpop.f32.mrb[0].mxu0
      %v2101 = vadd.f32 0.0, %v2100
      %v2102 = vpop.f32.mrb[0].mxu0
      %v2103 = vadd.f32 0.0, %v2102
      %v2104 = vpop.f32.mrb[0].mxu0
      %v2105 = vadd.f32 0.0, %v2104
      %2106 = vmatprep.mubr.bf16.mxu0 %v557
      %2107 = vmatmul.mubr.bf16.gmra.mrb[0].mxu0 %v556
      %v2108 = vpop.f32.mrb[0].mxu0
      %v2109 = vadd.f32 0.0, %v2108
      %v2110 = vpop.f32.mrb[0].mxu0
      %v2111 = vadd.f32 0.0, %v2110
      %v2112 = vpop.f32.mrb[0].mxu0
      %v2113 = vadd.f32 0.0, %v2112
      %v2114 = vpop.f32.mrb[0].mxu0
      %v2115 = vadd.f32 0.0, %v2114
      %2116 = vmatprep.mubr.bf16.mxu0 %v559
      %2117 = vmatmul.mubr.bf16.gmra.mrb[0].mxu0 %v558
      %v2118 = vpop.f32.mrb[0].mxu0
      %v2119 = vadd.f32 0.0, %v2118
      %v2120 = vpop.f32.mrb[0].mxu0
      %v2121 = vadd.f32 0.0, %v2120
      %v2122 = vpop.f32.mrb[0].mxu0
      %v2123 = vadd.f32 0.0, %v2122
      %v2124 = vpop.f32.mrb[0].mxu0
      %v2125 = vadd.f32 0.0, %v2124
      %2126 = vmatprep.mubr.bf16.mxu0 %v561
      %2127 = vmatmul.mubr.bf16.gmra.mrb[0].mxu0 %v560
      %v2128 = vpop.f32.mrb[0].mxu0
      %v2129 = vadd.f32 0.0, %v2128
      %v2130 = vpop.f32.mrb[0].mxu0
      %v2131 = vadd.f32 0.0, %v2130
      %v2132 = vpop.f32.mrb[0].mxu0
      %v2133 = vadd.f32 0.0, %v2132
      %v2134 = vpop.f32.mrb[0].mxu0
      %v2135 = vadd.f32 0.0, %v2134
      %2136 = vmatprep.mubr.bf16.mxu0 %v563
      %2137 = vmatmul.mubr.bf16.gmra.mrb[0].mxu0 %v562
      %v2138 = vpop.f32.mrb[0].mxu0
      %v2139 = vadd.f32 0.0, %v2138
      %v2140 = vpop.f32.mrb[0].mxu0
      %v2141 = vadd.f32 0.0, %v2140
      %v2142 = vpop.f32.mrb[0].mxu0
      %v2143 = vadd.f32 0.0, %v2142
      %v2144 = vpop.f32.mrb[0].mxu0
      %v2145 = vadd.f32 0.0, %v2144
      %2146 = vmatprep.mubr.bf16.mxu0 %v565
      %2147 = vmatmul.mubr.bf16.gmra.mrb[0].mxu0 %v564
      %v2148 = vpop.f32.mrb[0].mxu0
      %v2149 = vadd.f32 0.0, %v2148
      %v2150 = vpop.f32.mrb[0].mxu0
      %v2151 = vadd.f32 0.0, %v2150
      %v2152 = vpop.f32.mrb[0].mxu0
      %v2153 = vadd.f32 0.0, %v2152
      %v2154 = vpop.f32.mrb[0].mxu0
      %v2155 = vadd.f32 0.0, %v2154
      %2156 = vmatprep.mubr.bf16.mxu0 %v567
      %2157 = vmatmul.mubr.bf16.gmra.mrb[0].mxu0 %v566
      %v2158 = vpop.f32.mrb[0].mxu0
      %v2159 = vadd.f32 0.0, %v2158
      %v2160 = vpop.f32.mrb[0].mxu0
      %v2161 = vadd.f32 0.0, %v2160
      %v2162 = vpop.f32.mrb[0].mxu0
      %v2163 = vadd.f32 0.0, %v2162
      %v2164 = vpop.f32.mrb[0].mxu0
      %v2165 = vadd.f32 0.0, %v2164
      %2166 = vmatprep.mubr.bf16.mxu0 %v569
      %2167 = vmatmul.mubr.bf16.gmra.mrb[0].mxu0 %v568
      %v2168 = vpop.f32.mrb[0].mxu0
      %v2169 = vadd.f32 0.0, %v2168
      %v2170 = vpop.f32.mrb[0].mxu0
      %v2171 = vadd.f32 0.0, %v2170
      %v2172 = vpop.f32.mrb[0].mxu0
      %v2173 = vadd.f32 0.0, %v2172
      %v2174 = vpop.f32.mrb[0].mxu0
      %v2175 = vadd.f32 0.0, %v2174
      %2176 = vmatprep.mubr.bf16.mxu0 %v571
      %2177 = vmatmul.mubr.bf16.gmra.mrb[0].mxu0 %v570
      %v2178 = vpop.f32.mrb[0].mxu0
      %v2179 = vadd.f32 0.0, %v2178
      %v2180 = vpop.f32.mrb[0].mxu0
      %v2181 = vadd.f32 0.0, %v2180
      %v2182 = vpop.f32.mrb[0].mxu0
      %v2183 = vadd.f32 0.0, %v2182
      %v2184 = vpop.f32.mrb[0].mxu0
      %v2185 = vadd.f32 0.0, %v2184
      %2186 = vmatprep.mubr.bf16.mxu0 %v573
      %2187 = vmatmul.mubr.bf16.gmra.mrb[0].mxu0 %v572
      %v2188 = vpop.f32.mrb[0].mxu0
      %v2189 = vadd.f32 0.0, %v2188
      %v2190 = vpop.f32.mrb[0].mxu0
      %v2191 = vadd.f32 0.0, %v2190
      %v2192 = vpop.f32.mrb[0].mxu0
      %v2193 = vadd.f32 0.0, %v2192
      %v2194 = vpop.f32.mrb[0].mxu0
      %v2195 = vadd.f32 0.0, %v2194
      %2196 = vmatprep.mubr.bf16.mxu0 %v575
      %2197 = vmatmul.mubr.bf16.gmra.mrb[0].mxu0 %v574
      %v2198 = vpop.f32.mrb[0].mxu0
      %v2199 = vadd.f32 0.0, %v2198
      %v2200 = vpop.f32.mrb[0].mxu0
      %v2201 = vadd.f32 0.0, %v2200
      %v2202 = vpop.f32.mrb[0].mxu0
      %v2203 = vadd.f32 0.0, %v2202
      %v2204 = vpop.f32.mrb[0].mxu0
      %v2205 = vadd.f32 0.0, %v2204
      %2206 = vmatprep.mubr.bf16.mxu0 %v577
      %2207 = vmatmul.mubr.bf16.gmra.mrb[0].mxu0 %v576
      %v2208 = vpop.f32.mrb[0].mxu0
      %v2209 = vadd.f32 0.0, %v2208
      %v2210 = vpop.f32.mrb[0].mxu0
      %v2211 = vadd.f32 0.0, %v2210
      %v2212 = vpop.f32.mrb[0].mxu0
      %v2213 = vadd.f32 0.0, %v2212
      %v2214 = vpop.f32.mrb[0].mxu0
      %v2215 = vadd.f32 0.0, %v2214
      %2216 = vmatprep.mubr.bf16.mxu0 %v579
      %2217 = vmatmul.mubr.bf16.gmra.mrb[0].mxu0 %v578
      %v2218 = vpop.f32.mrb[0].mxu0
      %v2219 = vadd.f32 0.0, %v2218
      %v2220 = vpop.f32.mrb[0].mxu0
      %v2221 = vadd.f32 0.0, %v2220
      %v2222 = vpop.f32.mrb[0].mxu0
      %v2223 = vadd.f32 0.0, %v2222
      %v2224 = vpop.f32.mrb[0].mxu0
      %v2225 = vadd.f32 0.0, %v2224
      %2226 = vmatprep.mubr.bf16.mxu0 %v581
      %2227 = vmatmul.mubr.bf16.gmra.mrb[0].mxu0 %v580
      %v2228 = vpop.f32.mrb[0].mxu0
      %v2229 = vadd.f32 0.0, %v2228
      %v2230 = vpop.f32.mrb[0].mxu0
      %v2231 = vadd.f32 0.0, %v2230
      %v2232 = vpop.f32.mrb[0].mxu0
      %v2233 = vadd.f32 0.0, %v2232
      %v2234 = vpop.f32.mrb[0].mxu0
      %v2235 = vadd.f32 0.0, %v2234
      %2236 = vmatprep.mubr.bf16.mxu0 %v583
      %2237 = vmatmul.mubr.bf16.gmra.mrb[0].mxu0 %v582
      %v2238 = vpop.f32.mrb[0].mxu0
      %v2239 = vadd.f32 0.0, %v2238
      %v2240 = vpop.f32.mrb[0].mxu0
      %v2241 = vadd.f32 0.0, %v2240
      %v2242 = vpop.f32.mrb[0].mxu0
      %v2243 = vadd.f32 0.0, %v2242
      %v2244 = vpop.f32.mrb[0].mxu0
      %v2245 = vadd.f32 0.0, %v2244
      %2246 = vmatprep.mubr.bf16.mxu0 %v585
      %2247 = vmatmul.mubr.bf16.gmra.mrb[0].mxu0 %v584
      %v2248 = vpop.f32.mrb[0].mxu0
      %v2249 = vadd.f32 0.0, %v2248
      %v2250 = vpop.f32.mrb[0].mxu0
      %v2251 = vadd.f32 0.0, %v2250
      %v2252 = vpop.f32.mrb[0].mxu0
      %v2253 = vadd.f32 0.0, %v2252
      %v2254 = vpop.f32.mrb[0].mxu0
      %v2255 = vadd.f32 0.0, %v2254
      %2256 = vdwg.mxu0
      %v2257 = vmax.f32 %v1807, %v2099
      %v2258 = vmax.f32 %v1808, %v2101
      %v2259 = vmax.f32 %v1809, %v2103
      %v2260 = vmax.f32 %v1810, %v2105
      %v2261 = vmax.f32 %v1811, %v2109
      %v2262 = vmax.f32 %v1812, %v2111
      %v2263 = vmax.f32 %v1813, %v2113
      %v2264 = vmax.f32 %v1814, %v2115
      %v2265 = vmax.f32 %v1815, %v2119
      %v2266 = vmax.f32 %v1816, %v2121
      %v2267 = vmax.f32 %v1817, %v2123
      %v2268 = vmax.f32 %v1818, %v2125
      %v2269 = vmax.f32 %v1819, %v2129
      %v2270 = vmax.f32 %v1820, %v2131
      %v2271 = vmax.f32 %v1821, %v2133
      %v2272 = vmax.f32 %v1822, %v2135
      %v2273 = vmax.f32 %v1823, %v2139
      %v2274 = vmax.f32 %v1824, %v2141
      %v2275 = vmax.f32 %v1825, %v2143
      %v2276 = vmax.f32 %v1826, %v2145
      %v2277 = vmax.f32 %v1827, %v2149
      %v2278 = vmax.f32 %v1828, %v2151
      %v2279 = vmax.f32 %v1829, %v2153
      %v2280 = vmax.f32 %v1830, %v2155
      %v2281 = vmax.f32 %v1831, %v2159
      %v2282 = vmax.f32 %v1832, %v2161
      %v2283 = vmax.f32 %v1833, %v2163
      %v2284 = vmax.f32 %v1834, %v2165
      %v2285 = vmax.f32 %v1835, %v2169
      %v2286 = vmax.f32 %v1836, %v2171
      %v2287 = vmax.f32 %v1837, %v2173
      %v2288 = vmax.f32 %v1838, %v2175
      %v2289 = vmax.f32 %v1839, %v2179
      %v2290 = vmax.f32 %v1840, %v2181
      %v2291 = vmax.f32 %v1841, %v2183
      %v2292 = vmax.f32 %v1842, %v2185
      %v2293 = vmax.f32 %v1843, %v2189
      %v2294 = vmax.f32 %v1844, %v2191
      %v2295 = vmax.f32 %v1845, %v2193
      %v2296 = vmax.f32 %v1846, %v2195
      %v2297 = vmax.f32 %v1847, %v2199
      %v2298 = vmax.f32 %v1848, %v2201
      %v2299 = vmax.f32 %v1849, %v2203
      %v2300 = vmax.f32 %v1850, %v2205
      %v2301 = vmax.f32 %v1851, %v2209
      %v2302 = vmax.f32 %v1852, %v2211
      %v2303 = vmax.f32 %v1853, %v2213
      %v2304 = vmax.f32 %v1854, %v2215
      %v2305 = vmax.f32 %v1855, %v2219
      %v2306 = vmax.f32 %v1856, %v2221
      %v2307 = vmax.f32 %v1857, %v2223
      %v2308 = vmax.f32 %v1858, %v2225
      %v2309 = vmax.f32 %v1859, %v2229
      %v2310 = vmax.f32 %v1860, %v2231
      %v2311 = vmax.f32 %v1861, %v2233
      %v2312 = vmax.f32 %v1862, %v2235
      %v2313 = vmax.f32 %v1863, %v2239
      %v2314 = vmax.f32 %v1864, %v2241
      %v2315 = vmax.f32 %v1865, %v2243
      %v2316 = vmax.f32 %v1866, %v2245
      %v2317 = vmax.f32 %v1867, %v2249
      %v2318 = vmax.f32 %v1868, %v2251
      %v2319 = vmax.f32 %v1869, %v2253
      %v2320 = vmax.f32 %v1870, %v2255
      %v2321 = vld [vmem:[%s2] sm:$0x3]
      %v2323 = vlaneseq
      %v2324 = vshrl.u32 %v2323, 7
      %v2325 = vsub.s32 0, %v2324
      %v2326 = vrot.slane %v2321, %v2325
      %v2327 = vlaneseq
      %v2328 = vshrl.u32 %v2327, 7
      %v2329 = vsub.s32 1, %v2328
      %v2330 = vrot.slane %v2321, %v2329
      %v2333 = vadd.f32 %v2257, %v2326
      %v2334 = vadd.f32 %v2258, %v2330
      %v2335 = vadd.f32 %v2259, %v2326
      %v2336 = vadd.f32 %v2260, %v2330
      %v2337 = vadd.f32 %v2261, %v2326
      %v2338 = vadd.f32 %v2262, %v2330
      %v2339 = vadd.f32 %v2263, %v2326
      %v2340 = vadd.f32 %v2264, %v2330
      %v2341 = vadd.f32 %v2265, %v2326
      %v2342 = vadd.f32 %v2266, %v2330
      %v2343 = vadd.f32 %v2267, %v2326
      %v2344 = vadd.f32 %v2268, %v2330
      %v2345 = vadd.f32 %v2269, %v2326
      %v2346 = vadd.f32 %v2270, %v2330
      %v2347 = vadd.f32 %v2271, %v2326
      %v2348 = vadd.f32 %v2272, %v2330
      %v2349 = vadd.f32 %v2273, %v2326
      %v2350 = vadd.f32 %v2274, %v2330
      %v2351 = vadd.f32 %v2275, %v2326
      %v2352 = vadd.f32 %v2276, %v2330
      %v2353 = vadd.f32 %v2277, %v2326
      %v2354 = vadd.f32 %v2278, %v2330
      %v2355 = vadd.f32 %v2279, %v2326
      %v2356 = vadd.f32 %v2280, %v2330
      %v2357 = vadd.f32 %v2281, %v2326
      %v2358 = vadd.f32 %v2282, %v2330
      %v2359 = vadd.f32 %v2283, %v2326
      %v2360 = vadd.f32 %v2284, %v2330
      %v2361 = vadd.f32 %v2285, %v2326
      %v2362 = vadd.f32 %v2286, %v2330
      %v2363 = vadd.f32 %v2287, %v2326
      %v2364 = vadd.f32 %v2288, %v2330
      %v2365 = vadd.f32 %v2289, %v2326
      %v2366 = vadd.f32 %v2290, %v2330
      %v2367 = vadd.f32 %v2291, %v2326
      %v2368 = vadd.f32 %v2292, %v2330
      %v2369 = vadd.f32 %v2293, %v2326
      %v2370 = vadd.f32 %v2294, %v2330
      %v2371 = vadd.f32 %v2295, %v2326
      %v2372 = vadd.f32 %v2296, %v2330
      %v2373 = vadd.f32 %v2297, %v2326
      %v2374 = vadd.f32 %v2298, %v2330
      %v2375 = vadd.f32 %v2299, %v2326
      %v2376 = vadd.f32 %v2300, %v2330
      %v2377 = vadd.f32 %v2301, %v2326
      %v2378 = vadd.f32 %v2302, %v2330
      %v2379 = vadd.f32 %v2303, %v2326
      %v2380 = vadd.f32 %v2304, %v2330
      %v2381 = vadd.f32 %v2305, %v2326
      %v2382 = vadd.f32 %v2306, %v2330
      %v2383 = vadd.f32 %v2307, %v2326
      %v2384 = vadd.f32 %v2308, %v2330
      %v2385 = vadd.f32 %v2309, %v2326
      %v2386 = vadd.f32 %v2310, %v2330
      %v2387 = vadd.f32 %v2311, %v2326
      %v2388 = vadd.f32 %v2312, %v2330
      %v2389 = vadd.f32 %v2313, %v2326
      %v2390 = vadd.f32 %v2314, %v2330
      %v2391 = vadd.f32 %v2315, %v2326
      %v2392 = vadd.f32 %v2316, %v2330
      %v2393 = vadd.f32 %v2317, %v2326
      %v2394 = vadd.f32 %v2318, %v2330
      %v2395 = vadd.f32 %v2319, %v2326
      %v2396 = vadd.f32 %v2320, %v2330
      %v2397 = vmax.f32 %v2333, 0.0
      %v2398 = vmax.f32 %v2334, 0.0
      %v2399 = vmax.f32 %v2335, 0.0
      %v2400 = vmax.f32 %v2336, 0.0
      %v2401 = vmax.f32 %v2337, 0.0
      %v2402 = vmax.f32 %v2338, 0.0
      %v2403 = vmax.f32 %v2339, 0.0
      %v2404 = vmax.f32 %v2340, 0.0
      %v2405 = vmax.f32 %v2341, 0.0
      %v2406 = vmax.f32 %v2342, 0.0
      %v2407 = vmax.f32 %v2343, 0.0
      %v2408 = vmax.f32 %v2344, 0.0
      %v2409 = vmax.f32 %v2345, 0.0
      %v2410 = vmax.f32 %v2346, 0.0
      %v2411 = vmax.f32 %v2347, 0.0
      %v2412 = vmax.f32 %v2348, 0.0
      %v2413 = vmax.f32 %v2349, 0.0
      %v2414 = vmax.f32 %v2350, 0.0
      %v2415 = vmax.f32 %v2351, 0.0
      %v2416 = vmax.f32 %v2352, 0.0
      %v2417 = vmax.f32 %v2353, 0.0
      %v2418 = vmax.f32 %v2354, 0.0
      %v2419 = vmax.f32 %v2355, 0.0
      %v2420 = vmax.f32 %v2356, 0.0
      %v2421 = vmax.f32 %v2357, 0.0
      %v2422 = vmax.f32 %v2358, 0.0
      %v2423 = vmax.f32 %v2359, 0.0
      %v2424 = vmax.f32 %v2360, 0.0
      %v2425 = vmax.f32 %v2361, 0.0
      %v2426 = vmax.f32 %v2362, 0.0
      %v2427 = vmax.f32 %v2363, 0.0
      %v2428 = vmax.f32 %v2364, 0.0
      %v2429 = vmax.f32 %v2365, 0.0
      %v2430 = vmax.f32 %v2366, 0.0
      %v2431 = vmax.f32 %v2367, 0.0
      %v2432 = vmax.f32 %v2368, 0.0
      %v2433 = vmax.f32 %v2369, 0.0
      %v2434 = vmax.f32 %v2370, 0.0
      %v2435 = vmax.f32 %v2371, 0.0
      %v2436 = vmax.f32 %v2372, 0.0
      %v2437 = vmax.f32 %v2373, 0.0
      %v2438 = vmax.f32 %v2374, 0.0
      %v2439 = vmax.f32 %v2375, 0.0
      %v2440 = vmax.f32 %v2376, 0.0
      %v2441 = vmax.f32 %v2377, 0.0
      %v2442 = vmax.f32 %v2378, 0.0
      %v2443 = vmax.f32 %v2379, 0.0
      %v2444 = vmax.f32 %v2380, 0.0
      %v2445 = vmax.f32 %v2381, 0.0
      %v2446 = vmax.f32 %v2382, 0.0
      %v2447 = vmax.f32 %v2383, 0.0
      %v2448 = vmax.f32 %v2384, 0.0
      %v2449 = vmax.f32 %v2385, 0.0
      %v2450 = vmax.f32 %v2386, 0.0
      %v2451 = vmax.f32 %v2387, 0.0
      %v2452 = vmax.f32 %v2388, 0.0
      %v2453 = vmax.f32 %v2389, 0.0
      %v2454 = vmax.f32 %v2390, 0.0
      %v2455 = vmax.f32 %v2391, 0.0
      %v2456 = vmax.f32 %v2392, 0.0
      %v2457 = vmax.f32 %v2393, 0.0
      %v2458 = vmax.f32 %v2394, 0.0
      %v2459 = vmax.f32 %v2395, 0.0
      %v2460 = vmax.f32 %v2396, 0.0
      %v2461 = vpack.c.bf16 %v2399, %v2397
      %v2462 = vpack.c.bf16 %v2400, %v2398
      %v2463 = vpack.c.bf16 %v2403, %v2401
      %v2464 = vpack.c.bf16 %v2404, %v2402
      %v2465 = vpack.c.bf16 %v2407, %v2405
      %v2466 = vpack.c.bf16 %v2408, %v2406
      %v2467 = vpack.c.bf16 %v2411, %v2409
      %v2468 = vpack.c.bf16 %v2412, %v2410
      %v2469 = vpack.c.bf16 %v2415, %v2413
      %v2470 = vpack.c.bf16 %v2416, %v2414
      %v2471 = vpack.c.bf16 %v2419, %v2417
      %v2472 = vpack.c.bf16 %v2420, %v2418
      %v2473 = vpack.c.bf16 %v2423, %v2421
      %v2474 = vpack.c.bf16 %v2424, %v2422
      %v2475 = vpack.c.bf16 %v2427, %v2425
      %v2476 = vpack.c.bf16 %v2428, %v2426
      %v2477 = vpack.c.bf16 %v2431, %v2429
      %v2478 = vpack.c.bf16 %v2432, %v2430
      %v2479 = vpack.c.bf16 %v2435, %v2433
      %v2480 = vpack.c.bf16 %v2436, %v2434
      %v2481 = vpack.c.bf16 %v2439, %v2437
      %v2482 = vpack.c.bf16 %v2440, %v2438
      %v2483 = vpack.c.bf16 %v2443, %v2441
      %v2484 = vpack.c.bf16 %v2444, %v2442
      %v2485 = vpack.c.bf16 %v2447, %v2445
      %v2486 = vpack.c.bf16 %v2448, %v2446
      %v2487 = vpack.c.bf16 %v2451, %v2449
      %v2488 = vpack.c.bf16 %v2452, %v2450
      %v2489 = vpack.c.bf16 %v2455, %v2453
      %v2490 = vpack.c.bf16 %v2456, %v2454
      %v2491 = vpack.c.bf16 %v2459, %v2457
      %v2492 = vpack.c.bf16 %v2460, %v2458
      %v2493 = vld [vmem:[%s3] sm:$0xf]
      %v2494 = vld [vmem:[%s3 + $0x4] sm:$0xf]
      %v2495 = vld [vmem:[%s3 + $0x8] sm:$0xf]
      %v2496 = vld [vmem:[%s3 + $0xc] sm:$0xf]
      %v2497 = vld [vmem:[%s3 + $0x10] sm:$0xf]
      %v2498 = vld [vmem:[%s3 + $0x14] sm:$0xf]
      %v2499 = vld [vmem:[%s3 + $0x18] sm:$0xf]
      %v2500 = vld [vmem:[%s3 + $0x1c] sm:$0xf]
      %v2501 = vld [vmem:[%s3 + $0x20] sm:$0xf]
      %v2502 = vld [vmem:[%s3 + $0x24] sm:$0xf]
      %v2503 = vld [vmem:[%s3 + $0x28] sm:$0xf]
      %v2504 = vld [vmem:[%s3 + $0x2c] sm:$0xf]
      %v2505 = vld [vmem:[%s3 + $0x30] sm:$0xf]
      %v2506 = vld [vmem:[%s3 + $0x34] sm:$0xf]
      %v2507 = vld [vmem:[%s3 + $0x38] sm:$0xf]
      %v2508 = vld [vmem:[%s3 + $0x3c] sm:$0xf]
      %v2509 = vld [vmem:[%s3 + $0x40] sm:$0xf]
      %v2510 = vld [vmem:[%s3 + $0x44] sm:$0xf]
      %v2511 = vld [vmem:[%s3 + $0x48] sm:$0xf]
      %v2512 = vld [vmem:[%s3 + $0x4c] sm:$0xf]
      %v2513 = vld [vmem:[%s3 + $0x50] sm:$0xf]
      %v2514 = vld [vmem:[%s3 + $0x54] sm:$0xf]
      %v2515 = vld [vmem:[%s3 + $0x58] sm:$0xf]
      %v2516 = vld [vmem:[%s3 + $0x5c] sm:$0xf]
      %v2517 = vld [vmem:[%s3 + $0x60] sm:$0xf]
      %v2518 = vld [vmem:[%s3 + $0x64] sm:$0xf]
      %v2519 = vld [vmem:[%s3 + $0x68] sm:$0xf]
      %v2520 = vld [vmem:[%s3 + $0x6c] sm:$0xf]
      %v2521 = vld [vmem:[%s3 + $0x70] sm:$0xf]
      %v2522 = vld [vmem:[%s3 + $0x74] sm:$0xf]
      %v2523 = vld [vmem:[%s3 + $0x78] sm:$0xf]
      %v2524 = vld [vmem:[%s3 + $0x7c] sm:$0xf]
      %v2557 = vunpack.c.l.b16 %v2493
      %v2558 = vunpack.c.l.b16 %v2494
      %v2559 = vunpack.c.l.b16 %v2495
      %v2560 = vunpack.c.l.b16 %v2496
      %v2561 = vunpack.c.l.b16 %v2497
      %v2562 = vunpack.c.l.b16 %v2498
      %v2563 = vunpack.c.l.b16 %v2499
      %v2564 = vunpack.c.l.b16 %v2500
      %v2565 = vunpack.c.l.b16 %v2501
      %v2566 = vunpack.c.l.b16 %v2502
      %v2567 = vunpack.c.l.b16 %v2503
      %v2568 = vunpack.c.l.b16 %v2504
      %v2569 = vunpack.c.l.b16 %v2505
      %v2570 = vunpack.c.l.b16 %v2506
      %v2571 = vunpack.c.l.b16 %v2507
      %v2572 = vunpack.c.l.b16 %v2508
      %v2573 = vunpack.c.l.b16 %v2509
      %v2574 = vunpack.c.l.b16 %v2510
      %v2575 = vunpack.c.l.b16 %v2511
      %v2576 = vunpack.c.l.b16 %v2512
      %v2577 = vunpack.c.l.b16 %v2513
      %v2578 = vunpack.c.l.b16 %v2514
      %v2579 = vunpack.c.l.b16 %v2515
      %v2580 = vunpack.c.l.b16 %v2516
      %v2581 = vunpack.c.l.b16 %v2517
      %v2582 = vunpack.c.l.b16 %v2518
      %v2583 = vunpack.c.l.b16 %v2519
      %v2584 = vunpack.c.l.b16 %v2520
      %v2585 = vunpack.c.l.b16 %v2521
      %v2586 = vunpack.c.l.b16 %v2522
      %v2587 = vunpack.c.l.b16 %v2523
      %v2588 = vunpack.c.l.b16 %v2524
      %v2589 = vpack.c.b16 %v2558, %v2557
      %v2590 = vpack.c.b16 %v2560, %v2559
      %v2591 = vpack.c.b16 %v2562, %v2561
      %v2592 = vpack.c.b16 %v2564, %v2563
      %v2593 = vpack.c.b16 %v2566, %v2565
      %v2594 = vpack.c.b16 %v2568, %v2567
      %v2595 = vpack.c.b16 %v2570, %v2569
      %v2596 = vpack.c.b16 %v2572, %v2571
      %v2597 = vpack.c.b16 %v2574, %v2573
      %v2598 = vpack.c.b16 %v2576, %v2575
      %v2599 = vpack.c.b16 %v2578, %v2577
      %v2600 = vpack.c.b16 %v2580, %v2579
      %v2601 = vpack.c.b16 %v2582, %v2581
      %v2602 = vpack.c.b16 %v2584, %v2583
      %v2603 = vpack.c.b16 %v2586, %v2585
      %v2604 = vpack.c.b16 %v2588, %v2587
      %2621 = vmatprep.subr.bf16.mxu0 0
      %2622 = vmatpush1.bf16.msra.mxu0 %v2589
      %2623 = vmatprep.subr.bf16.mxu0 0
      %2624 = vmatpush1.bf16.msra.mxu0 %v2590
      %2625 = vmatprep.subr.bf16.mxu0 0
      %2626 = vmatpush1.bf16.msra.mxu0 %v2591
      %2627 = vmatprep.subr.bf16.mxu0 0
      %2628 = vmatpush1.bf16.msra.mxu0 %v2592
      %2629 = vmatprep.subr.bf16.mxu0 0
      %2630 = vmatpush1.bf16.msra.mxu0 %v2593
      %2631 = vmatprep.subr.bf16.mxu0 0
      %2632 = vmatpush1.bf16.msra.mxu0 %v2594
      %2633 = vmatprep.subr.bf16.mxu0 0
      %2634 = vmatpush1.bf16.msra.mxu0 %v2595
      %2635 = vmatprep.subr.bf16.mxu0 0
      %2636 = vmatpush1.bf16.msra.mxu0 %v2596
      %2637 = vmatprep.subr.bf16.mxu0 0
      %2638 = vmatpush1.bf16.msra.mxu0 %v2597
      %2639 = vmatprep.subr.bf16.mxu0 0
      %2640 = vmatpush1.bf16.msra.mxu0 %v2598
      %2641 = vmatprep.subr.bf16.mxu0 0
      %2642 = vmatpush1.bf16.msra.mxu0 %v2599
      %2643 = vmatprep.subr.bf16.mxu0 0
      %2644 = vmatpush1.bf16.msra.mxu0 %v2600
      %2645 = vmatprep.subr.bf16.mxu0 0
      %2646 = vmatpush1.bf16.msra.mxu0 %v2601
      %2647 = vmatprep.subr.bf16.mxu0 0
      %2648 = vmatpush1.bf16.msra.mxu0 %v2602
      %2649 = vmatprep.subr.bf16.mxu0 0
      %2650 = vmatpush1.bf16.msra.mxu0 %v2603
      %2651 = vmatprep.subr.bf16.mxu0 0
      %2652 = vmatpush1.bf16.msra.mxu0 %v2604
      %2653 = vmatprep.mubr.bf16.mxu0 %v2462
      %2654 = vmatmul.mubr.bf16.gmra.mrb[0].mxu0 %v2461
      %v2655 = vpop.f32.mrb[0].mxu0
      %v2656 = vadd.f32 0.0, %v2655
      %v2657 = vpop.f32.mrb[0].mxu0
      %v2658 = vpop.f32.mrb[0].mxu0
      %v2659 = vadd.f32 0.0, %v2658
      %v2660 = vpop.f32.mrb[0].mxu0
      %2661 = vmatprep.mubr.bf16.mxu0 %v2464
      %2662 = vmatmul.mubr.bf16.gmra.mrb[0].mxu0 %v2463
      %v2663 = vpop.f32.mrb[0].mxu0
      %v2664 = vadd.f32 0.0, %v2663
      %v2665 = vpop.f32.mrb[0].mxu0
      %v2666 = vpop.f32.mrb[0].mxu0
      %v2667 = vadd.f32 0.0, %v2666
      %v2668 = vpop.f32.mrb[0].mxu0
      %2669 = vmatprep.mubr.bf16.mxu0 %v2466
      %2670 = vmatmul.mubr.bf16.gmra.mrb[0].mxu0 %v2465
      %v2671 = vpop.f32.mrb[0].mxu0
      %v2672 = vadd.f32 0.0, %v2671
      %v2673 = vpop.f32.mrb[0].mxu0
      %v2674 = vpop.f32.mrb[0].mxu0
      %v2675 = vadd.f32 0.0, %v2674
      %v2676 = vpop.f32.mrb[0].mxu0
      %2677 = vmatprep.mubr.bf16.mxu0 %v2468
      %2678 = vmatmul.mubr.bf16.gmra.mrb[0].mxu0 %v2467
      %v2679 = vpop.f32.mrb[0].mxu0
      %v2680 = vadd.f32 0.0, %v2679
      %v2681 = vpop.f32.mrb[0].mxu0
      %v2682 = vpop.f32.mrb[0].mxu0
      %v2683 = vadd.f32 0.0, %v2682
      %v2684 = vpop.f32.mrb[0].mxu0
      %2685 = vmatprep.mubr.bf16.mxu0 %v2470
      %2686 = vmatmul.mubr.bf16.gmra.mrb[0].mxu0 %v2469
      %v2687 = vpop.f32.mrb[0].mxu0
      %v2688 = vadd.f32 0.0, %v2687
      %v2689 = vpop.f32.mrb[0].mxu0
      %v2690 = vpop.f32.mrb[0].mxu0
      %v2691 = vadd.f32 0.0, %v2690
      %v2692 = vpop.f32.mrb[0].mxu0
      %2693 = vmatprep.mubr.bf16.mxu0 %v2472
      %2694 = vmatmul.mubr.bf16.gmra.mrb[0].mxu0 %v2471
      %v2695 = vpop.f32.mrb[0].mxu0
      %v2696 = vadd.f32 0.0, %v2695
      %v2697 = vpop.f32.mrb[0].mxu0
      %v2698 = vpop.f32.mrb[0].mxu0
      %v2699 = vadd.f32 0.0, %v2698
      %v2700 = vpop.f32.mrb[0].mxu0
      %2701 = vmatprep.mubr.bf16.mxu0 %v2474
      %2702 = vmatmul.mubr.bf16.gmra.mrb[0].mxu0 %v2473
      %v2703 = vpop.f32.mrb[0].mxu0
      %v2704 = vadd.f32 0.0, %v2703
      %v2705 = vpop.f32.mrb[0].mxu0
      %v2706 = vpop.f32.mrb[0].mxu0
      %v2707 = vadd.f32 0.0, %v2706
      %v2708 = vpop.f32.mrb[0].mxu0
      %2709 = vmatprep.mubr.bf16.mxu0 %v2476
      %2710 = vmatmul.mubr.bf16.gmra.mrb[0].mxu0 %v2475
      %v2711 = vpop.f32.mrb[0].mxu0
      %v2712 = vadd.f32 0.0, %v2711
      %v2713 = vpop.f32.mrb[0].mxu0
      %v2714 = vpop.f32.mrb[0].mxu0
      %v2715 = vadd.f32 0.0, %v2714
      %v2716 = vpop.f32.mrb[0].mxu0
      %2717 = vmatprep.mubr.bf16.mxu0 %v2478
      %2718 = vmatmul.mubr.bf16.gmra.mrb[0].mxu0 %v2477
      %v2719 = vpop.f32.mrb[0].mxu0
      %v2720 = vadd.f32 0.0, %v2719
      %v2721 = vpop.f32.mrb[0].mxu0
      %v2722 = vpop.f32.mrb[0].mxu0
      %v2723 = vadd.f32 0.0, %v2722
      %v2724 = vpop.f32.mrb[0].mxu0
      %2725 = vmatprep.mubr.bf16.mxu0 %v2480
      %2726 = vmatmul.mubr.bf16.gmra.mrb[0].mxu0 %v2479
      %v2727 = vpop.f32.mrb[0].mxu0
      %v2728 = vadd.f32 0.0, %v2727
      %v2729 = vpop.f32.mrb[0].mxu0
      %v2730 = vpop.f32.mrb[0].mxu0
      %v2731 = vadd.f32 0.0, %v2730
      %v2732 = vpop.f32.mrb[0].mxu0
      %2733 = vmatprep.mubr.bf16.mxu0 %v2482
      %2734 = vmatmul.mubr.bf16.gmra.mrb[0].mxu0 %v2481
      %v2735 = vpop.f32.mrb[0].mxu0
      %v2736 = vadd.f32 0.0, %v2735
      %v2737 = vpop.f32.mrb[0].mxu0
      %v2738 = vpop.f32.mrb[0].mxu0
      %v2739 = vadd.f32 0.0, %v2738
      %v2740 = vpop.f32.mrb[0].mxu0
      %2741 = vmatprep.mubr.bf16.mxu0 %v2484
      %2742 = vmatmul.mubr.bf16.gmra.mrb[0].mxu0 %v2483
      %v2743 = vpop.f32.mrb[0].mxu0
      %v2744 = vadd.f32 0.0, %v2743
      %v2745 = vpop.f32.mrb[0].mxu0
      %v2746 = vpop.f32.mrb[0].mxu0
      %v2747 = vadd.f32 0.0, %v2746
      %v2748 = vpop.f32.mrb[0].mxu0
      %2749 = vmatprep.mubr.bf16.mxu0 %v2486
      %2750 = vmatmul.mubr.bf16.gmra.mrb[0].mxu0 %v2485
      %v2751 = vpop.f32.mrb[0].mxu0
      %v2752 = vadd.f32 0.0, %v2751
      %v2753 = vpop.f32.mrb[0].mxu0
      %v2754 = vpop.f32.mrb[0].mxu0
      %v2755 = vadd.f32 0.0, %v2754
      %v2756 = vpop.f32.mrb[0].mxu0
      %2757 = vmatprep.mubr.bf16.mxu0 %v2488
      %2758 = vmatmul.mubr.bf16.gmra.mrb[0].mxu0 %v2487
      %v2759 = vpop.f32.mrb[0].mxu0
      %v2760 = vadd.f32 0.0, %v2759
      %v2761 = vpop.f32.mrb[0].mxu0
      %v2762 = vpop.f32.mrb[0].mxu0
      %v2763 = vadd.f32 0.0, %v2762
      %v2764 = vpop.f32.mrb[0].mxu0
      %2765 = vmatprep.mubr.bf16.mxu0 %v2490
      %2766 = vmatmul.mubr.bf16.gmra.mrb[0].mxu0 %v2489
      %v2767 = vpop.f32.mrb[0].mxu0
      %v2768 = vadd.f32 0.0, %v2767
      %v2769 = vpop.f32.mrb[0].mxu0
      %v2770 = vpop.f32.mrb[0].mxu0
      %v2771 = vadd.f32 0.0, %v2770
      %v2772 = vpop.f32.mrb[0].mxu0
      %2773 = vmatprep.mubr.bf16.mxu0 %v2492
      %2774 = vmatmul.mubr.bf16.gmra.mrb[0].mxu0 %v2491
      %v2775 = vpop.f32.mrb[0].mxu0
      %v2776 = vadd.f32 0.0, %v2775
      %v2777 = vpop.f32.mrb[0].mxu0
      %v2778 = vpop.f32.mrb[0].mxu0
      %v2779 = vadd.f32 0.0, %v2778
      %v2780 = vpop.f32.mrb[0].mxu0
      %2781 = vdwg.mxu0
      %s2782 = scalar_lea.vmem %s3, 128
      %v2783 = vld [vmem:[%s2782] sm:$0xf]
      %v2784 = vld [vmem:[%s2782 + $0x4] sm:$0xf]
      %v2785 = vld [vmem:[%s2782 + $0x8] sm:$0xf]
      %v2786 = vld [vmem:[%s2782 + $0xc] sm:$0xf]
      %v2787 = vld [vmem:[%s2782 + $0x10] sm:$0xf]
      %v2788 = vld [vmem:[%s2782 + $0x14] sm:$0xf]
      %v2789 = vld [vmem:[%s2782 + $0x18] sm:$0xf]
      %v2790 = vld [vmem:[%s2782 + $0x1c] sm:$0xf]
      %v2791 = vld [vmem:[%s2782 + $0x20] sm:$0xf]
      %v2792 = vld [vmem:[%s2782 + $0x24] sm:$0xf]
      %v2793 = vld [vmem:[%s2782 + $0x28] sm:$0xf]
      %v2794 = vld [vmem:[%s2782 + $0x2c] sm:$0xf]
      %v2795 = vld [vmem:[%s2782 + $0x30] sm:$0xf]
      %v2796 = vld [vmem:[%s2782 + $0x34] sm:$0xf]
      %v2797 = vld [vmem:[%s2782 + $0x38] sm:$0xf]
      %v2798 = vld [vmem:[%s2782 + $0x3c] sm:$0xf]
      %v2799 = vld [vmem:[%s2782 + $0x40] sm:$0xf]
      %v2800 = vld [vmem:[%s2782 + $0x44] sm:$0xf]
      %v2801 = vld [vmem:[%s2782 + $0x48] sm:$0xf]
      %v2802 = vld [vmem:[%s2782 + $0x4c] sm:$0xf]
      %v2803 = vld [vmem:[%s2782 + $0x50] sm:$0xf]
      %v2804 = vld [vmem:[%s2782 + $0x54] sm:$0xf]
      %v2805 = vld [vmem:[%s2782 + $0x58] sm:$0xf]
      %v2806 = vld [vmem:[%s2782 + $0x5c] sm:$0xf]
      %v2807 = vld [vmem:[%s2782 + $0x60] sm:$0xf]
      %v2808 = vld [vmem:[%s2782 + $0x64] sm:$0xf]
      %v2809 = vld [vmem:[%s2782 + $0x68] sm:$0xf]
      %v2810 = vld [vmem:[%s2782 + $0x6c] sm:$0xf]
      %v2811 = vld [vmem:[%s2782 + $0x70] sm:$0xf]
      %v2812 = vld [vmem:[%s2782 + $0x74] sm:$0xf]
      %v2813 = vld [vmem:[%s2782 + $0x78] sm:$0xf]
      %v2814 = vld [vmem:[%s2782 + $0x7c] sm:$0xf]
      %v2847 = vunpack.c.l.b16 %v2783
      %v2848 = vunpack.c.l.b16 %v2784
      %v2849 = vunpack.c.l.b16 %v2785
      %v2850 = vunpack.c.l.b16 %v2786
      %v2851 = vunpack.c.l.b16 %v2787
      %v2852 = vunpack.c.l.b16 %v2788
      %v2853 = vunpack.c.l.b16 %v2789
      %v2854 = vunpack.c.l.b16 %v2790
      %v2855 = vunpack.c.l.b16 %v2791
      %v2856 = vunpack.c.l.b16 %v2792
      %v2857 = vunpack.c.l.b16 %v2793
      %v2858 = vunpack.c.l.b16 %v2794
      %v2859 = vunpack.c.l.b16 %v2795
      %v2860 = vunpack.c.l.b16 %v2796
      %v2861 = vunpack.c.l.b16 %v2797
      %v2862 = vunpack.c.l.b16 %v2798
      %v2863 = vunpack.c.l.b16 %v2799
      %v2864 = vunpack.c.l.b16 %v2800
      %v2865 = vunpack.c.l.b16 %v2801
      %v2866 = vunpack.c.l.b16 %v2802
      %v2867 = vunpack.c.l.b16 %v2803
      %v2868 = vunpack.c.l.b16 %v2804
      %v2869 = vunpack.c.l.b16 %v2805
      %v2870 = vunpack.c.l.b16 %v2806
      %v2871 = vunpack.c.l.b16 %v2807
      %v2872 = vunpack.c.l.b16 %v2808
      %v2873 = vunpack.c.l.b16 %v2809
      %v2874 = vunpack.c.l.b16 %v2810
      %v2875 = vunpack.c.l.b16 %v2811
      %v2876 = vunpack.c.l.b16 %v2812
      %v2877 = vunpack.c.l.b16 %v2813
      %v2878 = vunpack.c.l.b16 %v2814
      %v2879 = vpack.c.b16 %v2848, %v2847
      %v2880 = vpack.c.b16 %v2850, %v2849
      %v2881 = vpack.c.b16 %v2852, %v2851
      %v2882 = vpack.c.b16 %v2854, %v2853
      %v2883 = vpack.c.b16 %v2856, %v2855
      %v2884 = vpack.c.b16 %v2858, %v2857
      %v2885 = vpack.c.b16 %v2860, %v2859
      %v2886 = vpack.c.b16 %v2862, %v2861
      %v2887 = vpack.c.b16 %v2864, %v2863
      %v2888 = vpack.c.b16 %v2866, %v2865
      %v2889 = vpack.c.b16 %v2868, %v2867
      %v2890 = vpack.c.b16 %v2870, %v2869
      %v2891 = vpack.c.b16 %v2872, %v2871
      %v2892 = vpack.c.b16 %v2874, %v2873
      %v2893 = vpack.c.b16 %v2876, %v2875
      %v2894 = vpack.c.b16 %v2878, %v2877
      %2911 = vmatprep.subr.bf16.mxu0 0
      %2912 = vmatpush1.bf16.msra.mxu0 %v2879
      %2913 = vmatprep.subr.bf16.mxu0 0
      %2914 = vmatpush1.bf16.msra.mxu0 %v2880
      %2915 = vmatprep.subr.bf16.mxu0 0
      %2916 = vmatpush1.bf16.msra.mxu0 %v2881
      %2917 = vmatprep.subr.bf16.mxu0 0
      %2918 = vmatpush1.bf16.msra.mxu0 %v2882
      %2919 = vmatprep.subr.bf16.mxu0 0
      %2920 = vmatpush1.bf16.msra.mxu0 %v2883
      %2921 = vmatprep.subr.bf16.mxu0 0
      %2922 = vmatpush1.bf16.msra.mxu0 %v2884
      %2923 = vmatprep.subr.bf16.mxu0 0
      %2924 = vmatpush1.bf16.msra.mxu0 %v2885
      %2925 = vmatprep.subr.bf16.mxu0 0
      %2926 = vmatpush1.bf16.msra.mxu0 %v2886
      %2927 = vmatprep.subr.bf16.mxu0 0
      %2928 = vmatpush1.bf16.msra.mxu0 %v2887
      %2929 = vmatprep.subr.bf16.mxu0 0
      %2930 = vmatpush1.bf16.msra.mxu0 %v2888
      %2931 = vmatprep.subr.bf16.mxu0 0
      %2932 = vmatpush1.bf16.msra.mxu0 %v2889
      %2933 = vmatprep.subr.bf16.mxu0 0
      %2934 = vmatpush1.bf16.msra.mxu0 %v2890
      %2935 = vmatprep.subr.bf16.mxu0 0
      %2936 = vmatpush1.bf16.msra.mxu0 %v2891
      %2937 = vmatprep.subr.bf16.mxu0 0
      %2938 = vmatpush1.bf16.msra.mxu0 %v2892
      %2939 = vmatprep.subr.bf16.mxu0 0
      %2940 = vmatpush1.bf16.msra.mxu0 %v2893
      %2941 = vmatprep.subr.bf16.mxu0 0
      %2942 = vmatpush1.bf16.msra.mxu0 %v2894
      %2943 = vmatprep.mubr.bf16.mxu0 %v2462
      %2944 = vmatmul.mubr.bf16.gmra.mrb[0].mxu0 %v2461
      %v2945 = vpop.f32.mrb[0].mxu0
      %v2946 = vadd.f32 0.0, %v2945
      %v2947 = vpop.f32.mrb[0].mxu0
      %v2948 = vpop.f32.mrb[0].mxu0
      %v2949 = vadd.f32 0.0, %v2948
      %v2950 = vpop.f32.mrb[0].mxu0
      %2951 = vmatprep.mubr.bf16.mxu0 %v2464
      %2952 = vmatmul.mubr.bf16.gmra.mrb[0].mxu0 %v2463
      %v2953 = vpop.f32.mrb[0].mxu0
      %v2954 = vadd.f32 0.0, %v2953
      %v2955 = vpop.f32.mrb[0].mxu0
      %v2956 = vpop.f32.mrb[0].mxu0
      %v2957 = vadd.f32 0.0, %v2956
      %v2958 = vpop.f32.mrb[0].mxu0
      %2959 = vmatprep.mubr.bf16.mxu0 %v2466
      %2960 = vmatmul.mubr.bf16.gmra.mrb[0].mxu0 %v2465
      %v2961 = vpop.f32.mrb[0].mxu0
      %v2962 = vadd.f32 0.0, %v2961
      %v2963 = vpop.f32.mrb[0].mxu0
      %v2964 = vpop.f32.mrb[0].mxu0
      %v2965 = vadd.f32 0.0, %v2964
      %v2966 = vpop.f32.mrb[0].mxu0
      %2967 = vmatprep.mubr.bf16.mxu0 %v2468
      %2968 = vmatmul.mubr.bf16.gmra.mrb[0].mxu0 %v2467
      %v2969 = vpop.f32.mrb[0].mxu0
      %v2970 = vadd.f32 0.0, %v2969
      %v2971 = vpop.f32.mrb[0].mxu0
      %v2972 = vpop.f32.mrb[0].mxu0
      %v2973 = vadd.f32 0.0, %v2972
      %v2974 = vpop.f32.mrb[0].mxu0
      %2975 = vmatprep.mubr.bf16.mxu0 %v2470
      %2976 = vmatmul.mubr.bf16.gmra.mrb[0].mxu0 %v2469
      %v2977 = vpop.f32.mrb[0].mxu0
      %v2978 = vadd.f32 0.0, %v2977
      %v2979 = vpop.f32.mrb[0].mxu0
      %v2980 = vpop.f32.mrb[0].mxu0
      %v2981 = vadd.f32 0.0, %v2980
      %v2982 = vpop.f32.mrb[0].mxu0
      %2983 = vmatprep.mubr.bf16.mxu0 %v2472
      %2984 = vmatmul.mubr.bf16.gmra.mrb[0].mxu0 %v2471
      %v2985 = vpop.f32.mrb[0].mxu0
      %v2986 = vadd.f32 0.0, %v2985
      %v2987 = vpop.f32.mrb[0].mxu0
      %v2988 = vpop.f32.mrb[0].mxu0
      %v2989 = vadd.f32 0.0, %v2988
      %v2990 = vpop.f32.mrb[0].mxu0
      %2991 = vmatprep.mubr.bf16.mxu0 %v2474
      %2992 = vmatmul.mubr.bf16.gmra.mrb[0].mxu0 %v2473
      %v2993 = vpop.f32.mrb[0].mxu0
      %v2994 = vadd.f32 0.0, %v2993
      %v2995 = vpop.f32.mrb[0].mxu0
      %v2996 = vpop.f32.mrb[0].mxu0
      %v2997 = vadd.f32 0.0, %v2996
      %v2998 = vpop.f32.mrb[0].mxu0
      %2999 = vmatprep.mubr.bf16.mxu0 %v2476
      %3000 = vmatmul.mubr.bf16.gmra.mrb[0].mxu0 %v2475
      %v3001 = vpop.f32.mrb[0].mxu0
      %v3002 = vadd.f32 0.0, %v3001
      %v3003 = vpop.f32.mrb[0].mxu0
      %v3004 = vpop.f32.mrb[0].mxu0
      %v3005 = vadd.f32 0.0, %v3004
      %v3006 = vpop.f32.mrb[0].mxu0
      %3007 = vmatprep.mubr.bf16.mxu0 %v2478
      %3008 = vmatmul.mubr.bf16.gmra.mrb[0].mxu0 %v2477
      %v3009 = vpop.f32.mrb[0].mxu0
      %v3010 = vadd.f32 0.0, %v3009
      %v3011 = vpop.f32.mrb[0].mxu0
      %v3012 = vpop.f32.mrb[0].mxu0
      %v3013 = vadd.f32 0.0, %v3012
      %v3014 = vpop.f32.mrb[0].mxu0
      %3015 = vmatprep.mubr.bf16.mxu0 %v2480
      %3016 = vmatmul.mubr.bf16.gmra.mrb[0].mxu0 %v2479
      %v3017 = vpop.f32.mrb[0].mxu0
      %v3018 = vadd.f32 0.0, %v3017
      %v3019 = vpop.f32.mrb[0].mxu0
      %v3020 = vpop.f32.mrb[0].mxu0
      %v3021 = vadd.f32 0.0, %v3020
      %v3022 = vpop.f32.mrb[0].mxu0
      %3023 = vmatprep.mubr.bf16.mxu0 %v2482
      %3024 = vmatmul.mubr.bf16.gmra.mrb[0].mxu0 %v2481
      %v3025 = vpop.f32.mrb[0].mxu0
      %v3026 = vadd.f32 0.0, %v3025
      %v3027 = vpop.f32.mrb[0].mxu0
      %v3028 = vpop.f32.mrb[0].mxu0
      %v3029 = vadd.f32 0.0, %v3028
      %v3030 = vpop.f32.mrb[0].mxu0
      %3031 = vmatprep.mubr.bf16.mxu0 %v2484
      %3032 = vmatmul.mubr.bf16.gmra.mrb[0].mxu0 %v2483
      %v3033 = vpop.f32.mrb[0].mxu0
      %v3034 = vadd.f32 0.0, %v3033
      %v3035 = vpop.f32.mrb[0].mxu0
      %v3036 = vpop.f32.mrb[0].mxu0
      %v3037 = vadd.f32 0.0, %v3036
      %v3038 = vpop.f32.mrb[0].mxu0
      %3039 = vmatprep.mubr.bf16.mxu0 %v2486
      %3040 = vmatmul.mubr.bf16.gmra.mrb[0].mxu0 %v2485
      %v3041 = vpop.f32.mrb[0].mxu0
      %v3042 = vadd.f32 0.0, %v3041
      %v3043 = vpop.f32.mrb[0].mxu0
      %v3044 = vpop.f32.mrb[0].mxu0
      %v3045 = vadd.f32 0.0, %v3044
      %v3046 = vpop.f32.mrb[0].mxu0
      %3047 = vmatprep.mubr.bf16.mxu0 %v2488
      %3048 = vmatmul.mubr.bf16.gmra.mrb[0].mxu0 %v2487
      %v3049 = vpop.f32.mrb[0].mxu0
      %v3050 = vadd.f32 0.0, %v3049
      %v3051 = vpop.f32.mrb[0].mxu0
      %v3052 = vpop.f32.mrb[0].mxu0
      %v3053 = vadd.f32 0.0, %v3052
      %v3054 = vpop.f32.mrb[0].mxu0
      %3055 = vmatprep.mubr.bf16.mxu0 %v2490
      %3056 = vmatmul.mubr.bf16.gmra.mrb[0].mxu0 %v2489
      %v3057 = vpop.f32.mrb[0].mxu0
      %v3058 = vadd.f32 0.0, %v3057
      %v3059 = vpop.f32.mrb[0].mxu0
      %v3060 = vpop.f32.mrb[0].mxu0
      %v3061 = vadd.f32 0.0, %v3060
      %v3062 = vpop.f32.mrb[0].mxu0
      %3063 = vmatprep.mubr.bf16.mxu0 %v2492
      %3064 = vmatmul.mubr.bf16.gmra.mrb[0].mxu0 %v2491
      %v3065 = vpop.f32.mrb[0].mxu0
      %v3066 = vadd.f32 0.0, %v3065
      %v3067 = vpop.f32.mrb[0].mxu0
      %v3068 = vpop.f32.mrb[0].mxu0
      %v3069 = vadd.f32 0.0, %v3068
      %v3070 = vpop.f32.mrb[0].mxu0
      %3071 = vdwg.mxu0
      %v3072 = vmax.f32 %v2656, %v2946
      %v3073 = vmax.f32 %v2659, %v2949
      %v3074 = vmax.f32 %v2664, %v2954
      %v3075 = vmax.f32 %v2667, %v2957
      %v3076 = vmax.f32 %v2672, %v2962
      %v3077 = vmax.f32 %v2675, %v2965
      %v3078 = vmax.f32 %v2680, %v2970
      %v3079 = vmax.f32 %v2683, %v2973
      %v3080 = vmax.f32 %v2688, %v2978
      %v3081 = vmax.f32 %v2691, %v2981
      %v3082 = vmax.f32 %v2696, %v2986
      %v3083 = vmax.f32 %v2699, %v2989
      %v3084 = vmax.f32 %v2704, %v2994
      %v3085 = vmax.f32 %v2707, %v2997
      %v3086 = vmax.f32 %v2712, %v3002
      %v3087 = vmax.f32 %v2715, %v3005
      %v3088 = vmax.f32 %v2720, %v3010
      %v3089 = vmax.f32 %v2723, %v3013
      %v3090 = vmax.f32 %v2728, %v3018
      %v3091 = vmax.f32 %v2731, %v3021
      %v3092 = vmax.f32 %v2736, %v3026
      %v3093 = vmax.f32 %v2739, %v3029
      %v3094 = vmax.f32 %v2744, %v3034
      %v3095 = vmax.f32 %v2747, %v3037
      %v3096 = vmax.f32 %v2752, %v3042
      %v3097 = vmax.f32 %v2755, %v3045
      %v3098 = vmax.f32 %v2760, %v3050
      %v3099 = vmax.f32 %v2763, %v3053
      %v3100 = vmax.f32 %v2768, %v3058
      %v3101 = vmax.f32 %v2771, %v3061
      %v3102 = vmax.f32 %v2776, %v3066
      %v3103 = vmax.f32 %v2779, %v3069
      %s3104 = scalar_lea.vmem %s3, 256
      %v3105 = vld [vmem:[%s3104] sm:$0xf]
      %v3106 = vld [vmem:[%s3104 + $0x4] sm:$0xf]
      %v3107 = vld [vmem:[%s3104 + $0x8] sm:$0xf]
      %v3108 = vld [vmem:[%s3104 + $0xc] sm:$0xf]
      %v3109 = vld [vmem:[%s3104 + $0x10] sm:$0xf]
      %v3110 = vld [vmem:[%s3104 + $0x14] sm:$0xf]
      %v3111 = vld [vmem:[%s3104 + $0x18] sm:$0xf]
      %v3112 = vld [vmem:[%s3104 + $0x1c] sm:$0xf]
      %v3113 = vld [vmem:[%s3104 + $0x20] sm:$0xf]
      %v3114 = vld [vmem:[%s3104 + $0x24] sm:$0xf]
      %v3115 = vld [vmem:[%s3104 + $0x28] sm:$0xf]
      %v3116 = vld [vmem:[%s3104 + $0x2c] sm:$0xf]
      %v3117 = vld [vmem:[%s3104 + $0x30] sm:$0xf]
      %v3118 = vld [vmem:[%s3104 + $0x34] sm:$0xf]
      %v3119 = vld [vmem:[%s3104 + $0x38] sm:$0xf]
      %v3120 = vld [vmem:[%s3104 + $0x3c] sm:$0xf]
      %v3121 = vld [vmem:[%s3104 + $0x40] sm:$0xf]
      %v3122 = vld [vmem:[%s3104 + $0x44] sm:$0xf]
      %v3123 = vld [vmem:[%s3104 + $0x48] sm:$0xf]
      %v3124 = vld [vmem:[%s3104 + $0x4c] sm:$0xf]
      %v3125 = vld [vmem:[%s3104 + $0x50] sm:$0xf]
      %v3126 = vld [vmem:[%s3104 + $0x54] sm:$0xf]
      %v3127 = vld [vmem:[%s3104 + $0x58] sm:$0xf]
      %v3128 = vld [vmem:[%s3104 + $0x5c] sm:$0xf]
      %v3129 = vld [vmem:[%s3104 + $0x60] sm:$0xf]
      %v3130 = vld [vmem:[%s3104 + $0x64] sm:$0xf]
      %v3131 = vld [vmem:[%s3104 + $0x68] sm:$0xf]
      %v3132 = vld [vmem:[%s3104 + $0x6c] sm:$0xf]
      %v3133 = vld [vmem:[%s3104 + $0x70] sm:$0xf]
      %v3134 = vld [vmem:[%s3104 + $0x74] sm:$0xf]
      %v3135 = vld [vmem:[%s3104 + $0x78] sm:$0xf]
      %v3136 = vld [vmem:[%s3104 + $0x7c] sm:$0xf]
      %v3169 = vunpack.c.l.b16 %v3105
      %v3170 = vunpack.c.l.b16 %v3106
      %v3171 = vunpack.c.l.b16 %v3107
      %v3172 = vunpack.c.l.b16 %v3108
      %v3173 = vunpack.c.l.b16 %v3109
      %v3174 = vunpack.c.l.b16 %v3110
      %v3175 = vunpack.c.l.b16 %v3111
      %v3176 = vunpack.c.l.b16 %v3112
      %v3177 = vunpack.c.l.b16 %v3113
      %v3178 = vunpack.c.l.b16 %v3114
      %v3179 = vunpack.c.l.b16 %v3115
      %v3180 = vunpack.c.l.b16 %v3116
      %v3181 = vunpack.c.l.b16 %v3117
      %v3182 = vunpack.c.l.b16 %v3118
      %v3183 = vunpack.c.l.b16 %v3119
      %v3184 = vunpack.c.l.b16 %v3120
      %v3185 = vunpack.c.l.b16 %v3121
      %v3186 = vunpack.c.l.b16 %v3122
      %v3187 = vunpack.c.l.b16 %v3123
      %v3188 = vunpack.c.l.b16 %v3124
      %v3189 = vunpack.c.l.b16 %v3125
      %v3190 = vunpack.c.l.b16 %v3126
      %v3191 = vunpack.c.l.b16 %v3127
      %v3192 = vunpack.c.l.b16 %v3128
      %v3193 = vunpack.c.l.b16 %v3129
      %v3194 = vunpack.c.l.b16 %v3130
      %v3195 = vunpack.c.l.b16 %v3131
      %v3196 = vunpack.c.l.b16 %v3132
      %v3197 = vunpack.c.l.b16 %v3133
      %v3198 = vunpack.c.l.b16 %v3134
      %v3199 = vunpack.c.l.b16 %v3135
      %v3200 = vunpack.c.l.b16 %v3136
      %v3201 = vpack.c.b16 %v3170, %v3169
      %v3202 = vpack.c.b16 %v3172, %v3171
      %v3203 = vpack.c.b16 %v3174, %v3173
      %v3204 = vpack.c.b16 %v3176, %v3175
      %v3205 = vpack.c.b16 %v3178, %v3177
      %v3206 = vpack.c.b16 %v3180, %v3179
      %v3207 = vpack.c.b16 %v3182, %v3181
      %v3208 = vpack.c.b16 %v3184, %v3183
      %v3209 = vpack.c.b16 %v3186, %v3185
      %v3210 = vpack.c.b16 %v3188, %v3187
      %v3211 = vpack.c.b16 %v3190, %v3189
      %v3212 = vpack.c.b16 %v3192, %v3191
      %v3213 = vpack.c.b16 %v3194, %v3193
      %v3214 = vpack.c.b16 %v3196, %v3195
      %v3215 = vpack.c.b16 %v3198, %v3197
      %v3216 = vpack.c.b16 %v3200, %v3199
      %3233 = vmatprep.subr.bf16.mxu0 0
      %3234 = vmatpush1.bf16.msra.mxu0 %v3201
      %3235 = vmatprep.subr.bf16.mxu0 0
      %3236 = vmatpush1.bf16.msra.mxu0 %v3202
      %3237 = vmatprep.subr.bf16.mxu0 0
      %3238 = vmatpush1.bf16.msra.mxu0 %v3203
      %3239 = vmatprep.subr.bf16.mxu0 0
      %3240 = vmatpush1.bf16.msra.mxu0 %v3204
      %3241 = vmatprep.subr.bf16.mxu0 0
      %3242 = vmatpush1.bf16.msra.mxu0 %v3205
      %3243 = vmatprep.subr.bf16.mxu0 0
      %3244 = vmatpush1.bf16.msra.mxu0 %v3206
      %3245 = vmatprep.subr.bf16.mxu0 0
      %3246 = vmatpush1.bf16.msra.mxu0 %v3207
      %3247 = vmatprep.subr.bf16.mxu0 0
      %3248 = vmatpush1.bf16.msra.mxu0 %v3208
      %3249 = vmatprep.subr.bf16.mxu0 0
      %3250 = vmatpush1.bf16.msra.mxu0 %v3209
      %3251 = vmatprep.subr.bf16.mxu0 0
      %3252 = vmatpush1.bf16.msra.mxu0 %v3210
      %3253 = vmatprep.subr.bf16.mxu0 0
      %3254 = vmatpush1.bf16.msra.mxu0 %v3211
      %3255 = vmatprep.subr.bf16.mxu0 0
      %3256 = vmatpush1.bf16.msra.mxu0 %v3212
      %3257 = vmatprep.subr.bf16.mxu0 0
      %3258 = vmatpush1.bf16.msra.mxu0 %v3213
      %3259 = vmatprep.subr.bf16.mxu0 0
      %3260 = vmatpush1.bf16.msra.mxu0 %v3214
      %3261 = vmatprep.subr.bf16.mxu0 0
      %3262 = vmatpush1.bf16.msra.mxu0 %v3215
      %3263 = vmatprep.subr.bf16.mxu0 0
      %3264 = vmatpush1.bf16.msra.mxu0 %v3216
      %3265 = vmatprep.mubr.bf16.mxu0 %v2462
      %3266 = vmatmul.mubr.bf16.gmra.mrb[0].mxu0 %v2461
      %v3267 = vpop.f32.mrb[0].mxu0
      %v3268 = vadd.f32 0.0, %v3267
      %v3269 = vpop.f32.mrb[0].mxu0
      %v3270 = vpop.f32.mrb[0].mxu0
      %v3271 = vadd.f32 0.0, %v3270
      %v3272 = vpop.f32.mrb[0].mxu0
      %3273 = vmatprep.mubr.bf16.mxu0 %v2464
      %3274 = vmatmul.mubr.bf16.gmra.mrb[0].mxu0 %v2463
      %v3275 = vpop.f32.mrb[0].mxu0
      %v3276 = vadd.f32 0.0, %v3275
      %v3277 = vpop.f32.mrb[0].mxu0
      %v3278 = vpop.f32.mrb[0].mxu0
      %v3279 = vadd.f32 0.0, %v3278
      %v3280 = vpop.f32.mrb[0].mxu0
      %3281 = vmatprep.mubr.bf16.mxu0 %v2466
      %3282 = vmatmul.mubr.bf16.gmra.mrb[0].mxu0 %v2465
      %v3283 = vpop.f32.mrb[0].mxu0
      %v3284 = vadd.f32 0.0, %v3283
      %v3285 = vpop.f32.mrb[0].mxu0
      %v3286 = vpop.f32.mrb[0].mxu0
      %v3287 = vadd.f32 0.0, %v3286
      %v3288 = vpop.f32.mrb[0].mxu0
      %3289 = vmatprep.mubr.bf16.mxu0 %v2468
      %3290 = vmatmul.mubr.bf16.gmra.mrb[0].mxu0 %v2467
      %v3291 = vpop.f32.mrb[0].mxu0
      %v3292 = vadd.f32 0.0, %v3291
      %v3293 = vpop.f32.mrb[0].mxu0
      %v3294 = vpop.f32.mrb[0].mxu0
      %v3295 = vadd.f32 0.0, %v3294
      %v3296 = vpop.f32.mrb[0].mxu0
      %3297 = vmatprep.mubr.bf16.mxu0 %v2470
      %3298 = vmatmul.mubr.bf16.gmra.mrb[0].mxu0 %v2469
      %v3299 = vpop.f32.mrb[0].mxu0
      %v3300 = vadd.f32 0.0, %v3299
      %v3301 = vpop.f32.mrb[0].mxu0
      %v3302 = vpop.f32.mrb[0].mxu0
      %v3303 = vadd.f32 0.0, %v3302
      %v3304 = vpop.f32.mrb[0].mxu0
      %3305 = vmatprep.mubr.bf16.mxu0 %v2472
      %3306 = vmatmul.mubr.bf16.gmra.mrb[0].mxu0 %v2471
      %v3307 = vpop.f32.mrb[0].mxu0
      %v3308 = vadd.f32 0.0, %v3307
      %v3309 = vpop.f32.mrb[0].mxu0
      %v3310 = vpop.f32.mrb[0].mxu0
      %v3311 = vadd.f32 0.0, %v3310
      %v3312 = vpop.f32.mrb[0].mxu0
      %3313 = vmatprep.mubr.bf16.mxu0 %v2474
      %3314 = vmatmul.mubr.bf16.gmra.mrb[0].mxu0 %v2473
      %v3315 = vpop.f32.mrb[0].mxu0
      %v3316 = vadd.f32 0.0, %v3315
      %v3317 = vpop.f32.mrb[0].mxu0
      %v3318 = vpop.f32.mrb[0].mxu0
      %v3319 = vadd.f32 0.0, %v3318
      %v3320 = vpop.f32.mrb[0].mxu0
      %3321 = vmatprep.mubr.bf16.mxu0 %v2476
      %3322 = vmatmul.mubr.bf16.gmra.mrb[0].mxu0 %v2475
      %v3323 = vpop.f32.mrb[0].mxu0
      %v3324 = vadd.f32 0.0, %v3323
      %v3325 = vpop.f32.mrb[0].mxu0
      %v3326 = vpop.f32.mrb[0].mxu0
      %v3327 = vadd.f32 0.0, %v3326
      %v3328 = vpop.f32.mrb[0].mxu0
      %3329 = vmatprep.mubr.bf16.mxu0 %v2478
      %3330 = vmatmul.mubr.bf16.gmra.mrb[0].mxu0 %v2477
      %v3331 = vpop.f32.mrb[0].mxu0
      %v3332 = vadd.f32 0.0, %v3331
      %v3333 = vpop.f32.mrb[0].mxu0
      %v3334 = vpop.f32.mrb[0].mxu0
      %v3335 = vadd.f32 0.0, %v3334
      %v3336 = vpop.f32.mrb[0].mxu0
      %3337 = vmatprep.mubr.bf16.mxu0 %v2480
      %3338 = vmatmul.mubr.bf16.gmra.mrb[0].mxu0 %v2479
      %v3339 = vpop.f32.mrb[0].mxu0
      %v3340 = vadd.f32 0.0, %v3339
      %v3341 = vpop.f32.mrb[0].mxu0
      %v3342 = vpop.f32.mrb[0].mxu0
      %v3343 = vadd.f32 0.0, %v3342
      %v3344 = vpop.f32.mrb[0].mxu0
      %3345 = vmatprep.mubr.bf16.mxu0 %v2482
      %3346 = vmatmul.mubr.bf16.gmra.mrb[0].mxu0 %v2481
      %v3347 = vpop.f32.mrb[0].mxu0
      %v3348 = vadd.f32 0.0, %v3347
      %v3349 = vpop.f32.mrb[0].mxu0
      %v3350 = vpop.f32.mrb[0].mxu0
      %v3351 = vadd.f32 0.0, %v3350
      %v3352 = vpop.f32.mrb[0].mxu0
      %3353 = vmatprep.mubr.bf16.mxu0 %v2484
      %3354 = vmatmul.mubr.bf16.gmra.mrb[0].mxu0 %v2483
      %v3355 = vpop.f32.mrb[0].mxu0
      %v3356 = vadd.f32 0.0, %v3355
      %v3357 = vpop.f32.mrb[0].mxu0
      %v3358 = vpop.f32.mrb[0].mxu0
      %v3359 = vadd.f32 0.0, %v3358
      %v3360 = vpop.f32.mrb[0].mxu0
      %3361 = vmatprep.mubr.bf16.mxu0 %v2486
      %3362 = vmatmul.mubr.bf16.gmra.mrb[0].mxu0 %v2485
      %v3363 = vpop.f32.mrb[0].mxu0
      %v3364 = vadd.f32 0.0, %v3363
      %v3365 = vpop.f32.mrb[0].mxu0
      %v3366 = vpop.f32.mrb[0].mxu0
      %v3367 = vadd.f32 0.0, %v3366
      %v3368 = vpop.f32.mrb[0].mxu0
      %3369 = vmatprep.mubr.bf16.mxu0 %v2488
      %3370 = vmatmul.mubr.bf16.gmra.mrb[0].mxu0 %v2487
      %v3371 = vpop.f32.mrb[0].mxu0
      %v3372 = vadd.f32 0.0, %v3371
      %v3373 = vpop.f32.mrb[0].mxu0
      %v3374 = vpop.f32.mrb[0].mxu0
      %v3375 = vadd.f32 0.0, %v3374
      %v3376 = vpop.f32.mrb[0].mxu0
      %3377 = vmatprep.mubr.bf16.mxu0 %v2490
      %3378 = vmatmul.mubr.bf16.gmra.mrb[0].mxu0 %v2489
      %v3379 = vpop.f32.mrb[0].mxu0
      %v3380 = vadd.f32 0.0, %v3379
      %v3381 = vpop.f32.mrb[0].mxu0
      %v3382 = vpop.f32.mrb[0].mxu0
      %v3383 = vadd.f32 0.0, %v3382
      %v3384 = vpop.f32.mrb[0].mxu0
      %3385 = vmatprep.mubr.bf16.mxu0 %v2492
      %3386 = vmatmul.mubr.bf16.gmra.mrb[0].mxu0 %v2491
      %v3387 = vpop.f32.mrb[0].mxu0
      %v3388 = vadd.f32 0.0, %v3387
      %v3389 = vpop.f32.mrb[0].mxu0
      %v3390 = vpop.f32.mrb[0].mxu0
      %v3391 = vadd.f32 0.0, %v3390
      %v3392 = vpop.f32.mrb[0].mxu0
      %3393 = vdwg.mxu0
      %v3394 = vmax.f32 %v3072, %v3268
      %v3395 = vmax.f32 %v3073, %v3271
      %v3396 = vmax.f32 %v3074, %v3276
      %v3397 = vmax.f32 %v3075, %v3279
      %v3398 = vmax.f32 %v3076, %v3284
      %v3399 = vmax.f32 %v3077, %v3287
      %v3400 = vmax.f32 %v3078, %v3292
      %v3401 = vmax.f32 %v3079, %v3295
      %v3402 = vmax.f32 %v3080, %v3300
      %v3403 = vmax.f32 %v3081, %v3303
      %v3404 = vmax.f32 %v3082, %v3308
      %v3405 = vmax.f32 %v3083, %v3311
      %v3406 = vmax.f32 %v3084, %v3316
      %v3407 = vmax.f32 %v3085, %v3319
      %v3408 = vmax.f32 %v3086, %v3324
      %v3409 = vmax.f32 %v3087, %v3327
      %v3410 = vmax.f32 %v3088, %v3332
      %v3411 = vmax.f32 %v3089, %v3335
      %v3412 = vmax.f32 %v3090, %v3340
      %v3413 = vmax.f32 %v3091, %v3343
      %v3414 = vmax.f32 %v3092, %v3348
      %v3415 = vmax.f32 %v3093, %v3351
      %v3416 = vmax.f32 %v3094, %v3356
      %v3417 = vmax.f32 %v3095, %v3359
      %v3418 = vmax.f32 %v3096, %v3364
      %v3419 = vmax.f32 %v3097, %v3367
      %v3420 = vmax.f32 %v3098, %v3372
      %v3421 = vmax.f32 %v3099, %v3375
      %v3422 = vmax.f32 %v3100, %v3380
      %v3423 = vmax.f32 %v3101, %v3383
      %v3424 = vmax.f32 %v3102, %v3388
      %v3425 = vmax.f32 %v3103, %v3391
      %s3426 = scalar_lea.vmem %s3, 384
      %v3427 = vld [vmem:[%s3426] sm:$0xf]
      %v3428 = vld [vmem:[%s3426 + $0x4] sm:$0xf]
      %v3429 = vld [vmem:[%s3426 + $0x8] sm:$0xf]
      %v3430 = vld [vmem:[%s3426 + $0xc] sm:$0xf]
      %v3431 = vld [vmem:[%s3426 + $0x10] sm:$0xf]
      %v3432 = vld [vmem:[%s3426 + $0x14] sm:$0xf]
      %v3433 = vld [vmem:[%s3426 + $0x18] sm:$0xf]
      %v3434 = vld [vmem:[%s3426 + $0x1c] sm:$0xf]
      %v3435 = vld [vmem:[%s3426 + $0x20] sm:$0xf]
      %v3436 = vld [vmem:[%s3426 + $0x24] sm:$0xf]
      %v3437 = vld [vmem:[%s3426 + $0x28] sm:$0xf]
      %v3438 = vld [vmem:[%s3426 + $0x2c] sm:$0xf]
      %v3439 = vld [vmem:[%s3426 + $0x30] sm:$0xf]
      %v3440 = vld [vmem:[%s3426 + $0x34] sm:$0xf]
      %v3441 = vld [vmem:[%s3426 + $0x38] sm:$0xf]
      %v3442 = vld [vmem:[%s3426 + $0x3c] sm:$0xf]
      %v3443 = vld [vmem:[%s3426 + $0x40] sm:$0xf]
      %v3444 = vld [vmem:[%s3426 + $0x44] sm:$0xf]
      %v3445 = vld [vmem:[%s3426 + $0x48] sm:$0xf]
      %v3446 = vld [vmem:[%s3426 + $0x4c] sm:$0xf]
      %v3447 = vld [vmem:[%s3426 + $0x50] sm:$0xf]
      %v3448 = vld [vmem:[%s3426 + $0x54] sm:$0xf]
      %v3449 = vld [vmem:[%s3426 + $0x58] sm:$0xf]
      %v3450 = vld [vmem:[%s3426 + $0x5c] sm:$0xf]
      %v3451 = vld [vmem:[%s3426 + $0x60] sm:$0xf]
      %v3452 = vld [vmem:[%s3426 + $0x64] sm:$0xf]
      %v3453 = vld [vmem:[%s3426 + $0x68] sm:$0xf]
      %v3454 = vld [vmem:[%s3426 + $0x6c] sm:$0xf]
      %v3455 = vld [vmem:[%s3426 + $0x70] sm:$0xf]
      %v3456 = vld [vmem:[%s3426 + $0x74] sm:$0xf]
      %v3457 = vld [vmem:[%s3426 + $0x78] sm:$0xf]
      %v3458 = vld [vmem:[%s3426 + $0x7c] sm:$0xf]
      %v3491 = vunpack.c.l.b16 %v3427
      %v3492 = vunpack.c.l.b16 %v3428
      %v3493 = vunpack.c.l.b16 %v3429
      %v3494 = vunpack.c.l.b16 %v3430
      %v3495 = vunpack.c.l.b16 %v3431
      %v3496 = vunpack.c.l.b16 %v3432
      %v3497 = vunpack.c.l.b16 %v3433
      %v3498 = vunpack.c.l.b16 %v3434
      %v3499 = vunpack.c.l.b16 %v3435
      %v3500 = vunpack.c.l.b16 %v3436
      %v3501 = vunpack.c.l.b16 %v3437
      %v3502 = vunpack.c.l.b16 %v3438
      %v3503 = vunpack.c.l.b16 %v3439
      %v3504 = vunpack.c.l.b16 %v3440
      %v3505 = vunpack.c.l.b16 %v3441
      %v3506 = vunpack.c.l.b16 %v3442
      %v3507 = vunpack.c.l.b16 %v3443
      %v3508 = vunpack.c.l.b16 %v3444
      %v3509 = vunpack.c.l.b16 %v3445
      %v3510 = vunpack.c.l.b16 %v3446
      %v3511 = vunpack.c.l.b16 %v3447
      %v3512 = vunpack.c.l.b16 %v3448
      %v3513 = vunpack.c.l.b16 %v3449
      %v3514 = vunpack.c.l.b16 %v3450
      %v3515 = vunpack.c.l.b16 %v3451
      %v3516 = vunpack.c.l.b16 %v3452
      %v3517 = vunpack.c.l.b16 %v3453
      %v3518 = vunpack.c.l.b16 %v3454
      %v3519 = vunpack.c.l.b16 %v3455
      %v3520 = vunpack.c.l.b16 %v3456
      %v3521 = vunpack.c.l.b16 %v3457
      %v3522 = vunpack.c.l.b16 %v3458
      %v3523 = vpack.c.b16 %v3492, %v3491
      %v3524 = vpack.c.b16 %v3494, %v3493
      %v3525 = vpack.c.b16 %v3496, %v3495
      %v3526 = vpack.c.b16 %v3498, %v3497
      %v3527 = vpack.c.b16 %v3500, %v3499
      %v3528 = vpack.c.b16 %v3502, %v3501
      %v3529 = vpack.c.b16 %v3504, %v3503
      %v3530 = vpack.c.b16 %v3506, %v3505
      %v3531 = vpack.c.b16 %v3508, %v3507
      %v3532 = vpack.c.b16 %v3510, %v3509
      %v3533 = vpack.c.b16 %v3512, %v3511
      %v3534 = vpack.c.b16 %v3514, %v3513
      %v3535 = vpack.c.b16 %v3516, %v3515
      %v3536 = vpack.c.b16 %v3518, %v3517
      %v3537 = vpack.c.b16 %v3520, %v3519
      %v3538 = vpack.c.b16 %v3522, %v3521
      %3555 = vmatprep.subr.bf16.mxu0 0
      %3556 = vmatpush1.bf16.msra.mxu0 %v3523
      %3557 = vmatprep.subr.bf16.mxu0 0
      %3558 = vmatpush1.bf16.msra.mxu0 %v3524
      %3559 = vmatprep.subr.bf16.mxu0 0
      %3560 = vmatpush1.bf16.msra.mxu0 %v3525
      %3561 = vmatprep.subr.bf16.mxu0 0
      %3562 = vmatpush1.bf16.msra.mxu0 %v3526
      %3563 = vmatprep.subr.bf16.mxu0 0
      %3564 = vmatpush1.bf16.msra.mxu0 %v3527
      %3565 = vmatprep.subr.bf16.mxu0 0
      %3566 = vmatpush1.bf16.msra.mxu0 %v3528
      %3567 = vmatprep.subr.bf16.mxu0 0
      %3568 = vmatpush1.bf16.msra.mxu0 %v3529
      %3569 = vmatprep.subr.bf16.mxu0 0
      %3570 = vmatpush1.bf16.msra.mxu0 %v3530
      %3571 = vmatprep.subr.bf16.mxu0 0
      %3572 = vmatpush1.bf16.msra.mxu0 %v3531
      %3573 = vmatprep.subr.bf16.mxu0 0
      %3574 = vmatpush1.bf16.msra.mxu0 %v3532
      %3575 = vmatprep.subr.bf16.mxu0 0
      %3576 = vmatpush1.bf16.msra.mxu0 %v3533
      %3577 = vmatprep.subr.bf16.mxu0 0
      %3578 = vmatpush1.bf16.msra.mxu0 %v3534
      %3579 = vmatprep.subr.bf16.mxu0 0
      %3580 = vmatpush1.bf16.msra.mxu0 %v3535
      %3581 = vmatprep.subr.bf16.mxu0 0
      %3582 = vmatpush1.bf16.msra.mxu0 %v3536
      %3583 = vmatprep.subr.bf16.mxu0 0
      %3584 = vmatpush1.bf16.msra.mxu0 %v3537
      %3585 = vmatprep.subr.bf16.mxu0 0
      %3586 = vmatpush1.bf16.msra.mxu0 %v3538
      %3587 = vmatprep.mubr.bf16.mxu0 %v2462
      %3588 = vmatmul.mubr.bf16.gmra.mrb[0].mxu0 %v2461
      %v3589 = vpop.f32.mrb[0].mxu0
      %v3590 = vadd.f32 0.0, %v3589
      %v3591 = vpop.f32.mrb[0].mxu0
      %v3592 = vpop.f32.mrb[0].mxu0
      %v3593 = vadd.f32 0.0, %v3592
      %v3594 = vpop.f32.mrb[0].mxu0
      %3595 = vmatprep.mubr.bf16.mxu0 %v2464
      %3596 = vmatmul.mubr.bf16.gmra.mrb[0].mxu0 %v2463
      %v3597 = vpop.f32.mrb[0].mxu0
      %v3598 = vadd.f32 0.0, %v3597
      %v3599 = vpop.f32.mrb[0].mxu0
      %v3600 = vpop.f32.mrb[0].mxu0
      %v3601 = vadd.f32 0.0, %v3600
      %v3602 = vpop.f32.mrb[0].mxu0
      %3603 = vmatprep.mubr.bf16.mxu0 %v2466
      %3604 = vmatmul.mubr.bf16.gmra.mrb[0].mxu0 %v2465
      %v3605 = vpop.f32.mrb[0].mxu0
      %v3606 = vadd.f32 0.0, %v3605
      %v3607 = vpop.f32.mrb[0].mxu0
      %v3608 = vpop.f32.mrb[0].mxu0
      %v3609 = vadd.f32 0.0, %v3608
      %v3610 = vpop.f32.mrb[0].mxu0
      %3611 = vmatprep.mubr.bf16.mxu0 %v2468
      %3612 = vmatmul.mubr.bf16.gmra.mrb[0].mxu0 %v2467
      %v3613 = vpop.f32.mrb[0].mxu0
      %v3614 = vadd.f32 0.0, %v3613
      %v3615 = vpop.f32.mrb[0].mxu0
      %v3616 = vpop.f32.mrb[0].mxu0
      %v3617 = vadd.f32 0.0, %v3616
      %v3618 = vpop.f32.mrb[0].mxu0
      %3619 = vmatprep.mubr.bf16.mxu0 %v2470
      %3620 = vmatmul.mubr.bf16.gmra.mrb[0].mxu0 %v2469
      %v3621 = vpop.f32.mrb[0].mxu0
      %v3622 = vadd.f32 0.0, %v3621
      %v3623 = vpop.f32.mrb[0].mxu0
      %v3624 = vpop.f32.mrb[0].mxu0
      %v3625 = vadd.f32 0.0, %v3624
      %v3626 = vpop.f32.mrb[0].mxu0
      %3627 = vmatprep.mubr.bf16.mxu0 %v2472
      %3628 = vmatmul.mubr.bf16.gmra.mrb[0].mxu0 %v2471
      %v3629 = vpop.f32.mrb[0].mxu0
      %v3630 = vadd.f32 0.0, %v3629
      %v3631 = vpop.f32.mrb[0].mxu0
      %v3632 = vpop.f32.mrb[0].mxu0
      %v3633 = vadd.f32 0.0, %v3632
      %v3634 = vpop.f32.mrb[0].mxu0
      %3635 = vmatprep.mubr.bf16.mxu0 %v2474
      %3636 = vmatmul.mubr.bf16.gmra.mrb[0].mxu0 %v2473
      %v3637 = vpop.f32.mrb[0].mxu0
      %v3638 = vadd.f32 0.0, %v3637
      %v3639 = vpop.f32.mrb[0].mxu0
      %v3640 = vpop.f32.mrb[0].mxu0
      %v3641 = vadd.f32 0.0, %v3640
      %v3642 = vpop.f32.mrb[0].mxu0
      %3643 = vmatprep.mubr.bf16.mxu0 %v2476
      %3644 = vmatmul.mubr.bf16.gmra.mrb[0].mxu0 %v2475
      %v3645 = vpop.f32.mrb[0].mxu0
      %v3646 = vadd.f32 0.0, %v3645
      %v3647 = vpop.f32.mrb[0].mxu0
      %v3648 = vpop.f32.mrb[0].mxu0
      %v3649 = vadd.f32 0.0, %v3648
      %v3650 = vpop.f32.mrb[0].mxu0
      %3651 = vmatprep.mubr.bf16.mxu0 %v2478
      %3652 = vmatmul.mubr.bf16.gmra.mrb[0].mxu0 %v2477
      %v3653 = vpop.f32.mrb[0].mxu0
      %v3654 = vadd.f32 0.0, %v3653
      %v3655 = vpop.f32.mrb[0].mxu0
      %v3656 = vpop.f32.mrb[0].mxu0
      %v3657 = vadd.f32 0.0, %v3656
      %v3658 = vpop.f32.mrb[0].mxu0
      %3659 = vmatprep.mubr.bf16.mxu0 %v2480
      %3660 = vmatmul.mubr.bf16.gmra.mrb[0].mxu0 %v2479
      %v3661 = vpop.f32.mrb[0].mxu0
      %v3662 = vadd.f32 0.0, %v3661
      %v3663 = vpop.f32.mrb[0].mxu0
      %v3664 = vpop.f32.mrb[0].mxu0
      %v3665 = vadd.f32 0.0, %v3664
      %v3666 = vpop.f32.mrb[0].mxu0
      %3667 = vmatprep.mubr.bf16.mxu0 %v2482
      %3668 = vmatmul.mubr.bf16.gmra.mrb[0].mxu0 %v2481
      %v3669 = vpop.f32.mrb[0].mxu0
      %v3670 = vadd.f32 0.0, %v3669
      %v3671 = vpop.f32.mrb[0].mxu0
      %v3672 = vpop.f32.mrb[0].mxu0
      %v3673 = vadd.f32 0.0, %v3672
      %v3674 = vpop.f32.mrb[0].mxu0
      %3675 = vmatprep.mubr.bf16.mxu0 %v2484
      %3676 = vmatmul.mubr.bf16.gmra.mrb[0].mxu0 %v2483
      %v3677 = vpop.f32.mrb[0].mxu0
      %v3678 = vadd.f32 0.0, %v3677
      %v3679 = vpop.f32.mrb[0].mxu0
      %v3680 = vpop.f32.mrb[0].mxu0
      %v3681 = vadd.f32 0.0, %v3680
      %v3682 = vpop.f32.mrb[0].mxu0
      %3683 = vmatprep.mubr.bf16.mxu0 %v2486
      %3684 = vmatmul.mubr.bf16.gmra.mrb[0].mxu0 %v2485
      %v3685 = vpop.f32.mrb[0].mxu0
      %v3686 = vadd.f32 0.0, %v3685
      %v3687 = vpop.f32.mrb[0].mxu0
      %v3688 = vpop.f32.mrb[0].mxu0
      %v3689 = vadd.f32 0.0, %v3688
      %v3690 = vpop.f32.mrb[0].mxu0
      %3691 = vmatprep.mubr.bf16.mxu0 %v2488
      %3692 = vmatmul.mubr.bf16.gmra.mrb[0].mxu0 %v2487
      %v3693 = vpop.f32.mrb[0].mxu0
      %v3694 = vadd.f32 0.0, %v3693
      %v3695 = vpop.f32.mrb[0].mxu0
      %v3696 = vpop.f32.mrb[0].mxu0
      %v3697 = vadd.f32 0.0, %v3696
      %v3698 = vpop.f32.mrb[0].mxu0
      %3699 = vmatprep.mubr.bf16.mxu0 %v2490
      %3700 = vmatmul.mubr.bf16.gmra.mrb[0].mxu0 %v2489
      %v3701 = vpop.f32.mrb[0].mxu0
      %v3702 = vadd.f32 0.0, %v3701
      %v3703 = vpop.f32.mrb[0].mxu0
      %v3704 = vpop.f32.mrb[0].mxu0
      %v3705 = vadd.f32 0.0, %v3704
      %v3706 = vpop.f32.mrb[0].mxu0
      %3707 = vmatprep.mubr.bf16.mxu0 %v2492
      %3708 = vmatmul.mubr.bf16.gmra.mrb[0].mxu0 %v2491
      %v3709 = vpop.f32.mrb[0].mxu0
      %v3710 = vadd.f32 0.0, %v3709
      %v3711 = vpop.f32.mrb[0].mxu0
      %v3712 = vpop.f32.mrb[0].mxu0
      %v3713 = vadd.f32 0.0, %v3712
      %v3714 = vpop.f32.mrb[0].mxu0
      %3715 = vdwg.mxu0
      %v3716 = vmax.f32 %v3394, %v3590
      %v3717 = vmax.f32 %v3395, %v3593
      %v3718 = vmax.f32 %v3396, %v3598
      %v3719 = vmax.f32 %v3397, %v3601
      %v3720 = vmax.f32 %v3398, %v3606
      %v3721 = vmax.f32 %v3399, %v3609
      %v3722 = vmax.f32 %v3400, %v3614
      %v3723 = vmax.f32 %v3401, %v3617
      %v3724 = vmax.f32 %v3402, %v3622
      %v3725 = vmax.f32 %v3403, %v3625
      %v3726 = vmax.f32 %v3404, %v3630
      %v3727 = vmax.f32 %v3405, %v3633
      %v3728 = vmax.f32 %v3406, %v3638
      %v3729 = vmax.f32 %v3407, %v3641
      %v3730 = vmax.f32 %v3408, %v3646
      %v3731 = vmax.f32 %v3409, %v3649
      %v3732 = vmax.f32 %v3410, %v3654
      %v3733 = vmax.f32 %v3411, %v3657
      %v3734 = vmax.f32 %v3412, %v3662
      %v3735 = vmax.f32 %v3413, %v3665
      %v3736 = vmax.f32 %v3414, %v3670
      %v3737 = vmax.f32 %v3415, %v3673
      %v3738 = vmax.f32 %v3416, %v3678
      %v3739 = vmax.f32 %v3417, %v3681
      %v3740 = vmax.f32 %v3418, %v3686
      %v3741 = vmax.f32 %v3419, %v3689
      %v3742 = vmax.f32 %v3420, %v3694
      %v3743 = vmax.f32 %v3421, %v3697
      %v3744 = vmax.f32 %v3422, %v3702
      %v3745 = vmax.f32 %v3423, %v3705
      %v3746 = vmax.f32 %v3424, %v3710
      %v3747 = vmax.f32 %v3425, %v3713
      %v3748 = vld [vmem:[%s4] sm:$0x1]
      %v3750 = vlaneseq
      %v3751 = vshrl.u32 %v3750, 7
      %v3752 = vsub.s32 0, %v3751
      %v3753 = vrot.slane %v3748, %v3752
      %v3755 = vadd.f32 %v3716, %v3753
      %v3756 = vadd.f32 %v3717, %v3753
      %v3757 = vadd.f32 %v3718, %v3753
      %v3758 = vadd.f32 %v3719, %v3753
      %v3759 = vadd.f32 %v3720, %v3753
      %v3760 = vadd.f32 %v3721, %v3753
      %v3761 = vadd.f32 %v3722, %v3753
      %v3762 = vadd.f32 %v3723, %v3753
      %v3763 = vadd.f32 %v3724, %v3753
      %v3764 = vadd.f32 %v3725, %v3753
      %v3765 = vadd.f32 %v3726, %v3753
      %v3766 = vadd.f32 %v3727, %v3753
      %v3767 = vadd.f32 %v3728, %v3753
      %v3768 = vadd.f32 %v3729, %v3753
      %v3769 = vadd.f32 %v3730, %v3753
      %v3770 = vadd.f32 %v3731, %v3753
      %v3771 = vadd.f32 %v3732, %v3753
      %v3772 = vadd.f32 %v3733, %v3753
      %v3773 = vadd.f32 %v3734, %v3753
      %v3774 = vadd.f32 %v3735, %v3753
      %v3775 = vadd.f32 %v3736, %v3753
      %v3776 = vadd.f32 %v3737, %v3753
      %v3777 = vadd.f32 %v3738, %v3753
      %v3778 = vadd.f32 %v3739, %v3753
      %v3779 = vadd.f32 %v3740, %v3753
      %v3780 = vadd.f32 %v3741, %v3753
      %v3781 = vadd.f32 %v3742, %v3753
      %v3782 = vadd.f32 %v3743, %v3753
      %v3783 = vadd.f32 %v3744, %v3753
      %v3784 = vadd.f32 %v3745, %v3753
      %v3785 = vadd.f32 %v3746, %v3753
      %v3786 = vadd.f32 %v3747, %v3753
      %v3787 = vmax.f32 %v3755, 0.0
      %v3788 = vmax.f32 %v3756, 0.0
      %v3789 = vmax.f32 %v3757, 0.0
      %v3790 = vmax.f32 %v3758, 0.0
      %v3791 = vmax.f32 %v3759, 0.0
      %v3792 = vmax.f32 %v3760, 0.0
      %v3793 = vmax.f32 %v3761, 0.0
      %v3794 = vmax.f32 %v3762, 0.0
      %v3795 = vmax.f32 %v3763, 0.0
      %v3796 = vmax.f32 %v3764, 0.0
      %v3797 = vmax.f32 %v3765, 0.0
      %v3798 = vmax.f32 %v3766, 0.0
      %v3799 = vmax.f32 %v3767, 0.0
      %v3800 = vmax.f32 %v3768, 0.0
      %v3801 = vmax.f32 %v3769, 0.0
      %v3802 = vmax.f32 %v3770, 0.0
      %v3803 = vmax.f32 %v3771, 0.0
      %v3804 = vmax.f32 %v3772, 0.0
      %v3805 = vmax.f32 %v3773, 0.0
      %v3806 = vmax.f32 %v3774, 0.0
      %v3807 = vmax.f32 %v3775, 0.0
      %v3808 = vmax.f32 %v3776, 0.0
      %v3809 = vmax.f32 %v3777, 0.0
      %v3810 = vmax.f32 %v3778, 0.0
      %v3811 = vmax.f32 %v3779, 0.0
      %v3812 = vmax.f32 %v3780, 0.0
      %v3813 = vmax.f32 %v3781, 0.0
      %v3814 = vmax.f32 %v3782, 0.0
      %v3815 = vmax.f32 %v3783, 0.0
      %v3816 = vmax.f32 %v3784, 0.0
      %v3817 = vmax.f32 %v3785, 0.0
      %v3818 = vmax.f32 %v3786, 0.0
      %vm3819 = vcmask 130048
      %3820 = vst.msk [vmem:[#allocation2] sm:$0xff] %vm3819, %v3787
      %3821 = vst.msk [vmem:[#allocation2 + $0x8] sm:$0xff] %vm3819, %v3788
      %3822 = vst.msk [vmem:[#allocation2 + $0x10] sm:$0xff] %vm3819, %v3789
      %3823 = vst.msk [vmem:[#allocation2 + $0x18] sm:$0xff] %vm3819, %v3790
      %3824 = vst.msk [vmem:[#allocation2 + $0x20] sm:$0xff] %vm3819, %v3791
      %3825 = vst.msk [vmem:[#allocation2 + $0x28] sm:$0xff] %vm3819, %v3792
      %3826 = vst.msk [vmem:[#allocation2 + $0x30] sm:$0xff] %vm3819, %v3793
      %3827 = vst.msk [vmem:[#allocation2 + $0x38] sm:$0xff] %vm3819, %v3794
      %3828 = vst.msk [vmem:[#allocation2 + $0x40] sm:$0xff] %vm3819, %v3795
      %3829 = vst.msk [vmem:[#allocation2 + $0x48] sm:$0xff] %vm3819, %v3796
      %3830 = vst.msk [vmem:[#allocation2 + $0x50] sm:$0xff] %vm3819, %v3797
      %3831 = vst.msk [vmem:[#allocation2 + $0x58] sm:$0xff] %vm3819, %v3798
      %3832 = vst.msk [vmem:[#allocation2 + $0x60] sm:$0xff] %vm3819, %v3799
      %3833 = vst.msk [vmem:[#allocation2 + $0x68] sm:$0xff] %vm3819, %v3800
      %3834 = vst.msk [vmem:[#allocation2 + $0x70] sm:$0xff] %vm3819, %v3801
      %3835 = vst.msk [vmem:[#allocation2 + $0x78] sm:$0xff] %vm3819, %v3802
      %3836 = vst.msk [vmem:[#allocation2 + $0x80] sm:$0xff] %vm3819, %v3803
      %3837 = vst.msk [vmem:[#allocation2 + $0x88] sm:$0xff] %vm3819, %v3804
      %3838 = vst.msk [vmem:[#allocation2 + $0x90] sm:$0xff] %vm3819, %v3805
      %3839 = vst.msk [vmem:[#allocation2 + $0x98] sm:$0xff] %vm3819, %v3806
      %3840 = vst.msk [vmem:[#allocation2 + $0xa0] sm:$0xff] %vm3819, %v3807
      %3841 = vst.msk [vmem:[#allocation2 + $0xa8] sm:$0xff] %vm3819, %v3808
      %3842 = vst.msk [vmem:[#allocation2 + $0xb0] sm:$0xff] %vm3819, %v3809
      %3843 = vst.msk [vmem:[#allocation2 + $0xb8] sm:$0xff] %vm3819, %v3810
      %3844 = vst.msk [vmem:[#allocation2 + $0xc0] sm:$0xff] %vm3819, %v3811
      %3845 = vst.msk [vmem:[#allocation2 + $0xc8] sm:$0xff] %vm3819, %v3812
      %3846 = vst.msk [vmem:[#allocation2 + $0xd0] sm:$0xff] %vm3819, %v3813
      %3847 = vst.msk [vmem:[#allocation2 + $0xd8] sm:$0xff] %vm3819, %v3814
      %3848 = vst.msk [vmem:[#allocation2 + $0xe0] sm:$0xff] %vm3819, %v3815
      %3849 = vst.msk [vmem:[#allocation2 + $0xe8] sm:$0xff] %vm3819, %v3816
      %3850 = vst.msk [vmem:[#allocation2 + $0xf0] sm:$0xff] %vm3819, %v3817
      %3851 = vst.msk [vmem:[#allocation2 + $0xf8] sm:$0xff] %vm3819, %v3818
      %v3852 = vld [vmem:[#allocation2] ss:$16 sm:$0x3]
      %v3853 = vld [vmem:[#allocation2] ss:$16 sm:$0xc]
      %v3854 = vor.u32 %v3852, %v3853
      %v3855 = vld [vmem:[#allocation2] ss:$16 sm:$0x30]
      %v3856 = vor.u32 %v3854, %v3855
      %v3857 = vld [vmem:[#allocation2] ss:$16 sm:$0xc0]
      %v3858 = vor.u32 %v3856, %v3857
      %s3859 = scalar_lea.vmem [#allocation2], 128
      %v3860 = vld [vmem:[%s3859] ss:$16 sm:$0x3]
      %v3861 = vld [vmem:[%s3859] ss:$16 sm:$0xc]
      %v3862 = vor.u32 %v3860, %v3861
      %v3863 = vld [vmem:[%s3859] ss:$16 sm:$0x30]
      %v3864 = vor.u32 %v3862, %v3863
      %v3865 = vld [vmem:[%s3859] ss:$16 sm:$0xc0]
      %v3866 = vor.u32 %v3864, %v3865
      %3867 = vst.msk [vmem:[#allocation3] sm:$0xff] %vm3819, %v3858
      %3868 = vst.msk [vmem:[#allocation3 + $0x10] sm:$0xff] %vm3819, %v3866
      %s3869 = scalar_lea.vmem [#allocation2], 1
      %v3870 = vld [vmem:[%s3869] ss:$16 sm:$0x3]
      %v3871 = vld [vmem:[%s3869] ss:$16 sm:$0xc]
      %v3872 = vor.u32 %v3870, %v3871
      %v3873 = vld [vmem:[%s3869] ss:$16 sm:$0x30]
      %v3874 = vor.u32 %v3872, %v3873
      %v3875 = vld [vmem:[%s3869] ss:$16 sm:$0xc0]
      %v3876 = vor.u32 %v3874, %v3875
      %s3877 = scalar_lea.vmem [#allocation2], 129
      %v3878 = vld [vmem:[%s3877] ss:$16 sm:$0x3]
      %v3879 = vld [vmem:[%s3877] ss:$16 sm:$0xc]
      %v3880 = vor.u32 %v3878, %v3879
      %v3881 = vld [vmem:[%s3877] ss:$16 sm:$0x30]
      %v3882 = vor.u32 %v3880, %v3881
      %v3883 = vld [vmem:[%s3877] ss:$16 sm:$0xc0]
      %v3884 = vor.u32 %v3882, %v3883
      %3887 = vrot.lane.b32.xlu0 %v3876, 16
      %v3888 = vpop.permute.xlu0 %3887
      %3889 = vrot.lane.b32.xlu0 %v3884, 16
      %v3890 = vpop.permute.xlu0 %3889
      %vm3893 = vcmask 261248
      %3894 = vst.msk [vmem:[#allocation3] sm:$0xff] %vm3893, %v3888
      %3895 = vst.msk [vmem:[#allocation3 + $0x10] sm:$0xff] %vm3893, %v3890
      %s3896 = scalar_lea.vmem [#allocation2], 2
      %v3897 = vld [vmem:[%s3896] ss:$16 sm:$0x3]
      %v3898 = vld [vmem:[%s3896] ss:$16 sm:$0xc]
      %v3899 = vor.u32 %v3897, %v3898
      %v3900 = vld [vmem:[%s3896] ss:$16 sm:$0x30]
      %v3901 = vor.u32 %v3899, %v3900
      %v3902 = vld [vmem:[%s3896] ss:$16 sm:$0xc0]
      %v3903 = vor.u32 %v3901, %v3902
      %s3904 = scalar_lea.vmem [#allocation2], 130
      %v3905 = vld [vmem:[%s3904] ss:$16 sm:$0x3]
      %v3906 = vld [vmem:[%s3904] ss:$16 sm:$0xc]
      %v3907 = vor.u32 %v3905, %v3906
      %v3908 = vld [vmem:[%s3904] ss:$16 sm:$0x30]
      %v3909 = vor.u32 %v3907, %v3908
      %v3910 = vld [vmem:[%s3904] ss:$16 sm:$0xc0]
      %v3911 = vor.u32 %v3909, %v3910
      %3914 = vrot.lane.b32.xlu0 %v3903, 32
      %v3915 = vpop.permute.xlu0 %3914
      %3916 = vrot.lane.b32.xlu0 %v3911, 32
      %v3917 = vpop.permute.xlu0 %3916
      %vm3920 = vcmask 392448
      %3921 = vst.msk [vmem:[#allocation3] sm:$0xff] %vm3920, %v3915
      %3922 = vst.msk [vmem:[#allocation3 + $0x10] sm:$0xff] %vm3920, %v3917
      %s3923 = scalar_lea.vmem [#allocation2], 3
      %v3924 = vld [vmem:[%s3923] ss:$16 sm:$0x3]
      %v3925 = vld [vmem:[%s3923] ss:$16 sm:$0xc]
      %v3926 = vor.u32 %v3924, %v3925
      %v3927 = vld [vmem:[%s3923] ss:$16 sm:$0x30]
      %v3928 = vor.u32 %v3926, %v3927
      %v3929 = vld [vmem:[%s3923] ss:$16 sm:$0xc0]
      %v3930 = vor.u32 %v3928, %v3929
      %s3931 = scalar_lea.vmem [#allocation2], 131
      %v3932 = vld [vmem:[%s3931] ss:$16 sm:$0x3]
      %v3933 = vld [vmem:[%s3931] ss:$16 sm:$0xc]
      %v3934 = vor.u32 %v3932, %v3933
      %v3935 = vld [vmem:[%s3931] ss:$16 sm:$0x30]
      %v3936 = vor.u32 %v3934, %v3935
      %v3937 = vld [vmem:[%s3931] ss:$16 sm:$0xc0]
      %v3938 = vor.u32 %v3936, %v3937
      %3941 = vrot.lane.b32.xlu0 %v3930, 48
      %v3942 = vpop.permute.xlu0 %3941
      %3943 = vrot.lane.b32.xlu0 %v3938, 48
      %v3944 = vpop.permute.xlu0 %3943
      %vm3947 = vcmask 523648
      %3948 = vst.msk [vmem:[#allocation3] sm:$0xff] %vm3947, %v3942
      %3949 = vst.msk [vmem:[#allocation3 + $0x10] sm:$0xff] %vm3947, %v3944
      %s3950 = scalar_lea.vmem [#allocation2], 4
      %v3951 = vld [vmem:[%s3950] ss:$16 sm:$0x3]
      %v3952 = vld [vmem:[%s3950] ss:$16 sm:$0xc]
      %v3953 = vor.u32 %v3951, %v3952
      %v3954 = vld [vmem:[%s3950] ss:$16 sm:$0x30]
      %v3955 = vor.u32 %v3953, %v3954
      %v3956 = vld [vmem:[%s3950] ss:$16 sm:$0xc0]
      %v3957 = vor.u32 %v3955, %v3956
      %s3958 = scalar_lea.vmem [#allocation2], 132
      %v3959 = vld [vmem:[%s3958] ss:$16 sm:$0x3]
      %v3960 = vld [vmem:[%s3958] ss:$16 sm:$0xc]
      %v3961 = vor.u32 %v3959, %v3960
      %v3962 = vld [vmem:[%s3958] ss:$16 sm:$0x30]
      %v3963 = vor.u32 %v3961, %v3962
      %v3964 = vld [vmem:[%s3958] ss:$16 sm:$0xc0]
      %v3965 = vor.u32 %v3963, %v3964
      %3968 = vrot.lane.b32.xlu0 %v3957, 64
      %v3969 = vpop.permute.xlu0 %3968
      %3970 = vrot.lane.b32.xlu0 %v3965, 64
      %v3971 = vpop.permute.xlu0 %3970
      %vm3974 = vcmask 654848
      %3975 = vst.msk [vmem:[#allocation3] sm:$0xff] %vm3974, %v3969
      %3976 = vst.msk [vmem:[#allocation3 + $0x10] sm:$0xff] %vm3974, %v3971
      %s3977 = scalar_lea.vmem [#allocation2], 5
      %v3978 = vld [vmem:[%s3977] ss:$16 sm:$0x3]
      %v3979 = vld [vmem:[%s3977] ss:$16 sm:$0xc]
      %v3980 = vor.u32 %v3978, %v3979
      %v3981 = vld [vmem:[%s3977] ss:$16 sm:$0x30]
      %v3982 = vor.u32 %v3980, %v3981
      %v3983 = vld [vmem:[%s3977] ss:$16 sm:$0xc0]
      %v3984 = vor.u32 %v3982, %v3983
      %s3985 = scalar_lea.vmem [#allocation2], 133
      %v3986 = vld [vmem:[%s3985] ss:$16 sm:$0x3]
      %v3987 = vld [vmem:[%s3985] ss:$16 sm:$0xc]
      %v3988 = vor.u32 %v3986, %v3987
      %v3989 = vld [vmem:[%s3985] ss:$16 sm:$0x30]
      %v3990 = vor.u32 %v3988, %v3989
      %v3991 = vld [vmem:[%s3985] ss:$16 sm:$0xc0]
      %v3992 = vor.u32 %v3990, %v3991
      %3995 = vrot.lane.b32.xlu0 %v3984, 80
      %v3996 = vpop.permute.xlu0 %3995
      %3997 = vrot.lane.b32.xlu0 %v3992, 80
      %v3998 = vpop.permute.xlu0 %3997
      %vm4001 = vcmask 786048
      %4002 = vst.msk [vmem:[#allocation3] sm:$0xff] %vm4001, %v3996
      %4003 = vst.msk [vmem:[#allocation3 + $0x10] sm:$0xff] %vm4001, %v3998
      %s4004 = scalar_lea.vmem [#allocation2], 6
      %v4005 = vld [vmem:[%s4004] ss:$16 sm:$0x3]
      %v4006 = vld [vmem:[%s4004] ss:$16 sm:$0xc]
      %v4007 = vor.u32 %v4005, %v4006
      %v4008 = vld [vmem:[%s4004] ss:$16 sm:$0x30]
      %v4009 = vor.u32 %v4007, %v4008
      %v4010 = vld [vmem:[%s4004] ss:$16 sm:$0xc0]
      %v4011 = vor.u32 %v4009, %v4010
      %s4012 = scalar_lea.vmem [#allocation2], 134
      %v4013 = vld [vmem:[%s4012] ss:$16 sm:$0x3]
      %v4014 = vld [vmem:[%s4012] ss:$16 sm:$0xc]
      %v4015 = vor.u32 %v4013, %v4014
      %v4016 = vld [vmem:[%s4012] ss:$16 sm:$0x30]
      %v4017 = vor.u32 %v4015, %v4016
      %v4018 = vld [vmem:[%s4012] ss:$16 sm:$0xc0]
      %v4019 = vor.u32 %v4017, %v4018
      %4022 = vrot.lane.b32.xlu0 %v4011, 96
      %v4023 = vpop.permute.xlu0 %4022
      %4024 = vrot.lane.b32.xlu0 %v4019, 96
      %v4025 = vpop.permute.xlu0 %4024
      %vm4028 = vcmask 917248
      %4029 = vst.msk [vmem:[#allocation3] sm:$0xff] %vm4028, %v4023
      %4030 = vst.msk [vmem:[#allocation3 + $0x10] sm:$0xff] %vm4028, %v4025
      %s4031 = scalar_lea.vmem [#allocation2], 7
      %v4032 = vld [vmem:[%s4031] ss:$16 sm:$0x3]
      %v4033 = vld [vmem:[%s4031] ss:$16 sm:$0xc]
      %v4034 = vor.u32 %v4032, %v4033
      %v4035 = vld [vmem:[%s4031] ss:$16 sm:$0x30]
      %v4036 = vor.u32 %v4034, %v4035
      %v4037 = vld [vmem:[%s4031] ss:$16 sm:$0xc0]
      %v4038 = vor.u32 %v4036, %v4037
      %s4039 = scalar_lea.vmem [#allocation2], 135
      %v4040 = vld [vmem:[%s4039] ss:$16 sm:$0x3]
      %v4041 = vld [vmem:[%s4039] ss:$16 sm:$0xc]
      %v4042 = vor.u32 %v4040, %v4041
      %v4043 = vld [vmem:[%s4039] ss:$16 sm:$0x30]
      %v4044 = vor.u32 %v4042, %v4043
      %v4045 = vld [vmem:[%s4039] ss:$16 sm:$0xc0]
      %v4046 = vor.u32 %v4044, %v4045
      %4049 = vrot.lane.b32.xlu0 %v4038, 112
      %v4050 = vpop.permute.xlu0 %4049
      %4051 = vrot.lane.b32.xlu0 %v4046, 112
      %v4052 = vpop.permute.xlu0 %4051
      %vm4055 = vcmask 1048448
      %4056 = vst.msk [vmem:[#allocation3] sm:$0xff] %vm4055, %v4050
      %4057 = vst.msk [vmem:[#allocation3 + $0x10] sm:$0xff] %vm4055, %v4052
      %s4058 = scalar_lea.vmem [#allocation2], 8
      %v4059 = vld [vmem:[%s4058] ss:$16 sm:$0x3]
      %v4060 = vld [vmem:[%s4058] ss:$16 sm:$0xc]
      %v4061 = vor.u32 %v4059, %v4060
      %v4062 = vld [vmem:[%s4058] ss:$16 sm:$0x30]
      %v4063 = vor.u32 %v4061, %v4062
      %v4064 = vld [vmem:[%s4058] ss:$16 sm:$0xc0]
      %v4065 = vor.u32 %v4063, %v4064
      %s4066 = scalar_lea.vmem [#allocation2], 136
      %v4067 = vld [vmem:[%s4066] ss:$16 sm:$0x3]
      %v4068 = vld [vmem:[%s4066] ss:$16 sm:$0xc]
      %v4069 = vor.u32 %v4067, %v4068
      %v4070 = vld [vmem:[%s4066] ss:$16 sm:$0x30]
      %v4071 = vor.u32 %v4069, %v4070
      %v4072 = vld [vmem:[%s4066] ss:$16 sm:$0xc0]
      %v4073 = vor.u32 %v4071, %v4072
      %4074 = vst.msk [vmem:[#allocation3 + $0x8] sm:$0xff] %vm3819, %v4065
      %4075 = vst.msk [vmem:[#allocation3 + $0x18] sm:$0xff] %vm3819, %v4073
      %s4076 = scalar_lea.vmem [#allocation2], 9
      %v4077 = vld [vmem:[%s4076] ss:$16 sm:$0x3]
      %v4078 = vld [vmem:[%s4076] ss:$16 sm:$0xc]
      %v4079 = vor.u32 %v4077, %v4078
      %v4080 = vld [vmem:[%s4076] ss:$16 sm:$0x30]
      %v4081 = vor.u32 %v4079, %v4080
      %v4082 = vld [vmem:[%s4076] ss:$16 sm:$0xc0]
      %v4083 = vor.u32 %v4081, %v4082
      %s4084 = scalar_lea.vmem [#allocation2], 137
      %v4085 = vld [vmem:[%s4084] ss:$16 sm:$0x3]
      %v4086 = vld [vmem:[%s4084] ss:$16 sm:$0xc]
      %v4087 = vor.u32 %v4085, %v4086
      %v4088 = vld [vmem:[%s4084] ss:$16 sm:$0x30]
      %v4089 = vor.u32 %v4087, %v4088
      %v4090 = vld [vmem:[%s4084] ss:$16 sm:$0xc0]
      %v4091 = vor.u32 %v4089, %v4090
      %4094 = vrot.lane.b32.xlu0 %v4083, 16
      %v4095 = vpop.permute.xlu0 %4094
      %4096 = vrot.lane.b32.xlu0 %v4091, 16
      %v4097 = vpop.permute.xlu0 %4096
      %4100 = vst.msk [vmem:[#allocation3 + $0x8] sm:$0xff] %vm3893, %v4095
      %4101 = vst.msk [vmem:[#allocation3 + $0x18] sm:$0xff] %vm3893, %v4097
      %s4102 = scalar_lea.vmem [#allocation2], 10
      %v4103 = vld [vmem:[%s4102] ss:$16 sm:$0x3]
      %v4104 = vld [vmem:[%s4102] ss:$16 sm:$0xc]
      %v4105 = vor.u32 %v4103, %v4104
      %v4106 = vld [vmem:[%s4102] ss:$16 sm:$0x30]
      %v4107 = vor.u32 %v4105, %v4106
      %v4108 = vld [vmem:[%s4102] ss:$16 sm:$0xc0]
      %v4109 = vor.u32 %v4107, %v4108
      %s4110 = scalar_lea.vmem [#allocation2], 138
      %v4111 = vld [vmem:[%s4110] ss:$16 sm:$0x3]
      %v4112 = vld [vmem:[%s4110] ss:$16 sm:$0xc]
      %v4113 = vor.u32 %v4111, %v4112
      %v4114 = vld [vmem:[%s4110] ss:$16 sm:$0x30]
      %v4115 = vor.u32 %v4113, %v4114
      %v4116 = vld [vmem:[%s4110] ss:$16 sm:$0xc0]
      %v4117 = vor.u32 %v4115, %v4116
      %4120 = vrot.lane.b32.xlu0 %v4109, 32
      %v4121 = vpop.permute.xlu0 %4120
      %4122 = vrot.lane.b32.xlu0 %v4117, 32
      %v4123 = vpop.permute.xlu0 %4122
      %4126 = vst.msk [vmem:[#allocation3 + $0x8] sm:$0xff] %vm3920, %v4121
      %4127 = vst.msk [vmem:[#allocation3 + $0x18] sm:$0xff] %vm3920, %v4123
      %s4128 = scalar_lea.vmem [#allocation2], 11
      %v4129 = vld [vmem:[%s4128] ss:$16 sm:$0x3]
      %v4130 = vld [vmem:[%s4128] ss:$16 sm:$0xc]
      %v4131 = vor.u32 %v4129, %v4130
      %v4132 = vld [vmem:[%s4128] ss:$16 sm:$0x30]
      %v4133 = vor.u32 %v4131, %v4132
      %v4134 = vld [vmem:[%s4128] ss:$16 sm:$0xc0]
      %v4135 = vor.u32 %v4133, %v4134
      %s4136 = scalar_lea.vmem [#allocation2], 139
      %v4137 = vld [vmem:[%s4136] ss:$16 sm:$0x3]
      %v4138 = vld [vmem:[%s4136] ss:$16 sm:$0xc]
      %v4139 = vor.u32 %v4137, %v4138
      %v4140 = vld [vmem:[%s4136] ss:$16 sm:$0x30]
      %v4141 = vor.u32 %v4139, %v4140
      %v4142 = vld [vmem:[%s4136] ss:$16 sm:$0xc0]
      %v4143 = vor.u32 %v4141, %v4142
      %4146 = vrot.lane.b32.xlu0 %v4135, 48
      %v4147 = vpop.permute.xlu0 %4146
      %4148 = vrot.lane.b32.xlu0 %v4143, 48
      %v4149 = vpop.permute.xlu0 %4148
      %4152 = vst.msk [vmem:[#allocation3 + $0x8] sm:$0xff] %vm3947, %v4147
      %4153 = vst.msk [vmem:[#allocation3 + $0x18] sm:$0xff] %vm3947, %v4149
      %s4154 = scalar_lea.vmem [#allocation2], 12
      %v4155 = vld [vmem:[%s4154] ss:$16 sm:$0x3]
      %v4156 = vld [vmem:[%s4154] ss:$16 sm:$0xc]
      %v4157 = vor.u32 %v4155, %v4156
      %v4158 = vld [vmem:[%s4154] ss:$16 sm:$0x30]
      %v4159 = vor.u32 %v4157, %v4158
      %v4160 = vld [vmem:[%s4154] ss:$16 sm:$0xc0]
      %v4161 = vor.u32 %v4159, %v4160
      %s4162 = scalar_lea.vmem [#allocation2], 140
      %v4163 = vld [vmem:[%s4162] ss:$16 sm:$0x3]
      %v4164 = vld [vmem:[%s4162] ss:$16 sm:$0xc]
      %v4165 = vor.u32 %v4163, %v4164
      %v4166 = vld [vmem:[%s4162] ss:$16 sm:$0x30]
      %v4167 = vor.u32 %v4165, %v4166
      %v4168 = vld [vmem:[%s4162] ss:$16 sm:$0xc0]
      %v4169 = vor.u32 %v4167, %v4168
      %4172 = vrot.lane.b32.xlu0 %v4161, 64
      %v4173 = vpop.permute.xlu0 %4172
      %4174 = vrot.lane.b32.xlu0 %v4169, 64
      %v4175 = vpop.permute.xlu0 %4174
      %4178 = vst.msk [vmem:[#allocation3 + $0x8] sm:$0xff] %vm3974, %v4173
      %4179 = vst.msk [vmem:[#allocation3 + $0x18] sm:$0xff] %vm3974, %v4175
      %s4180 = scalar_lea.vmem [#allocation2], 13
      %v4181 = vld [vmem:[%s4180] ss:$16 sm:$0x3]
      %v4182 = vld [vmem:[%s4180] ss:$16 sm:$0xc]
      %v4183 = vor.u32 %v4181, %v4182
      %v4184 = vld [vmem:[%s4180] ss:$16 sm:$0x30]
      %v4185 = vor.u32 %v4183, %v4184
      %v4186 = vld [vmem:[%s4180] ss:$16 sm:$0xc0]
      %v4187 = vor.u32 %v4185, %v4186
      %s4188 = scalar_lea.vmem [#allocation2], 141
      %v4189 = vld [vmem:[%s4188] ss:$16 sm:$0x3]
      %v4190 = vld [vmem:[%s4188] ss:$16 sm:$0xc]
      %v4191 = vor.u32 %v4189, %v4190
      %v4192 = vld [vmem:[%s4188] ss:$16 sm:$0x30]
      %v4193 = vor.u32 %v4191, %v4192
      %v4194 = vld [vmem:[%s4188] ss:$16 sm:$0xc0]
      %v4195 = vor.u32 %v4193, %v4194
      %4198 = vrot.lane.b32.xlu0 %v4187, 80
      %v4199 = vpop.permute.xlu0 %4198
      %4200 = vrot.lane.b32.xlu0 %v4195, 80
      %v4201 = vpop.permute.xlu0 %4200
      %4204 = vst.msk [vmem:[#allocation3 + $0x8] sm:$0xff] %vm4001, %v4199
      %4205 = vst.msk [vmem:[#allocation3 + $0x18] sm:$0xff] %vm4001, %v4201
      %s4206 = scalar_lea.vmem [#allocation2], 14
      %v4207 = vld [vmem:[%s4206] ss:$16 sm:$0x3]
      %v4208 = vld [vmem:[%s4206] ss:$16 sm:$0xc]
      %v4209 = vor.u32 %v4207, %v4208
      %v4210 = vld [vmem:[%s4206] ss:$16 sm:$0x30]
      %v4211 = vor.u32 %v4209, %v4210
      %v4212 = vld [vmem:[%s4206] ss:$16 sm:$0xc0]
      %v4213 = vor.u32 %v4211, %v4212
      %s4214 = scalar_lea.vmem [#allocation2], 142
      %v4215 = vld [vmem:[%s4214] ss:$16 sm:$0x3]
      %v4216 = vld [vmem:[%s4214] ss:$16 sm:$0xc]
      %v4217 = vor.u32 %v4215, %v4216
      %v4218 = vld [vmem:[%s4214] ss:$16 sm:$0x30]
      %v4219 = vor.u32 %v4217, %v4218
      %v4220 = vld [vmem:[%s4214] ss:$16 sm:$0xc0]
      %v4221 = vor.u32 %v4219, %v4220
      %4224 = vrot.lane.b32.xlu0 %v4213, 96
      %v4225 = vpop.permute.xlu0 %4224
      %4226 = vrot.lane.b32.xlu0 %v4221, 96
      %v4227 = vpop.permute.xlu0 %4226
      %4230 = vst.msk [vmem:[#allocation3 + $0x8] sm:$0xff] %vm4028, %v4225
      %4231 = vst.msk [vmem:[#allocation3 + $0x18] sm:$0xff] %vm4028, %v4227
      %s4232 = scalar_lea.vmem [#allocation2], 15
      %v4233 = vld [vmem:[%s4232] ss:$16 sm:$0x3]
      %v4234 = vld [vmem:[%s4232] ss:$16 sm:$0xc]
      %v4235 = vor.u32 %v4233, %v4234
      %v4236 = vld [vmem:[%s4232] ss:$16 sm:$0x30]
      %v4237 = vor.u32 %v4235, %v4236
      %v4238 = vld [vmem:[%s4232] ss:$16 sm:$0xc0]
      %v4239 = vor.u32 %v4237, %v4238
      %s4240 = scalar_lea.vmem [#allocation2], 143
      %v4241 = vld [vmem:[%s4240] ss:$16 sm:$0x3]
      %v4242 = vld [vmem:[%s4240] ss:$16 sm:$0xc]
      %v4243 = vor.u32 %v4241, %v4242
      %v4244 = vld [vmem:[%s4240] ss:$16 sm:$0x30]
      %v4245 = vor.u32 %v4243, %v4244
      %v4246 = vld [vmem:[%s4240] ss:$16 sm:$0xc0]
      %v4247 = vor.u32 %v4245, %v4246
      %4250 = vrot.lane.b32.xlu0 %v4239, 112
      %v4251 = vpop.permute.xlu0 %4250
      %4252 = vrot.lane.b32.xlu0 %v4247, 112
      %v4253 = vpop.permute.xlu0 %4252
      %4256 = vst.msk [vmem:[#allocation3 + $0x8] sm:$0xff] %vm4055, %v4251
      %4257 = vst.msk [vmem:[#allocation3 + $0x18] sm:$0xff] %vm4055, %v4253
      %v4258 = vld [vmem:[#allocation3] sm:$0xff]
      %v4259 = vld [vmem:[#allocation3 + $0x8] sm:$0xff]
      %v4260 = vld [vmem:[#allocation3 + $0x10] sm:$0xff]
      %v4261 = vld [vmem:[#allocation3 + $0x18] sm:$0xff]
      %v4262 = vpack.c.bf16 %v4260, %v4258
      %v4263 = vpack.c.bf16 %v4261, %v4259
      %v4264 = vld [vmem:[%s5] sm:$0xf]
      %v4265 = vld [vmem:[%s5 + $0x4] sm:$0xf]
      %v4266 = vld [vmem:[%s5 + $0x8] sm:$0xf]
      %v4267 = vld [vmem:[%s5 + $0xc] sm:$0xf]
      %v4268 = vld [vmem:[%s5 + $0x10] sm:$0xf]
      %v4269 = vld [vmem:[%s5 + $0x14] sm:$0xf]
      %v4270 = vld [vmem:[%s5 + $0x18] sm:$0xf]
      %v4271 = vld [vmem:[%s5 + $0x1c] sm:$0xf]
      %v4272 = vld [vmem:[%s5 + $0x20] sm:$0xf]
      %v4273 = vld [vmem:[%s5 + $0x24] sm:$0xf]
      %v4274 = vld [vmem:[%s5 + $0x28] sm:$0xf]
      %v4275 = vld [vmem:[%s5 + $0x2c] sm:$0xf]
      %v4276 = vld [vmem:[%s5 + $0x30] sm:$0xf]
      %v4277 = vld [vmem:[%s5 + $0x34] sm:$0xf]
      %v4278 = vld [vmem:[%s5 + $0x38] sm:$0xf]
      %v4279 = vld [vmem:[%s5 + $0x3c] sm:$0xf]
      %v4280 = vld [vmem:[%s5 + $0x40] sm:$0xf]
      %v4281 = vld [vmem:[%s5 + $0x44] sm:$0xf]
      %v4282 = vld [vmem:[%s5 + $0x48] sm:$0xf]
      %v4283 = vld [vmem:[%s5 + $0x4c] sm:$0xf]
      %v4284 = vld [vmem:[%s5 + $0x50] sm:$0xf]
      %v4285 = vld [vmem:[%s5 + $0x54] sm:$0xf]
      %v4286 = vld [vmem:[%s5 + $0x58] sm:$0xf]
      %v4287 = vld [vmem:[%s5 + $0x5c] sm:$0xf]
      %v4288 = vld [vmem:[%s5 + $0x60] sm:$0xf]
      %v4289 = vld [vmem:[%s5 + $0x64] sm:$0xf]
      %v4290 = vld [vmem:[%s5 + $0x68] sm:$0xf]
      %v4291 = vld [vmem:[%s5 + $0x6c] sm:$0xf]
      %v4292 = vld [vmem:[%s5 + $0x70] sm:$0xf]
      %v4293 = vld [vmem:[%s5 + $0x74] sm:$0xf]
      %v4294 = vld [vmem:[%s5 + $0x78] sm:$0xf]
      %v4295 = vld [vmem:[%s5 + $0x7c] sm:$0xf]
      %v4296 = vld [vmem:[%s6] sm:$0x1]
      %v4298 = vlaneseq
      %v4299 = vshrl.u32 %v4298, 7
      %v4300 = vsub.s32 0, %v4299
      %v4301 = vrot.slane %v4296, %v4300
      %v4335 = vunpack.c.l.b16 %v4264
      %v4336 = vunpack.c.l.b16 %v4265
      %v4337 = vunpack.c.l.b16 %v4266
      %v4338 = vunpack.c.l.b16 %v4267
      %v4339 = vunpack.c.l.b16 %v4268
      %v4340 = vunpack.c.l.b16 %v4269
      %v4341 = vunpack.c.l.b16 %v4270
      %v4342 = vunpack.c.l.b16 %v4271
      %v4343 = vunpack.c.l.b16 %v4272
      %v4344 = vunpack.c.l.b16 %v4273
      %v4345 = vunpack.c.l.b16 %v4274
      %v4346 = vunpack.c.l.b16 %v4275
      %v4347 = vunpack.c.l.b16 %v4276
      %v4348 = vunpack.c.l.b16 %v4277
      %v4349 = vunpack.c.l.b16 %v4278
      %v4350 = vunpack.c.l.b16 %v4279
      %v4351 = vunpack.c.l.b16 %v4280
      %v4352 = vunpack.c.l.b16 %v4281
      %v4353 = vunpack.c.l.b16 %v4282
      %v4354 = vunpack.c.l.b16 %v4283
      %v4355 = vunpack.c.l.b16 %v4284
      %v4356 = vunpack.c.l.b16 %v4285
      %v4357 = vunpack.c.l.b16 %v4286
      %v4358 = vunpack.c.l.b16 %v4287
      %v4359 = vunpack.c.l.b16 %v4288
      %v4360 = vunpack.c.l.b16 %v4289
      %v4361 = vunpack.c.l.b16 %v4290
      %v4362 = vunpack.c.l.b16 %v4291
      %v4363 = vunpack.c.l.b16 %v4292
      %v4364 = vunpack.c.l.b16 %v4293
      %v4365 = vunpack.c.l.b16 %v4294
      %v4366 = vunpack.c.l.b16 %v4295
      %v4367 = vpack.c.b16 %v4336, %v4335
      %v4368 = vpack.c.b16 %v4338, %v4337
      %v4369 = vpack.c.b16 %v4340, %v4339
      %v4370 = vpack.c.b16 %v4342, %v4341
      %v4371 = vpack.c.b16 %v4344, %v4343
      %v4372 = vpack.c.b16 %v4346, %v4345
      %v4373 = vpack.c.b16 %v4348, %v4347
      %v4374 = vpack.c.b16 %v4350, %v4349
      %v4375 = vpack.c.b16 %v4352, %v4351
      %v4376 = vpack.c.b16 %v4354, %v4353
      %v4377 = vpack.c.b16 %v4356, %v4355
      %v4378 = vpack.c.b16 %v4358, %v4357
      %v4379 = vpack.c.b16 %v4360, %v4359
      %v4380 = vpack.c.b16 %v4362, %v4361
      %v4381 = vpack.c.b16 %v4364, %v4363
      %v4382 = vpack.c.b16 %v4366, %v4365
      %4399 = vmatprep.subr.bf16.mxu0 0
      %4400 = vmatpush1.bf16.msra.mxu0 %v4367
      %4401 = vmatprep.subr.bf16.mxu0 0
      %4402 = vmatpush1.bf16.msra.mxu0 %v4368
      %4403 = vmatprep.subr.bf16.mxu0 0
      %4404 = vmatpush1.bf16.msra.mxu0 %v4369
      %4405 = vmatprep.subr.bf16.mxu0 0
      %4406 = vmatpush1.bf16.msra.mxu0 %v4370
      %4407 = vmatprep.subr.bf16.mxu0 0
      %4408 = vmatpush1.bf16.msra.mxu0 %v4371
      %4409 = vmatprep.subr.bf16.mxu0 0
      %4410 = vmatpush1.bf16.msra.mxu0 %v4372
      %4411 = vmatprep.subr.bf16.mxu0 0
      %4412 = vmatpush1.bf16.msra.mxu0 %v4373
      %4413 = vmatprep.subr.bf16.mxu0 0
      %4414 = vmatpush1.bf16.msra.mxu0 %v4374
      %4415 = vmatprep.subr.bf16.mxu0 0
      %4416 = vmatpush1.bf16.msra.mxu0 %v4375
      %4417 = vmatprep.subr.bf16.mxu0 0
      %4418 = vmatpush1.bf16.msra.mxu0 %v4376
      %4419 = vmatprep.subr.bf16.mxu0 0
      %4420 = vmatpush1.bf16.msra.mxu0 %v4377
      %4421 = vmatprep.subr.bf16.mxu0 0
      %4422 = vmatpush1.bf16.msra.mxu0 %v4378
      %4423 = vmatprep.subr.bf16.mxu0 0
      %4424 = vmatpush1.bf16.msra.mxu0 %v4379
      %4425 = vmatprep.subr.bf16.mxu0 0
      %4426 = vmatpush1.bf16.msra.mxu0 %v4380
      %4427 = vmatprep.subr.bf16.mxu0 0
      %4428 = vmatpush1.bf16.msra.mxu0 %v4381
      %4429 = vmatprep.subr.bf16.mxu0 0
      %4430 = vmatpush1.bf16.msra.mxu0 %v4382
      %4431 = vmatprep.mubr.bf16.mxu0 %v4263
      %4432 = vmatmul.mubr.bf16.gmra.mrb[0].mxu0 %v4262
      %v4433 = vpop.f32.mrb[0].mxu0
      %v4434 = vadd.f32 %v4301, %v4433
      %v4435 = vpop.f32.mrb[0].mxu0
      %v4436 = vpop.f32.mrb[0].mxu0
      %v4437 = vadd.f32 %v4301, %v4436
      %v4438 = vpop.f32.mrb[0].mxu0
      %4439 = vdwg.mxu0
      %v4440 = vmax.f32 %v4434, 0.0
      %v4441 = vmax.f32 %v4437, 0.0
      %v4442 = vpack.c.bf16 %v4441, %v4440
      %v4443 = vld [vmem:[%s7] sm:$0xf]
      %v4444 = vld [vmem:[%s7 + $0x4] sm:$0xf]
      %v4445 = vld [vmem:[%s7 + $0x8] sm:$0xf]
      %v4446 = vld [vmem:[%s7 + $0xc] sm:$0xf]
      %v4447 = vld [vmem:[%s7 + $0x10] sm:$0xf]
      %v4448 = vld [vmem:[%s7 + $0x14] sm:$0xf]
      %v4449 = vld [vmem:[%s7 + $0x18] sm:$0xf]
      %v4450 = vld [vmem:[%s7 + $0x1c] sm:$0xf]
      %v4451 = vld [vmem:[%s7 + $0x20] sm:$0xf]
      %v4452 = vld [vmem:[%s7 + $0x24] sm:$0xf]
      %v4453 = vld [vmem:[%s7 + $0x28] sm:$0xf]
      %v4454 = vld [vmem:[%s7 + $0x2c] sm:$0xf]
      %v4455 = vld [vmem:[%s7 + $0x30] sm:$0xf]
      %v4456 = vld [vmem:[%s7 + $0x34] sm:$0xf]
      %v4457 = vld [vmem:[%s7 + $0x38] sm:$0xf]
      %v4458 = vld [vmem:[%s7 + $0x3c] sm:$0xf]
      %v4459 = vld [vmem:[%s8] sm:$0x1]
      %v4461 = vlaneseq
      %v4462 = vshrl.u32 %v4461, 7
      %v4463 = vsub.s32 0, %v4462
      %v4464 = vrot.slane %v4459, %v4463
      %v4482 = vunpack.c.l.b16 %v4443
      %v4483 = vunpack.c.l.b16 %v4444
      %v4484 = vunpack.c.l.b16 %v4445
      %v4485 = vunpack.c.l.b16 %v4446
      %v4486 = vunpack.c.l.b16 %v4447
      %v4487 = vunpack.c.l.b16 %v4448
      %v4488 = vunpack.c.l.b16 %v4449
      %v4489 = vunpack.c.l.b16 %v4450
      %v4490 = vunpack.c.l.b16 %v4451
      %v4491 = vunpack.c.l.b16 %v4452
      %v4492 = vunpack.c.l.b16 %v4453
      %v4493 = vunpack.c.l.b16 %v4454
      %v4494 = vunpack.c.l.b16 %v4455
      %v4495 = vunpack.c.l.b16 %v4456
      %v4496 = vunpack.c.l.b16 %v4457
      %v4497 = vunpack.c.l.b16 %v4458
      %v4498 = vpack.c.b16 %v4483, %v4482
      %v4499 = vpack.c.b16 %v4485, %v4484
      %v4500 = vpack.c.b16 %v4487, %v4486
      %v4501 = vpack.c.b16 %v4489, %v4488
      %v4502 = vpack.c.b16 %v4491, %v4490
      %v4503 = vpack.c.b16 %v4493, %v4492
      %v4504 = vpack.c.b16 %v4495, %v4494
      %v4505 = vpack.c.b16 %v4497, %v4496
      %4514 = vmatprep.subr.bf16.mxu0 0
      %4515 = vmatpush1.bf16.msra.mxu0 %v4498
      %4516 = vmatprep.subr.bf16.mxu0 0
      %4517 = vmatpush1.bf16.msra.mxu0 %v4499
      %4518 = vmatprep.subr.bf16.mxu0 0
      %4519 = vmatpush1.bf16.msra.mxu0 %v4500
      %4520 = vmatprep.subr.bf16.mxu0 0
      %4521 = vmatpush1.bf16.msra.mxu0 %v4501
      %4522 = vmatprep.subr.bf16.mxu0 0
      %4523 = vmatpush1.bf16.msra.mxu0 %v4502
      %4524 = vmatprep.subr.bf16.mxu0 0
      %4525 = vmatpush1.bf16.msra.mxu0 %v4503
      %4526 = vmatprep.subr.bf16.mxu0 0
      %4527 = vmatpush1.bf16.msra.mxu0 %v4504
      %4528 = vmatprep.subr.bf16.mxu0 0
      %4529 = vmatpush1.bf16.msra.mxu0 %v4505
      %4530 = vmatprep.subr.bf16.mxu0 0
      %4531 = vmatpush1.bf16.msra.mxu0 0
      %4532 = vmatprep.subr.bf16.mxu0 0
      %4533 = vmatpush1.bf16.msra.mxu0 0
      %4534 = vmatprep.subr.bf16.mxu0 0
      %4535 = vmatpush1.bf16.msra.mxu0 0
      %4536 = vmatprep.subr.bf16.mxu0 0
      %4537 = vmatpush1.bf16.msra.mxu0 0
      %4538 = vmatprep.subr.bf16.mxu0 0
      %4539 = vmatpush1.bf16.msra.mxu0 0
      %4540 = vmatprep.subr.bf16.mxu0 0
      %4541 = vmatpush1.bf16.msra.mxu0 0
      %4542 = vmatprep.subr.bf16.mxu0 0
      %4543 = vmatpush1.bf16.msra.mxu0 0
      %4544 = vmatprep.subr.bf16.mxu0 0
      %4545 = vmatpush1.bf16.msra.mxu0 0
      %4546 = vmatprep.mubr.bf16.mxu0 0
      %4547 = vmatmul.mubr.bf16.gmra.mrb[0].mxu0 %v4442
      %v4548 = vpop.f32.mrb[0].mxu0
      %v4549 = vadd.f32 %v4464, %v4548
      %v4550 = vpop.f32.mrb[0].mxu0
      %v4551 = vpop.f32.mrb[0].mxu0
      %v4552 = vadd.f32 %v4464, %v4551
      %v4553 = vpop.f32.mrb[0].mxu0
      %4554 = vdwg.mxu0
      %v4555 = vmax.f32 %v4549, 0.0
      %v4556 = vmax.f32 %v4552, 0.0
      %v4557 = vpack.c.bf16 %v4556, %v4555
      %v4558 = vld [vmem:[%s9] sm:$0xf]
      %v4559 = vld [vmem:[%s9 + $0x4] sm:$0xf]
      %v4560 = vld [vmem:[%s9 + $0x8] sm:$0xf]
      %v4561 = vld [vmem:[%s9 + $0xc] sm:$0xf]
      %v4562 = vld [vmem:[%s9 + $0x10] sm:$0xf]
      %v4563 = vld [vmem:[%s9 + $0x14] sm:$0xf]
      %v4564 = vld [vmem:[%s9 + $0x18] sm:$0xf]
      %v4565 = vld [vmem:[%s9 + $0x1c] sm:$0xf]
      %v4566 = vld [vmem:[%s9 + $0x20] sm:$0xf]
      %v4567 = vld [vmem:[%s9 + $0x24] sm:$0xf]
      %v4568 = vld [vmem:[%s9 + $0x28] sm:$0xf]
      %v4569 = vld [vmem:[%s9 + $0x2c] sm:$0xf]
      %v4570 = vld [vmem:[%s9 + $0x30] sm:$0xf]
      %v4571 = vld [vmem:[%s9 + $0x34] sm:$0xf]
      %v4572 = vld [vmem:[%s9 + $0x38] sm:$0xf]
      %v4573 = vld [vmem:[%s9 + $0x3c] sm:$0xf]
      %v4574 = vld [vmem:[%s10] sm:$0x1]
      %v4576 = vlaneseq
      %v4577 = vshrl.u32 %v4576, 7
      %v4578 = vsub.s32 0, %v4577
      %v4579 = vrot.slane %v4574, %v4578
      %v4597 = vunpack.c.l.b16 %v4558
      %v4598 = vunpack.c.l.b16 %v4559
      %v4599 = vunpack.c.l.b16 %v4560
      %v4600 = vunpack.c.l.b16 %v4561
      %v4601 = vunpack.c.l.b16 %v4562
      %v4602 = vunpack.c.l.b16 %v4563
      %v4603 = vunpack.c.l.b16 %v4564
      %v4604 = vunpack.c.l.b16 %v4565
      %v4605 = vunpack.c.l.b16 %v4566
      %v4606 = vunpack.c.l.b16 %v4567
      %v4607 = vunpack.c.l.b16 %v4568
      %v4608 = vunpack.c.l.b16 %v4569
      %v4609 = vunpack.c.l.b16 %v4570
      %v4610 = vunpack.c.l.b16 %v4571
      %v4611 = vunpack.c.l.b16 %v4572
      %v4612 = vunpack.c.l.b16 %v4573
      %v4613 = vpack.c.b16 %v4598, %v4597
      %v4614 = vpack.c.b16 %v4600, %v4599
      %v4615 = vpack.c.b16 %v4602, %v4601
      %v4616 = vpack.c.b16 %v4604, %v4603
      %v4617 = vpack.c.b16 %v4606, %v4605
      %v4618 = vpack.c.b16 %v4608, %v4607
      %v4619 = vpack.c.b16 %v4610, %v4609
      %v4620 = vpack.c.b16 %v4612, %v4611
      %4629 = vmatprep.subr.bf16.mxu0 0
      %4630 = vmatpush1.bf16.msra.mxu0 %v4613
      %4631 = vmatprep.subr.bf16.mxu0 0
      %4632 = vmatpush1.bf16.msra.mxu0 %v4614
      %4633 = vmatprep.subr.bf16.mxu0 0
      %4634 = vmatpush1.bf16.msra.mxu0 %v4615
      %4635 = vmatprep.subr.bf16.mxu0 0
      %4636 = vmatpush1.bf16.msra.mxu0 %v4616
      %4637 = vmatprep.subr.bf16.mxu0 0
      %4638 = vmatpush1.bf16.msra.mxu0 %v4617
      %4639 = vmatprep.subr.bf16.mxu0 0
      %4640 = vmatpush1.bf16.msra.mxu0 %v4618
      %4641 = vmatprep.subr.bf16.mxu0 0
      %4642 = vmatpush1.bf16.msra.mxu0 %v4619
      %4643 = vmatprep.subr.bf16.mxu0 0
      %4644 = vmatpush1.bf16.msra.mxu0 %v4620
      %4645 = vmatprep.subr.bf16.mxu0 0
      %4646 = vmatpush1.bf16.msra.mxu0 0
      %4647 = vmatprep.subr.bf16.mxu0 0
      %4648 = vmatpush1.bf16.msra.mxu0 0
      %4649 = vmatprep.subr.bf16.mxu0 0
      %4650 = vmatpush1.bf16.msra.mxu0 0
      %4651 = vmatprep.subr.bf16.mxu0 0
      %4652 = vmatpush1.bf16.msra.mxu0 0
      %4653 = vmatprep.subr.bf16.mxu0 0
      %4654 = vmatpush1.bf16.msra.mxu0 0
      %4655 = vmatprep.subr.bf16.mxu0 0
      %4656 = vmatpush1.bf16.msra.mxu0 0
      %4657 = vmatprep.subr.bf16.mxu0 0
      %4658 = vmatpush1.bf16.msra.mxu0 0
      %4659 = vmatprep.subr.bf16.mxu0 0
      %4660 = vmatpush1.bf16.msra.mxu0 0
      %4661 = vmatprep.mubr.bf16.mxu0 0
      %4662 = vmatmul.mubr.bf16.gmra.mrb[0].mxu0 %v4557
      %v4663 = vpop.f32.mrb[0].mxu0
      %v4664 = vadd.f32 %v4579, %v4663
      %v4665 = vpop.f32.mrb[0].mxu0
      %v4666 = vpop.f32.mrb[0].mxu0
      %v4667 = vadd.f32 %v4579, %v4666
      %v4668 = vpop.f32.mrb[0].mxu0
      %4669 = vdwg.mxu0
      %v4670 = vmax.f32 %v4664, 0.0
      %v4671 = vmax.f32 %v4667, 0.0
      %4672 = vst [vmem:[%s391] sm:$0xff] %v4670
      %4673 = vst [vmem:[%s391 + $0x8] sm:$0xff] %v4671
      %s4674 = smul.u32 2, %s22
      %p4675 = scmp.lt.s32.totalorder %s4674, 3
      %s4676 = scalar_select %p4675, %s4674, 3
      %s4677 = smul.addr %s4676, 8
      %s4678 = scalar_lea.vmem %s11, %s4677
      // Predicated region
      $region65: #{lenet5_forward.1} parent=63 // pred_check
        %p4679 = pneg %p276
      $region66: #{lenet5_forward.1} parent=63 // pred_check_branch
        %4681 = sbr.rel (%p4679) target = $region68
      $region67: #{lenet5_forward.1} parent=63 // pred_region
        %s4682 = smul.u32 2, %s22
      $region68: #{lenet5_forward.1} parent=63 // pred_fallthru
        _
    $region64: #{lenet5_forward.1} parent=5 // pred_fallthru
      _
    %p4683 = scmp.le.s32.totalorder 2, %s17
    // Predicated region
    $region69: #{lenet5_forward.1} parent=5 // pred_check
      %p4684 = pneg %p4683
    $region70: #{lenet5_forward.1} parent=5 // pred_check_branch
      %4686 = sbr.rel (%p4684) target = $region72
    $region71: #{lenet5_forward.1} parent=5 // pred_region
      %s4687 = ssub.s32 %s17, 2
      // Predicated region
      $region73: #{lenet5_forward.1} parent=71 // pred_check
        %p4688 = pneg %p282
      $region74: #{lenet5_forward.1} parent=71 // pred_check_branch
        %4690 = sbr.rel (%p4688) target = $region76
      $region75: #{lenet5_forward.1} parent=71 // pred_region
        %s4691 = smul.u32 2, %s23
        %p4692 = scmp.lt.s32.totalorder %s4691, 3
        %s4693 = scalar_select %p4692, %s4691, 3
        %s4694 = smul.addr %s4693, 8
        %s4695 = scalar_lea.vmem %s11, %s4694
      $region76: #{lenet5_forward.1} parent=71 // pred_fallthru
        _
    $region72: #{lenet5_forward.1} parent=5 // pred_fallthru
      _
  $region6: #{lenet5_forward.1} parent=0 // loop_footer
    %s21 = sadd.s32 1, %s17
  $region7: #{lenet5_forward.1} parent=0 // loop_footer_branch
    %16 = sbr.rel target = $region3
  $region8: #{lenet5_forward.1} parent=0 // loop_exit
    _

</llo_original>
